<compile_context>
chip_gen: v6e
topology: v6e:2x2x1
jax: 0.10.0
libtpu: 0.0.40
codegen_flags: <defaults>
</compile_context>

<pallas_src>
import jax
import jax.numpy as jnp
from jax.experimental import pallas as pl
from jax.experimental.pallas import tpu as pltpu


# ----------------------------------------------------------------------------
# Kernel 1: co-attention (linear_e + A + two softmaxes + attention matmuls +
# sigmoid gate + gating multiply + channel-concat with originals).
# One grid step for the whole batch; batch folded into lanes.
# ----------------------------------------------------------------------------
def _make_coattention_kernel(B, C, N, BN):
    def kernel(e_ref, q_ref, we_ref, g_ref, out_ref):
        # e_ref / q_ref : (C, B*N) f32   exemplar / query, lane-dense
        # we_ref        : (C, C)   f32   torch Linear weight (y = x @ We^T)
        # g_ref         : (C, 1)   f32   gate 1x1 conv weight
        # out_ref       : (2, 2C, B*N) bf16 conv-input slabs:
        #                 [0] = [masked exemplar_att ; input1]  (conv1 branch)
        #                 [1] = [masked query_att    ; input2]  (conv2 branch)
        Eb = e_ref[...]
        Qb = q_ref[...]
        We = we_ref[...]
        g = g_ref[...]                                      # (C, 1) f32

        ex_parts = []
        q_parts = []
        for b in range(B):                                  # static, tiny B
            E = Eb[:, b * N:(b + 1) * N]                    # (C, N)
            Q = Qb[:, b * N:(b + 1) * N]                    # (C, N)

            # WE = We @ E  (== exemplar_corr^T), f32 MXU accumulation.
            WE = jnp.dot(We, E, preferred_element_type=jnp.float32)
            # A[i, j] = sum_c WE[c, i] * Q[c, j]: contract axis 0 of both
            # operands -- no explicit transpose feeding the MXU.
            A = jax.lax.dot_general(
                WE, Q, dimension_numbers=(((0,), (0,)), ((), ())),
                preferred_element_type=jnp.float32)         # (N, N) f32

            # A1 = softmax over exemplar positions (torch: softmax(A, dim=1)).
            m0 = jnp.max(A, axis=0, keepdims=True)
            e0 = jnp.exp(A - m0)
            A1 = e0 * pl.reciprocal(jnp.sum(e0, axis=0, keepdims=True),
                                    approx=True)
            # S = softmax over query positions; torch's B == S^T.
            m1 = jnp.max(A, axis=1, keepdims=True)
            e1 = jnp.exp(A - m1)
            S = e1 * pl.reciprocal(jnp.sum(e1, axis=1, keepdims=True),
                                   approx=True)

            # query_att = E @ A1 ; exemplar_att = Q @ S^T (contract the query
            # axis of both operands -- again no explicit transpose).
            q_att = jnp.dot(E, A1, preferred_element_type=jnp.float32)   # (C, N)
            ex_att = jax.lax.dot_general(
                Q, S, dimension_numbers=(((1,), (1,)), ((), ())),
                preferred_element_type=jnp.float32)                      # (C, N)

            # Gate: 1x1 conv done on the VPU/XLU (broadcast-multiply over
            # channels + sublane reduction) instead of an M=1 MXU matmul.
            ex_mask = jax.nn.sigmoid(
                jnp.sum(g * ex_att, axis=0, keepdims=True))              # (1, N)
            q_mask = jax.nn.sigmoid(
                jnp.sum(g * q_att, axis=0, keepdims=True))               # (1, N)

            ex_parts.append((ex_att * ex_mask).astype(jnp.bfloat16))
            q_parts.append((q_att * q_mask).astype(jnp.bfloat16))

        # Re-assemble full-lane-width (C, B*N) slabs -> unmasked vst stores.
        ex_full = jnp.concatenate(ex_parts, axis=1)                      # (C, BN)
        q_full = jnp.concatenate(q_parts, axis=1)                        # (C, BN)

        # Fused channel-concat: attended features on top, originals below.
        out_ref[0, :C, :] = ex_full
        out_ref[0, C:, :] = Eb.astype(jnp.bfloat16)
        out_ref[1, :C, :] = q_full
        out_ref[1, C:, :] = Qb.astype(jnp.bfloat16)

    return kernel


# ----------------------------------------------------------------------------
# Kernel 2: 3x3 conv (padding=1) over the fused (2C, B*N) slab as 9 shifted
# matmuls.  One grid step per output branch (conv1 / conv2).
# ----------------------------------------------------------------------------
def _make_conv3x3_kernel(C, Cout, H, W, BN):
    offsets = [(dy, dx) for dy in (-1, 0, 1) for dx in (-1, 0, 1)]

    def lane_shift(x, s):
        # out[:, p] = x[:, (p + s) % BN]; wrapped lanes are zeroed by the mask.
        sm = s % BN
        if sm == 0:
            return x
        return jnp.concatenate([x[:, sm:], x[:, :sm]], axis=1)

    def kernel(x_ref, w_ref, mask_ref, out_ref):
        # x_ref    : (1, 2C, BN) bf16  [attended ; original] channel slab
        # w_ref    : (1, 9, Cout, 2C) bf16
        # mask_ref : (9, BN) bf16      spatial/batch validity masks
        # out_ref  : (1, Cout, BN) f32
        x = x_ref[0]
        w = w_ref[0]
        masks = mask_ref[...]

        acc = jnp.zeros((Cout, BN), jnp.float32)
        for k, (dy, dx) in enumerate(offsets):                 # static 9 taps
            xs = lane_shift(x, dy * W + dx) * masks[k:k + 1, :]
            acc = acc + jnp.dot(w[k], xs, preferred_element_type=jnp.float32)
        out_ref[0] = acc

    return kernel


# ----------------------------------------------------------------------------
# Wrapper
# ----------------------------------------------------------------------------
def coattention_forward(input1, input2, params):
    B, C, H, W = input1.shape
    N = H * W
    BN = B * N
    Cout = params["conv1"].shape[0]

    # ---- lane-dense (C, B*N) slabs: batch folded into the lane axis --------
    def to_cbn(x):                    # (B, C, H, W) -> (C, B*N)
        return jnp.transpose(x.reshape(B, C, N), (1, 0, 2)).reshape(C, BN)

    e = to_cbn(input1).astype(jnp.float32)
    q = to_cbn(input2).astype(jnp.float32)
    we = params["linear_e"].astype(jnp.float32)
    g = params["gate"].reshape(C, 1).astype(jnp.float32)

    # ---- co-attention: single grid step -> fused conv-input slabs ----------
    att_cost = pl.CostEstimate(
        flops=int(B * (2 * C * C * N + 6 * C * N * N + 4 * C * N)),
        transcendentals=int(B * (2 * N * N + 2 * N)),
        bytes_accessed=int((2 * C * BN + C * C + C) * 4 + 2 * 2 * C * BN * 2))

    slab = pl.pallas_call(
        _make_coattention_kernel(B, C, N, BN),
        out_shape=jax.ShapeDtypeStruct((2, 2 * C, BN), jnp.bfloat16),
        grid=(1,),
        in_specs=[
            pl.BlockSpec((C, BN), lambda i: (0, 0)),
            pl.BlockSpec((C, BN), lambda i: (0, 0)),
            pl.BlockSpec((C, C), lambda i: (0, 0)),
            pl.BlockSpec((C, 1), lambda i: (0, 0)),
        ],
        out_specs=pl.BlockSpec((2, 2 * C, BN), lambda i: (0, 0, 0)),
        compiler_params=pltpu.CompilerParams(
            dimension_semantics=("arbitrary",),
            vmem_limit_bytes=32 * 1024 * 1024),
        cost_estimate=att_cost,
    )(e, q, we, g)

    # ---- conv weights: (Cout, 2C, 3, 3) -> (9, Cout, 2C) per branch --------
    def prep_w(wfull):
        return jnp.transpose(wfull, (2, 3, 0, 1)).reshape(9, Cout, 2 * C)

    w = jnp.stack([prep_w(params["conv1"]), prep_w(params["conv2"])],
                  axis=0).astype(jnp.bfloat16)                   # (2, 9, Cout, 2C)

    # Spatial validity masks for the 9 taps; periodic over the folded batch,
    # so they also kill any cross-batch / wrap-around lane reads.
    n_idx = jnp.arange(BN, dtype=jnp.int32) % N
    yy = n_idx // W
    xx = n_idx % W
    masks = jnp.stack([
        ((yy + dy >= 0) & (yy + dy < H) & (xx + dx >= 0) & (xx + dx < W))
        for dy in (-1, 0, 1) for dx in (-1, 0, 1)
    ], axis=0).astype(jnp.bfloat16)                              # (9, BN)

    conv_cost = pl.CostEstimate(
        flops=int(2 * 9 * 2 * Cout * 2 * C * BN),
        transcendentals=0,
        bytes_accessed=int(2 * (2 * C * BN + 9 * Cout * 2 * C) * 2
                           + 9 * BN * 2 + 2 * Cout * BN * 4))

    out = pl.pallas_call(
        _make_conv3x3_kernel(C, Cout, H, W, BN),
        out_shape=jax.ShapeDtypeStruct((2, Cout, BN), jnp.float32),
        grid=(2,),
        in_specs=[
            pl.BlockSpec((1, 2 * C, BN), lambda r: (r, 0, 0)),
            pl.BlockSpec((1, 9, Cout, 2 * C), lambda r: (r, 0, 0, 0)),
            pl.BlockSpec((9, BN), lambda r: (0, 0)),
        ],
        out_specs=pl.BlockSpec((1, Cout, BN), lambda r: (r, 0, 0)),
        compiler_params=pltpu.CompilerParams(
            dimension_semantics=("parallel",),
            vmem_limit_bytes=32 * 1024 * 1024),
        cost_estimate=conv_cost,
    )(slab, w, masks)

    def from_cbn(o):                  # (Cout, B*N) -> (B, Cout, H, W)
        return jnp.transpose(o.reshape(Cout, B, N), (1, 0, 2)).reshape(B, Cout, H, W)

    # Branch 0: exemplar_att branch (conv1) ; branch 1: query_att branch (conv2).
    return from_cbn(out[0]), from_cbn(out[1])


# ----------------------------------------------------------------------------
# Deterministic parameter init (shapes from the module's __init__).
# ----------------------------------------------------------------------------
def init_params(key, C):
    k1, k2, k3, k4 = jax.random.split(key, 4)
    return {
        "linear_e": jax.random.normal(k1, (C, C), jnp.float32) / jnp.sqrt(C),
        "gate": 0.01 * jax.random.normal(k2, (1, C, 1, 1), jnp.float32),
        "conv1": 0.01 * jax.random.normal(k3, (C, 2 * C, 3, 3), jnp.float32),
        "conv2": 0.01 * jax.random.normal(k4, (C, 2 * C, 3, 3), jnp.float32),
    }


# ----------------------------------------------------------------------------
# Pure-JAX reference (mirrors the torch forward) for a correctness check.
# ----------------------------------------------------------------------------
def reference_forward(input1, input2, params):
    hp = jax.lax.Precision.HIGHEST
    B, C, H, W = input1.shape
    N = H * W
    e = input1.reshape(B, C, N)
    q = input2.reshape(B, C, N)
    e_t = jnp.swapaxes(e, 1, 2)                                          # (B, N, C)
    corr = jnp.einsum("bnc,dc->bnd", e_t, params["linear_e"], precision=hp)
    A = jnp.einsum("bnd,bdm->bnm", corr, q, precision=hp)                # (B, N, N)
    A1 = jax.nn.softmax(A, axis=1)
    Bm = jax.nn.softmax(jnp.swapaxes(A, 1, 2), axis=1)
    q_att = jnp.einsum("bcn,bnm->bcm", e, A1, precision=hp)
    ex_att = jnp.einsum("bcn,bnm->bcm", q, Bm, precision=hp)
    i1 = ex_att.reshape(B, C, H, W)
    i2 = q_att.reshape(B, C, H, W)
    gv = params["gate"].reshape(1, C)
    m1 = jax.nn.sigmoid(jnp.einsum("oc,bchw->bohw", gv, i1, precision=hp))
    m2 = jax.nn.sigmoid(jnp.einsum("oc,bchw->bohw", gv, i2, precision=hp))
    i1 = i1 * m1
    i2 = i2 * m2
    c1 = jnp.concatenate([i1, input1], axis=1)
    c2 = jnp.concatenate([i2, input2], axis=1)
    conv = lambda x, w: jax.lax.conv_general_dilated(
        x, w, (1, 1), ((1, 1), (1, 1)),
        dimension_numbers=("NCHW", "OIHW", "NCHW"), precision=hp)
    return conv(c1, params["conv1"]), conv(c2, params["conv2"])


if __name__ == "__main__":
    key = jax.random.PRNGKey(0)
    kx1, kx2, kp = jax.random.split(key, 3)

    B, C, H, W = 2, 32, 8, 8     # all_channel=32, all_dim=H*W=64; B*H*W = 128 lanes
    input1 = jax.random.normal(kx1, (B, C, H, W), jnp.float32)
    input2 = jax.random.normal(kx2, (B, C, H, W), jnp.float32)
    params = init_params(kp, C)

    out1, out2 = jax.jit(coattention_forward)(input1, input2, params)
    jax.block_until_ready((out1, out2))

    ref1, ref2 = reference_forward(input1, input2, params)
    assert out1.shape == (B, C, H, W) and out2.shape == (B, C, H, W)
    assert bool(jnp.all(jnp.isfinite(out1))) and bool(jnp.all(jnp.isfinite(out2)))
    # Attention path is f32; only the FLOP-heavy conv uses bf16 MXU operands,
    # so the tolerance vs the Precision.HIGHEST f32 reference is modest.
    assert jnp.allclose(out1, ref1, rtol=3e-2, atol=2e-2), "conv1 branch mismatch"
    assert jnp.allclose(out2, ref2, rtol=3e-2, atol=2e-2), "conv2 branch mismatch"

    print("KERNEL_OK")
</pallas_src>

<mosaic_0001>
module attributes {stable_mosaic.version = 11 : i64} {
  func.func @kernel(%arg0: i32, %arg1: memref<32x128xf32, #tpu.memory_space<vmem>>, %arg2: memref<32x128xf32, #tpu.memory_space<vmem>>, %arg3: memref<32x32xf32, #tpu.memory_space<vmem>>, %arg4: memref<32x1xf32, #tpu.memory_space<vmem>>, %arg5: memref<2x64x128xbf16, #tpu.memory_space<vmem>>) attributes {dimension_semantics = [#tpu.dimension_semantics<arbitrary>], iteration_bounds = array<i64: 1>, scalar_prefetch = 0 : i64, scratch_operands = 0 : i64, tpu.core_type = #tpu.core_type<tc>, window_params = [{pipeline_mode = #tpu.pipeline_mode<synchronous>, transform_indices = @transform_0, window_bounds = array<i64: 32, 128>}, {pipeline_mode = #tpu.pipeline_mode<synchronous>, transform_indices = @transform_1, window_bounds = array<i64: 32, 128>}, {pipeline_mode = #tpu.pipeline_mode<synchronous>, transform_indices = @transform_2, window_bounds = array<i64: 32, 32>}, {pipeline_mode = #tpu.pipeline_mode<synchronous>, transform_indices = @transform_3, window_bounds = array<i64: 32, 1>}, {pipeline_mode = #tpu.pipeline_mode<synchronous>, transform_indices = @transform_4, window_bounds = array<i64: 2, 64, 128>}]} {
    %c0 = arith.constant 0 : index
    %c0_0 = arith.constant 0 : index
    %0 = vector.load %arg1[%c0, %c0_0] : memref<32x128xf32, #tpu.memory_space<vmem>>, vector<32x128xf32>
    %c0_1 = arith.constant 0 : index
    %c0_2 = arith.constant 0 : index
    %1 = vector.load %arg2[%c0_1, %c0_2] : memref<32x128xf32, #tpu.memory_space<vmem>>, vector<32x128xf32>
    %c0_3 = arith.constant 0 : index
    %c0_4 = arith.constant 0 : index
    %2 = vector.load %arg3[%c0_3, %c0_4] : memref<32x32xf32, #tpu.memory_space<vmem>>, vector<32x32xf32>
    %c0_5 = arith.constant 0 : index
    %c0_6 = arith.constant 0 : index
    %3 = vector.load %arg4[%c0_5, %c0_6] : memref<32x1xf32, #tpu.memory_space<vmem>>, vector<32x1xf32>
    %4 = vector.extract_strided_slice %0 {offsets = [0, 0], sizes = [32, 64], strides = [1, 1]} : vector<32x128xf32> to vector<32x64xf32>
    %5 = vector.extract_strided_slice %1 {offsets = [0, 0], sizes = [32, 64], strides = [1, 1]} : vector<32x128xf32> to vector<32x64xf32>
    %cst = arith.constant dense<0.000000e+00> : vector<32x64xf32>
    %6 = tpu.matmul %2, %4, %cst {dimension_numbers = #tpu.dot_dimension_numbers<[1], [0], [0], [1], [0, 0, 1, 1], [], []>} : vector<32x32xf32>, vector<32x64xf32>, vector<32x64xf32> -> vector<32x64xf32>
    %cst_7 = arith.constant dense<0.000000e+00> : vector<64x64xf32>
    %7 = tpu.matmul %6, %5, %cst_7 {dimension_numbers = #tpu.dot_dimension_numbers<[0], [0], [1], [1], [0, 1, 1, 1], [], []>} : vector<32x64xf32>, vector<32x64xf32>, vector<64x64xf32> -> vector<64x64xf32>
    %cst_8 = arith.constant dense<0xFF800000> : vector<64xf32>
    %8 = vector.multi_reduction <maximumf>, %7, %cst_8 [0] : vector<64x64xf32> to vector<64xf32>
    %9 = vector.shape_cast %8 : vector<64xf32> to vector<1x64xf32>
    %10 = vector.broadcast %9 : vector<1x64xf32> to vector<64x64xf32>
    %11 = arith.subf %7, %10 : vector<64x64xf32>
    %12 = math.exp %11 : vector<64x64xf32>
    %cst_9 = arith.constant dense<0.000000e+00> : vector<64xf32>
    %13 = vector.multi_reduction <add>, %12, %cst_9 [0] : vector<64x64xf32> to vector<64xf32>
    %14 = vector.shape_cast %13 : vector<64xf32> to vector<1x64xf32>
    %15 = tpu.reciprocal %14 {approx = true} : vector<1x64xf32> -> vector<1x64xf32>
    %16 = vector.broadcast %15 : vector<1x64xf32> to vector<64x64xf32>
    %17 = arith.mulf %12, %16 : vector<64x64xf32>
    %cst_10 = arith.constant dense<0xFF800000> : vector<64xf32>
    %18 = vector.multi_reduction <maximumf>, %7, %cst_10 [1] : vector<64x64xf32> to vector<64xf32>
    %19 = vector.shape_cast %18 : vector<64xf32> to vector<64x1xf32>
    %20 = vector.broadcast %19 : vector<64x1xf32> to vector<64x64xf32>
    %21 = arith.subf %7, %20 : vector<64x64xf32>
    %22 = math.exp %21 : vector<64x64xf32>
    %cst_11 = arith.constant dense<0.000000e+00> : vector<64xf32>
    %23 = vector.multi_reduction <add>, %22, %cst_11 [1] : vector<64x64xf32> to vector<64xf32>
    %24 = vector.shape_cast %23 : vector<64xf32> to vector<64x1xf32>
    %25 = tpu.reciprocal %24 {approx = true} : vector<64x1xf32> -> vector<64x1xf32>
    %26 = vector.broadcast %25 : vector<64x1xf32> to vector<64x64xf32>
    %27 = arith.mulf %22, %26 : vector<64x64xf32>
    %cst_12 = arith.constant dense<0.000000e+00> : vector<32x64xf32>
    %28 = tpu.matmul %4, %17, %cst_12 {dimension_numbers = #tpu.dot_dimension_numbers<[1], [0], [0], [1], [0, 0, 1, 1], [], []>} : vector<32x64xf32>, vector<64x64xf32>, vector<32x64xf32> -> vector<32x64xf32>
    %cst_13 = arith.constant dense<0.000000e+00> : vector<32x64xf32>
    %29 = tpu.matmul %5, %27, %cst_13 {dimension_numbers = #tpu.dot_dimension_numbers<[1], [1], [0], [0], [0, 0, 1, 0], [], []>} : vector<32x64xf32>, vector<64x64xf32>, vector<32x64xf32> -> vector<32x64xf32>
    %30 = vector.broadcast %3 : vector<32x1xf32> to vector<32x64xf32>
    %31 = arith.mulf %30, %29 : vector<32x64xf32>
    %cst_14 = arith.constant dense<0.000000e+00> : vector<64xf32>
    %32 = vector.multi_reduction <add>, %31, %cst_14 [0] : vector<32x64xf32> to vector<64xf32>
    %33 = vector.shape_cast %32 : vector<64xf32> to vector<1x64xf32>
    %34 = arith.negf %33 : vector<1x64xf32>
    %35 = math.exp %34 : vector<1x64xf32>
    %cst_15 = arith.constant 1.000000e+00 : f32
    %36 = vector.broadcast %cst_15 : f32 to vector<1x64xf32>
    %37 = arith.addf %36, %35 : vector<1x64xf32>
    %38 = arith.divf %36, %37 : vector<1x64xf32>
    %39 = vector.broadcast %3 : vector<32x1xf32> to vector<32x64xf32>
    %40 = arith.mulf %39, %28 : vector<32x64xf32>
    %cst_16 = arith.constant dense<0.000000e+00> : vector<64xf32>
    %41 = vector.multi_reduction <add>, %40, %cst_16 [0] : vector<32x64xf32> to vector<64xf32>
    %42 = vector.shape_cast %41 : vector<64xf32> to vector<1x64xf32>
    %43 = arith.negf %42 : vector<1x64xf32>
    %44 = math.exp %43 : vector<1x64xf32>
    %cst_17 = arith.constant 1.000000e+00 : f32
    %45 = vector.broadcast %cst_17 : f32 to vector<1x64xf32>
    %46 = arith.addf %45, %44 : vector<1x64xf32>
    %47 = arith.divf %45, %46 : vector<1x64xf32>
    %48 = vector.broadcast %38 : vector<1x64xf32> to vector<32x64xf32>
    %49 = arith.mulf %29, %48 : vector<32x64xf32>
    %50 = arith.truncf %49 : vector<32x64xf32> to vector<32x64xbf16>
    %51 = vector.broadcast %47 : vector<1x64xf32> to vector<32x64xf32>
    %52 = arith.mulf %28, %51 : vector<32x64xf32>
    %53 = arith.truncf %52 : vector<32x64xf32> to vector<32x64xbf16>
    %54 = vector.extract_strided_slice %0 {offsets = [0, 64], sizes = [32, 64], strides = [1, 1]} : vector<32x128xf32> to vector<32x64xf32>
    %55 = vector.extract_strided_slice %1 {offsets = [0, 64], sizes = [32, 64], strides = [1, 1]} : vector<32x128xf32> to vector<32x64xf32>
    %cst_18 = arith.constant dense<0.000000e+00> : vector<32x64xf32>
    %56 = tpu.matmul %2, %54, %cst_18 {dimension_numbers = #tpu.dot_dimension_numbers<[1], [0], [0], [1], [0, 0, 1, 1], [], []>} : vector<32x32xf32>, vector<32x64xf32>, vector<32x64xf32> -> vector<32x64xf32>
    %cst_19 = arith.constant dense<0.000000e+00> : vector<64x64xf32>
    %57 = tpu.matmul %56, %55, %cst_19 {dimension_numbers = #tpu.dot_dimension_numbers<[0], [0], [1], [1], [0, 1, 1, 1], [], []>} : vector<32x64xf32>, vector<32x64xf32>, vector<64x64xf32> -> vector<64x64xf32>
    %cst_20 = arith.constant dense<0xFF800000> : vector<64xf32>
    %58 = vector.multi_reduction <maximumf>, %57, %cst_20 [0] : vector<64x64xf32> to vector<64xf32>
    %59 = vector.shape_cast %58 : vector<64xf32> to vector<1x64xf32>
    %60 = vector.broadcast %59 : vector<1x64xf32> to vector<64x64xf32>
    %61 = arith.subf %57, %60 : vector<64x64xf32>
    %62 = math.exp %61 : vector<64x64xf32>
    %cst_21 = arith.constant dense<0.000000e+00> : vector<64xf32>
    %63 = vector.multi_reduction <add>, %62, %cst_21 [0] : vector<64x64xf32> to vector<64xf32>
    %64 = vector.shape_cast %63 : vector<64xf32> to vector<1x64xf32>
    %65 = tpu.reciprocal %64 {approx = true} : vector<1x64xf32> -> vector<1x64xf32>
    %66 = vector.broadcast %65 : vector<1x64xf32> to vector<64x64xf32>
    %67 = arith.mulf %62, %66 : vector<64x64xf32>
    %cst_22 = arith.constant dense<0xFF800000> : vector<64xf32>
    %68 = vector.multi_reduction <maximumf>, %57, %cst_22 [1] : vector<64x64xf32> to vector<64xf32>
    %69 = vector.shape_cast %68 : vector<64xf32> to vector<64x1xf32>
    %70 = vector.broadcast %69 : vector<64x1xf32> to vector<64x64xf32>
    %71 = arith.subf %57, %70 : vector<64x64xf32>
    %72 = math.exp %71 : vector<64x64xf32>
    %cst_23 = arith.constant dense<0.000000e+00> : vector<64xf32>
    %73 = vector.multi_reduction <add>, %72, %cst_23 [1] : vector<64x64xf32> to vector<64xf32>
    %74 = vector.shape_cast %73 : vector<64xf32> to vector<64x1xf32>
    %75 = tpu.reciprocal %74 {approx = true} : vector<64x1xf32> -> vector<64x1xf32>
    %76 = vector.broadcast %75 : vector<64x1xf32> to vector<64x64xf32>
    %77 = arith.mulf %72, %76 : vector<64x64xf32>
    %cst_24 = arith.constant dense<0.000000e+00> : vector<32x64xf32>
    %78 = tpu.matmul %54, %67, %cst_24 {dimension_numbers = #tpu.dot_dimension_numbers<[1], [0], [0], [1], [0, 0, 1, 1], [], []>} : vector<32x64xf32>, vector<64x64xf32>, vector<32x64xf32> -> vector<32x64xf32>
    %cst_25 = arith.constant dense<0.000000e+00> : vector<32x64xf32>
    %79 = tpu.matmul %55, %77, %cst_25 {dimension_numbers = #tpu.dot_dimension_numbers<[1], [1], [0], [0], [0, 0, 1, 0], [], []>} : vector<32x64xf32>, vector<64x64xf32>, vector<32x64xf32> -> vector<32x64xf32>
    %80 = vector.broadcast %3 : vector<32x1xf32> to vector<32x64xf32>
    %81 = arith.mulf %80, %79 : vector<32x64xf32>
    %cst_26 = arith.constant dense<0.000000e+00> : vector<64xf32>
    %82 = vector.multi_reduction <add>, %81, %cst_26 [0] : vector<32x64xf32> to vector<64xf32>
    %83 = vector.shape_cast %82 : vector<64xf32> to vector<1x64xf32>
    %84 = arith.negf %83 : vector<1x64xf32>
    %85 = math.exp %84 : vector<1x64xf32>
    %cst_27 = arith.constant 1.000000e+00 : f32
    %86 = vector.broadcast %cst_27 : f32 to vector<1x64xf32>
    %87 = arith.addf %86, %85 : vector<1x64xf32>
    %88 = arith.divf %86, %87 : vector<1x64xf32>
    %89 = vector.broadcast %3 : vector<32x1xf32> to vector<32x64xf32>
    %90 = arith.mulf %89, %78 : vector<32x64xf32>
    %cst_28 = arith.constant dense<0.000000e+00> : vector<64xf32>
    %91 = vector.multi_reduction <add>, %90, %cst_28 [0] : vector<32x64xf32> to vector<64xf32>
    %92 = vector.shape_cast %91 : vector<64xf32> to vector<1x64xf32>
    %93 = arith.negf %92 : vector<1x64xf32>
    %94 = math.exp %93 : vector<1x64xf32>
    %cst_29 = arith.constant 1.000000e+00 : f32
    %95 = vector.broadcast %cst_29 : f32 to vector<1x64xf32>
    %96 = arith.addf %95, %94 : vector<1x64xf32>
    %97 = arith.divf %95, %96 : vector<1x64xf32>
    %98 = vector.broadcast %88 : vector<1x64xf32> to vector<32x64xf32>
    %99 = arith.mulf %79, %98 : vector<32x64xf32>
    %100 = arith.truncf %99 : vector<32x64xf32> to vector<32x64xbf16>
    %101 = vector.broadcast %97 : vector<1x64xf32> to vector<32x64xf32>
    %102 = arith.mulf %78, %101 : vector<32x64xf32>
    %103 = arith.truncf %102 : vector<32x64xf32> to vector<32x64xbf16>
    %104 = tpu.concatenate %50, %100 in 1 : vector<32x64xbf16>, vector<32x64xbf16> -> vector<32x128xbf16>
    %105 = tpu.concatenate %53, %103 in 1 : vector<32x64xbf16>, vector<32x64xbf16> -> vector<32x128xbf16>
    %c0_30 = arith.constant 0 : index
    %c0_31 = arith.constant 0 : index
    %c0_32 = arith.constant 0 : index
    %106 = vector.load %arg5[%c0_30, %c0_31, %c0_32] : memref<2x64x128xbf16, #tpu.memory_space<vmem>>, vector<1x32x128xbf16>
    %107 = vector.shape_cast %106 : vector<1x32x128xbf16> to vector<32x128xbf16>
    %108 = vector.shape_cast %104 : vector<32x128xbf16> to vector<1x32x128xbf16>
    tpu.vector_store %arg5[%c0_30, %c0_31, %c0_32], %108 {strides = array<i32>} : memref<2x64x128xbf16, #tpu.memory_space<vmem>>, vector<1x32x128xbf16>,
    %109 = arith.truncf %0 : vector<32x128xf32> to vector<32x128xbf16>
    %c0_33 = arith.constant 0 : index
    %c32 = arith.constant 32 : index
    %c0_34 = arith.constant 0 : index
    %110 = vector.load %arg5[%c0_33, %c32, %c0_34] : memref<2x64x128xbf16, #tpu.memory_space<vmem>>, vector<1x32x128xbf16>
    %111 = vector.shape_cast %110 : vector<1x32x128xbf16> to vector<32x128xbf16>
    %112 = vector.shape_cast %109 : vector<32x128xbf16> to vector<1x32x128xbf16>
    tpu.vector_store %arg5[%c0_33, %c32, %c0_34], %112 {strides = array<i32>} : memref<2x64x128xbf16, #tpu.memory_space<vmem>>, vector<1x32x128xbf16>,
    %c1 = arith.constant 1 : index
    %c0_35 = arith.constant 0 : index
    %c0_36 = arith.constant 0 : index
    %113 = vector.load %arg5[%c1, %c0_35, %c0_36] : memref<2x64x128xbf16, #tpu.memory_space<vmem>>, vector<1x32x128xbf16>
    %114 = vector.shape_cast %113 : vector<1x32x128xbf16> to vector<32x128xbf16>
    %115 = vector.shape_cast %105 : vector<32x128xbf16> to vector<1x32x128xbf16>
    tpu.vector_store %arg5[%c1, %c0_35, %c0_36], %115 {strides = array<i32>} : memref<2x64x128xbf16, #tpu.memory_space<vmem>>, vector<1x32x128xbf16>,
    %116 = arith.truncf %1 : vector<32x128xf32> to vector<32x128xbf16>
    %c1_37 = arith.constant 1 : index
    %c32_38 = arith.constant 32 : index
    %c0_39 = arith.constant 0 : index
    %117 = vector.load %arg5[%c1_37, %c32_38, %c0_39] : memref<2x64x128xbf16, #tpu.memory_space<vmem>>, vector<1x32x128xbf16>
    %118 = vector.shape_cast %117 : vector<1x32x128xbf16> to vector<32x128xbf16>
    %119 = vector.shape_cast %116 : vector<32x128xbf16> to vector<1x32x128xbf16>
    tpu.vector_store %arg5[%c1_37, %c32_38, %c0_39], %119 {strides = array<i32>} : memref<2x64x128xbf16, #tpu.memory_space<vmem>>, vector<1x32x128xbf16>,
    return
  }
  func.func @transform_0(%arg0: i32) -> (i32, i32) {
    %c0_i32 = arith.constant 0 : i32
    %c0_i32_0 = arith.constant 0 : i32
    %c0_i32_1 = arith.constant 0 : i32
    return %c0_i32, %c0_i32_0 : i32, i32
  }
  func.func @transform_1(%arg0: i32) -> (i32, i32) {
    %c0_i32 = arith.constant 0 : i32
    %c0_i32_0 = arith.constant 0 : i32
    %c0_i32_1 = arith.constant 0 : i32
    return %c0_i32, %c0_i32_0 : i32, i32
  }
  func.func @transform_2(%arg0: i32) -> (i32, i32) {
    %c0_i32 = arith.constant 0 : i32
    %c0_i32_0 = arith.constant 0 : i32
    %c0_i32_1 = arith.constant 0 : i32
    return %c0_i32, %c0_i32_0 : i32, i32
  }
  func.func @transform_3(%arg0: i32) -> (i32, i32) {
    %c0_i32 = arith.constant 0 : i32
    %c0_i32_0 = arith.constant 0 : i32
    %c0_i32_1 = arith.constant 0 : i32
    return %c0_i32, %c0_i32_0 : i32, i32
  }
  func.func @transform_4(%arg0: i32) -> (i32, i32, i32) {
    %c0_i32 = arith.constant 0 : i32
    %c0_i32_0 = arith.constant 0 : i32
    %c0_i32_1 = arith.constant 0 : i32
    %c0_i32_2 = arith.constant 0 : i32
    return %c0_i32, %c0_i32_0, %c0_i32_1 : i32, i32, i32
  }
}

module attributes {stable_mosaic.version = 11 : i64} {
  func.func @kernel(%arg0: i32, %arg1: memref<1x64x128xbf16, #tpu.memory_space<vmem>>, %arg2: memref<1x9x32x64xbf16, #tpu.memory_space<vmem>>, %arg3: memref<9x128xbf16, #tpu.memory_space<vmem>>, %arg4: memref<1x32x128xf32, #tpu.memory_space<vmem>>) attributes {dimension_semantics = [#tpu.dimension_semantics<parallel>], iteration_bounds = array<i64: 2>, scalar_prefetch = 0 : i64, scratch_operands = 0 : i64, tpu.core_type = #tpu.core_type<tc>, window_params = [{transform_indices = @transform_0, window_bounds = array<i64: 1, 64, 128>}, {transform_indices = @transform_1, window_bounds = array<i64: 1, 9, 32, 64>}, {pipeline_mode = #tpu.pipeline_mode<synchronous>, transform_indices = @transform_2, window_bounds = array<i64: 9, 128>}, {transform_indices = @transform_3, window_bounds = array<i64: 1, 32, 128>}]} {
    %c0 = arith.constant 0 : index
    %c0_0 = arith.constant 0 : index
    %c0_1 = arith.constant 0 : index
    %0 = vector.load %arg1[%c0, %c0_0, %c0_1] : memref<1x64x128xbf16, #tpu.memory_space<vmem>>, vector<1x64x128xbf16>
    %1 = vector.shape_cast %0 : vector<1x64x128xbf16> to vector<64x128xbf16>
    %c0_2 = arith.constant 0 : index
    %c0_3 = arith.constant 0 : index
    %c0_4 = arith.constant 0 : index
    %c0_5 = arith.constant 0 : index
    %2 = vector.load %arg2[%c0_2, %c0_3, %c0_4, %c0_5] : memref<1x9x32x64xbf16, #tpu.memory_space<vmem>>, vector<1x9x32x64xbf16>
    %3 = vector.shape_cast %2 : vector<1x9x32x64xbf16> to vector<9x32x64xbf16>
    %c0_6 = arith.constant 0 : index
    %c0_7 = arith.constant 0 : index
    %4 = vector.load %arg3[%c0_6, %c0_7] : memref<9x128xbf16, #tpu.memory_space<vmem>>, vector<9x128xbf16>
    %cst = arith.constant 0.000000e+00 : f32
    %5 = vector.broadcast %cst : f32 to vector<32x128xf32>
    %6 = vector.extract_strided_slice %1 {offsets = [0, 119], sizes = [64, 9], strides = [1, 1]} : vector<64x128xbf16> to vector<64x9xbf16>
    %7 = vector.extract_strided_slice %1 {offsets = [0, 0], sizes = [64, 119], strides = [1, 1]} : vector<64x128xbf16> to vector<64x119xbf16>
    %8 = tpu.concatenate %6, %7 in 1 : vector<64x9xbf16>, vector<64x119xbf16> -> vector<64x128xbf16>
    %9 = vector.extract_strided_slice %4 {offsets = [0, 0], sizes = [1, 128], strides = [1, 1]} : vector<9x128xbf16> to vector<1x128xbf16>
    %10 = vector.broadcast %9 : vector<1x128xbf16> to vector<64x128xbf16>
    %11 = arith.mulf %8, %10 : vector<64x128xbf16>
    %12 = vector.extract_strided_slice %3 {offsets = [0, 0, 0], sizes = [1, 32, 64], strides = [1, 1, 1]} : vector<9x32x64xbf16> to vector<1x32x64xbf16>
    %13 = vector.shape_cast %12 : vector<1x32x64xbf16> to vector<32x64xbf16>
    %cst_8 = arith.constant dense<0.000000e+00> : vector<32x128xf32>
    %14 = tpu.matmul %13, %11, %cst_8 {dimension_numbers = #tpu.dot_dimension_numbers<[1], [0], [0], [1], [0, 0, 1, 1], [], []>} : vector<32x64xbf16>, vector<64x128xbf16>, vector<32x128xf32> -> vector<32x128xf32>
    %15 = arith.addf %5, %14 : vector<32x128xf32>
    %16 = vector.extract_strided_slice %1 {offsets = [0, 120], sizes = [64, 8], strides = [1, 1]} : vector<64x128xbf16> to vector<64x8xbf16>
    %17 = vector.extract_strided_slice %1 {offsets = [0, 0], sizes = [64, 120], strides = [1, 1]} : vector<64x128xbf16> to vector<64x120xbf16>
    %18 = tpu.concatenate %16, %17 in 1 : vector<64x8xbf16>, vector<64x120xbf16> -> vector<64x128xbf16>
    %19 = vector.extract_strided_slice %4 {offsets = [1, 0], sizes = [1, 128], strides = [1, 1]} : vector<9x128xbf16> to vector<1x128xbf16>
    %20 = vector.broadcast %19 : vector<1x128xbf16> to vector<64x128xbf16>
    %21 = arith.mulf %18, %20 : vector<64x128xbf16>
    %22 = vector.extract_strided_slice %3 {offsets = [1, 0, 0], sizes = [1, 32, 64], strides = [1, 1, 1]} : vector<9x32x64xbf16> to vector<1x32x64xbf16>
    %23 = vector.shape_cast %22 : vector<1x32x64xbf16> to vector<32x64xbf16>
    %cst_9 = arith.constant dense<0.000000e+00> : vector<32x128xf32>
    %24 = tpu.matmul %23, %21, %cst_9 {dimension_numbers = #tpu.dot_dimension_numbers<[1], [0], [0], [1], [0, 0, 1, 1], [], []>} : vector<32x64xbf16>, vector<64x128xbf16>, vector<32x128xf32> -> vector<32x128xf32>
    %25 = arith.addf %15, %24 : vector<32x128xf32>
    %26 = vector.extract_strided_slice %1 {offsets = [0, 121], sizes = [64, 7], strides = [1, 1]} : vector<64x128xbf16> to vector<64x7xbf16>
    %27 = vector.extract_strided_slice %1 {offsets = [0, 0], sizes = [64, 121], strides = [1, 1]} : vector<64x128xbf16> to vector<64x121xbf16>
    %28 = tpu.concatenate %26, %27 in 1 : vector<64x7xbf16>, vector<64x121xbf16> -> vector<64x128xbf16>
    %29 = vector.extract_strided_slice %4 {offsets = [2, 0], sizes = [1, 128], strides = [1, 1]} : vector<9x128xbf16> to vector<1x128xbf16>
    %30 = vector.broadcast %29 : vector<1x128xbf16> to vector<64x128xbf16>
    %31 = arith.mulf %28, %30 : vector<64x128xbf16>
    %32 = vector.extract_strided_slice %3 {offsets = [2, 0, 0], sizes = [1, 32, 64], strides = [1, 1, 1]} : vector<9x32x64xbf16> to vector<1x32x64xbf16>
    %33 = vector.shape_cast %32 : vector<1x32x64xbf16> to vector<32x64xbf16>
    %cst_10 = arith.constant dense<0.000000e+00> : vector<32x128xf32>
    %34 = tpu.matmul %33, %31, %cst_10 {dimension_numbers = #tpu.dot_dimension_numbers<[1], [0], [0], [1], [0, 0, 1, 1], [], []>} : vector<32x64xbf16>, vector<64x128xbf16>, vector<32x128xf32> -> vector<32x128xf32>
    %35 = arith.addf %25, %34 : vector<32x128xf32>
    %36 = vector.extract_strided_slice %1 {offsets = [0, 127], sizes = [64, 1], strides = [1, 1]} : vector<64x128xbf16> to vector<64x1xbf16>
    %37 = vector.extract_strided_slice %1 {offsets = [0, 0], sizes = [64, 127], strides = [1, 1]} : vector<64x128xbf16> to vector<64x127xbf16>
    %38 = tpu.concatenate %36, %37 in 1 : vector<64x1xbf16>, vector<64x127xbf16> -> vector<64x128xbf16>
    %39 = vector.extract_strided_slice %4 {offsets = [3, 0], sizes = [1, 128], strides = [1, 1]} : vector<9x128xbf16> to vector<1x128xbf16>
    %40 = vector.broadcast %39 : vector<1x128xbf16> to vector<64x128xbf16>
    %41 = arith.mulf %38, %40 : vector<64x128xbf16>
    %42 = vector.extract_strided_slice %3 {offsets = [3, 0, 0], sizes = [1, 32, 64], strides = [1, 1, 1]} : vector<9x32x64xbf16> to vector<1x32x64xbf16>
    %43 = vector.shape_cast %42 : vector<1x32x64xbf16> to vector<32x64xbf16>
    %cst_11 = arith.constant dense<0.000000e+00> : vector<32x128xf32>
    %44 = tpu.matmul %43, %41, %cst_11 {dimension_numbers = #tpu.dot_dimension_numbers<[1], [0], [0], [1], [0, 0, 1, 1], [], []>} : vector<32x64xbf16>, vector<64x128xbf16>, vector<32x128xf32> -> vector<32x128xf32>
    %45 = arith.addf %35, %44 : vector<32x128xf32>
    %46 = vector.extract_strided_slice %4 {offsets = [4, 0], sizes = [1, 128], strides = [1, 1]} : vector<9x128xbf16> to vector<1x128xbf16>
    %47 = vector.broadcast %46 : vector<1x128xbf16> to vector<64x128xbf16>
    %48 = arith.mulf %1, %47 : vector<64x128xbf16>
    %49 = vector.extract_strided_slice %3 {offsets = [4, 0, 0], sizes = [1, 32, 64], strides = [1, 1, 1]} : vector<9x32x64xbf16> to vector<1x32x64xbf16>
    %50 = vector.shape_cast %49 : vector<1x32x64xbf16> to vector<32x64xbf16>
    %cst_12 = arith.constant dense<0.000000e+00> : vector<32x128xf32>
    %51 = tpu.matmul %50, %48, %cst_12 {dimension_numbers = #tpu.dot_dimension_numbers<[1], [0], [0], [1], [0, 0, 1, 1], [], []>} : vector<32x64xbf16>, vector<64x128xbf16>, vector<32x128xf32> -> vector<32x128xf32>
    %52 = arith.addf %45, %51 : vector<32x128xf32>
    %53 = vector.extract_strided_slice %1 {offsets = [0, 1], sizes = [64, 127], strides = [1, 1]} : vector<64x128xbf16> to vector<64x127xbf16>
    %54 = vector.extract_strided_slice %1 {offsets = [0, 0], sizes = [64, 1], strides = [1, 1]} : vector<64x128xbf16> to vector<64x1xbf16>
    %55 = tpu.concatenate %53, %54 in 1 : vector<64x127xbf16>, vector<64x1xbf16> -> vector<64x128xbf16>
    %56 = vector.extract_strided_slice %4 {offsets = [5, 0], sizes = [1, 128], strides = [1, 1]} : vector<9x128xbf16> to vector<1x128xbf16>
    %57 = vector.broadcast %56 : vector<1x128xbf16> to vector<64x128xbf16>
    %58 = arith.mulf %55, %57 : vector<64x128xbf16>
    %59 = vector.extract_strided_slice %3 {offsets = [5, 0, 0], sizes = [1, 32, 64], strides = [1, 1, 1]} : vector<9x32x64xbf16> to vector<1x32x64xbf16>
    %60 = vector.shape_cast %59 : vector<1x32x64xbf16> to vector<32x64xbf16>
    %cst_13 = arith.constant dense<0.000000e+00> : vector<32x128xf32>
    %61 = tpu.matmul %60, %58, %cst_13 {dimension_numbers = #tpu.dot_dimension_numbers<[1], [0], [0], [1], [0, 0, 1, 1], [], []>} : vector<32x64xbf16>, vector<64x128xbf16>, vector<32x128xf32> -> vector<32x128xf32>
    %62 = arith.addf %52, %61 : vector<32x128xf32>
    %63 = vector.extract_strided_slice %1 {offsets = [0, 7], sizes = [64, 121], strides = [1, 1]} : vector<64x128xbf16> to vector<64x121xbf16>
    %64 = vector.extract_strided_slice %1 {offsets = [0, 0], sizes = [64, 7], strides = [1, 1]} : vector<64x128xbf16> to vector<64x7xbf16>
    %65 = tpu.concatenate %63, %64 in 1 : vector<64x121xbf16>, vector<64x7xbf16> -> vector<64x128xbf16>
    %66 = vector.extract_strided_slice %4 {offsets = [6, 0], sizes = [1, 128], strides = [1, 1]} : vector<9x128xbf16> to vector<1x128xbf16>
    %67 = vector.broadcast %66 : vector<1x128xbf16> to vector<64x128xbf16>
    %68 = arith.mulf %65, %67 : vector<64x128xbf16>
    %69 = vector.extract_strided_slice %3 {offsets = [6, 0, 0], sizes = [1, 32, 64], strides = [1, 1, 1]} : vector<9x32x64xbf16> to vector<1x32x64xbf16>
    %70 = vector.shape_cast %69 : vector<1x32x64xbf16> to vector<32x64xbf16>
    %cst_14 = arith.constant dense<0.000000e+00> : vector<32x128xf32>
    %71 = tpu.matmul %70, %68, %cst_14 {dimension_numbers = #tpu.dot_dimension_numbers<[1], [0], [0], [1], [0, 0, 1, 1], [], []>} : vector<32x64xbf16>, vector<64x128xbf16>, vector<32x128xf32> -> vector<32x128xf32>
    %72 = arith.addf %62, %71 : vector<32x128xf32>
    %73 = vector.extract_strided_slice %1 {offsets = [0, 8], sizes = [64, 120], strides = [1, 1]} : vector<64x128xbf16> to vector<64x120xbf16>
    %74 = vector.extract_strided_slice %1 {offsets = [0, 0], sizes = [64, 8], strides = [1, 1]} : vector<64x128xbf16> to vector<64x8xbf16>
    %75 = tpu.concatenate %73, %74 in 1 : vector<64x120xbf16>, vector<64x8xbf16> -> vector<64x128xbf16>
    %76 = vector.extract_strided_slice %4 {offsets = [7, 0], sizes = [1, 128], strides = [1, 1]} : vector<9x128xbf16> to vector<1x128xbf16>
    %77 = vector.broadcast %76 : vector<1x128xbf16> to vector<64x128xbf16>
    %78 = arith.mulf %75, %77 : vector<64x128xbf16>
    %79 = vector.extract_strided_slice %3 {offsets = [7, 0, 0], sizes = [1, 32, 64], strides = [1, 1, 1]} : vector<9x32x64xbf16> to vector<1x32x64xbf16>
    %80 = vector.shape_cast %79 : vector<1x32x64xbf16> to vector<32x64xbf16>
    %cst_15 = arith.constant dense<0.000000e+00> : vector<32x128xf32>
    %81 = tpu.matmul %80, %78, %cst_15 {dimension_numbers = #tpu.dot_dimension_numbers<[1], [0], [0], [1], [0, 0, 1, 1], [], []>} : vector<32x64xbf16>, vector<64x128xbf16>, vector<32x128xf32> -> vector<32x128xf32>
    %82 = arith.addf %72, %81 : vector<32x128xf32>
    %83 = vector.extract_strided_slice %1 {offsets = [0, 9], sizes = [64, 119], strides = [1, 1]} : vector<64x128xbf16> to vector<64x119xbf16>
    %84 = vector.extract_strided_slice %1 {offsets = [0, 0], sizes = [64, 9], strides = [1, 1]} : vector<64x128xbf16> to vector<64x9xbf16>
    %85 = tpu.concatenate %83, %84 in 1 : vector<64x119xbf16>, vector<64x9xbf16> -> vector<64x128xbf16>
    %86 = vector.extract_strided_slice %4 {offsets = [8, 0], sizes = [1, 128], strides = [1, 1]} : vector<9x128xbf16> to vector<1x128xbf16>
    %87 = vector.broadcast %86 : vector<1x128xbf16> to vector<64x128xbf16>
    %88 = arith.mulf %85, %87 : vector<64x128xbf16>
    %89 = vector.extract_strided_slice %3 {offsets = [8, 0, 0], sizes = [1, 32, 64], strides = [1, 1, 1]} : vector<9x32x64xbf16> to vector<1x32x64xbf16>
    %90 = vector.shape_cast %89 : vector<1x32x64xbf16> to vector<32x64xbf16>
    %cst_16 = arith.constant dense<0.000000e+00> : vector<32x128xf32>
    %91 = tpu.matmul %90, %88, %cst_16 {dimension_numbers = #tpu.dot_dimension_numbers<[1], [0], [0], [1], [0, 0, 1, 1], [], []>} : vector<32x64xbf16>, vector<64x128xbf16>, vector<32x128xf32> -> vector<32x128xf32>
    %92 = arith.addf %82, %91 : vector<32x128xf32>
    %c0_17 = arith.constant 0 : index
    %c0_18 = arith.constant 0 : index
    %c0_19 = arith.constant 0 : index
    %93 = vector.load %arg4[%c0_17, %c0_18, %c0_19] : memref<1x32x128xf32, #tpu.memory_space<vmem>>, vector<1x32x128xf32>
    %94 = vector.shape_cast %93 : vector<1x32x128xf32> to vector<32x128xf32>
    %95 = vector.shape_cast %92 : vector<32x128xf32> to vector<1x32x128xf32>
    tpu.vector_store %arg4[%c0_17, %c0_18, %c0_19], %95 {strides = array<i32>} : memref<1x32x128xf32, #tpu.memory_space<vmem>>, vector<1x32x128xf32>,
    return
  }
  func.func @transform_0(%arg0: i32) -> (i32, i32, i32) {
    %c0_i32 = arith.constant 0 : i32
    %c0_i32_0 = arith.constant 0 : i32
    %c0_i32_1 = arith.constant 0 : i32
    return %arg0, %c0_i32, %c0_i32_0 : i32, i32, i32
  }
  func.func @transform_1(%arg0: i32) -> (i32, i32, i32, i32) {
    %c0_i32 = arith.constant 0 : i32
    %c0_i32_0 = arith.constant 0 : i32
    %c0_i32_1 = arith.constant 0 : i32
    %c0_i32_2 = arith.constant 0 : i32
    return %arg0, %c0_i32, %c0_i32_0, %c0_i32_1 : i32, i32, i32, i32
  }
  func.func @transform_2(%arg0: i32) -> (i32, i32) {
    %c0_i32 = arith.constant 0 : i32
    %c0_i32_0 = arith.constant 0 : i32
    %c0_i32_1 = arith.constant 0 : i32
    return %c0_i32, %c0_i32_0 : i32, i32
  }
  func.func @transform_3(%arg0: i32) -> (i32, i32, i32) {
    %c0_i32 = arith.constant 0 : i32
    %c0_i32_0 = arith.constant 0 : i32
    %c0_i32_1 = arith.constant 0 : i32
    return %arg0, %c0_i32, %c0_i32_0 : i32, i32, i32
  }
}

</mosaic_0001>

<llo_original>
// kernel: squeeze.2
$region0: #{squeeze.2}
  %s0 = inlined_call_operand.vmem [shape: f32[1,32,128], index: 0, kind: input, shape index: {}]
  %s1 = inlined_call_operand.vmem [shape: f32[32,2,64], index: 1, kind: output, shape index: {}]
  $region1: #{squeeze.2} parent=0
    #allocation0 [shape = 'u8[131072]{0}', space=vmem, size = 0x20000, scoped, tag = 'scoped mem for output reshape']
    %v2 = vld [vmem:[%s0] sm:$0xff]
    %vm3 = vcmask 523264
    %4 = vst.msk [vmem:[#allocation0] ss:$8 sm:$0xf] %vm3, %v2
    %5 = vst.msk [vmem:[#allocation0] ss:$8 sm:$0xf0] %vm3, %v2
    %s6 = scalar_lea.vmem %s0, 8
    %v7 = vld [vmem:[%s6] sm:$0xff]
    %vm8 = vcmask 523264
    %s9 = scalar_lea.vmem [#allocation0], 64
    %10 = vst.msk [vmem:[%s9] ss:$8 sm:$0xf] %vm8, %v7
    %s11 = scalar_lea.vmem [#allocation0], 64
    %12 = vst.msk [vmem:[%s11] ss:$8 sm:$0xf0] %vm8, %v7
    %s13 = scalar_lea.vmem %s0, 16
    %v14 = vld [vmem:[%s13] sm:$0xff]
    %vm15 = vcmask 523264
    %s16 = scalar_lea.vmem [#allocation0], 128
    %17 = vst.msk [vmem:[%s16] ss:$8 sm:$0xf] %vm15, %v14
    %s18 = scalar_lea.vmem [#allocation0], 128
    %19 = vst.msk [vmem:[%s18] ss:$8 sm:$0xf0] %vm15, %v14
    %s20 = scalar_lea.vmem %s0, 24
    %v21 = vld [vmem:[%s20] sm:$0xff]
    %vm22 = vcmask 523264
    %s23 = scalar_lea.vmem [#allocation0], 192
    %24 = vst.msk [vmem:[%s23] ss:$8 sm:$0xf] %vm22, %v21
    %s25 = scalar_lea.vmem [#allocation0], 192
    %26 = vst.msk [vmem:[%s25] ss:$8 sm:$0xf0] %vm22, %v21
    %v27 = vld [vmem:[%s0] sm:$0xff]
    %28 = vrot.lane.b32.xlu0 %v27, 64
    %v29 = vpop.permute.xlu0 %28
    %vm30 = vcmask 523264
    %s31 = scalar_lea.vmem [#allocation0], 1
    %32 = vst.msk [vmem:[%s31] ss:$8 sm:$0xf] %vm30, %v29
    %s33 = scalar_lea.vmem [#allocation0], 1
    %34 = vst.msk [vmem:[%s33] ss:$8 sm:$0xf0] %vm30, %v29
    %s35 = scalar_lea.vmem %s0, 8
    %v36 = vld [vmem:[%s35] sm:$0xff]
    %37 = vrot.lane.b32.xlu0 %v36, 64
    %v38 = vpop.permute.xlu0 %37
    %vm39 = vcmask 523264
    %s40 = scalar_lea.vmem [#allocation0], 65
    %41 = vst.msk [vmem:[%s40] ss:$8 sm:$0xf] %vm39, %v38
    %s42 = scalar_lea.vmem [#allocation0], 65
    %43 = vst.msk [vmem:[%s42] ss:$8 sm:$0xf0] %vm39, %v38
    %s44 = scalar_lea.vmem %s0, 16
    %v45 = vld [vmem:[%s44] sm:$0xff]
    %46 = vrot.lane.b32.xlu0 %v45, 64
    %v47 = vpop.permute.xlu0 %46
    %vm48 = vcmask 523264
    %s49 = scalar_lea.vmem [#allocation0], 129
    %50 = vst.msk [vmem:[%s49] ss:$8 sm:$0xf] %vm48, %v47
    %s51 = scalar_lea.vmem [#allocation0], 129
    %52 = vst.msk [vmem:[%s51] ss:$8 sm:$0xf0] %vm48, %v47
    %s53 = scalar_lea.vmem %s0, 24
    %v54 = vld [vmem:[%s53] sm:$0xff]
    %55 = vrot.lane.b32.xlu0 %v54, 64
    %v56 = vpop.permute.xlu0 %55
    %vm57 = vcmask 523264
    %s58 = scalar_lea.vmem [#allocation0], 193
    %59 = vst.msk [vmem:[%s58] ss:$8 sm:$0xf] %vm57, %v56
    %s60 = scalar_lea.vmem [#allocation0], 193
    %61 = vst.msk [vmem:[%s60] ss:$8 sm:$0xf0] %vm57, %v56
    %s63 = sshll.u32 1, 2
    %s64 = ssub.s32 %s63, 1
    %v66 = vld [vmem:[#allocation0] sm:%s64]
    %s67 = sshll.u32 1, 2
    %s68 = ssub.s32 %s67, 1
    %69 = vst [vmem:[%s1] sm:%s68] %v66
    %s70 = scalar_lea.vmem [#allocation0], 8
    %v71 = vld [vmem:[%s70] sm:%s64]
    %s72 = sshll.u32 1, 2
    %s73 = ssub.s32 %s72, 1
    %s74 = scalar_lea.vmem %s1, 2
    %75 = vst [vmem:[%s74] sm:%s73] %v71
    %s76 = scalar_lea.vmem [#allocation0], 16
    %v77 = vld [vmem:[%s76] sm:%s64]
    %s78 = sshll.u32 1, 2
    %s79 = ssub.s32 %s78, 1
    %s80 = smul.addr 2, 2
    %s81 = scalar_lea.vmem %s1, %s80
    %82 = vst [vmem:[%s81] sm:%s79] %v77
    %s83 = scalar_lea.vmem [#allocation0], 24
    %v84 = vld [vmem:[%s83] sm:%s64]
    %s85 = sshll.u32 1, 2
    %s86 = ssub.s32 %s85, 1
    %s87 = smul.addr 2, 3
    %s88 = scalar_lea.vmem %s1, %s87
    %89 = vst [vmem:[%s88] sm:%s86] %v84
    %s90 = scalar_lea.vmem [#allocation0], 32
    %v91 = vld [vmem:[%s90] sm:%s64]
    %s92 = sshll.u32 1, 2
    %s93 = ssub.s32 %s92, 1
    %s94 = smul.addr 2, 4
    %s95 = scalar_lea.vmem %s1, %s94
    %96 = vst [vmem:[%s95] sm:%s93] %v91
    %s97 = scalar_lea.vmem [#allocation0], 40
    %v98 = vld [vmem:[%s97] sm:%s64]
    %s99 = sshll.u32 1, 2
    %s100 = ssub.s32 %s99, 1
    %s101 = smul.addr 2, 5
    %s102 = scalar_lea.vmem %s1, %s101
    %103 = vst [vmem:[%s102] sm:%s100] %v98
    %s104 = scalar_lea.vmem [#allocation0], 48
    %v105 = vld [vmem:[%s104] sm:%s64]
    %s106 = sshll.u32 1, 2
    %s107 = ssub.s32 %s106, 1
    %s108 = smul.addr 2, 6
    %s109 = scalar_lea.vmem %s1, %s108
    %110 = vst [vmem:[%s109] sm:%s107] %v105
    %s111 = scalar_lea.vmem [#allocation0], 56
    %v112 = vld [vmem:[%s111] sm:%s64]
    %s113 = sshll.u32 1, 2
    %s114 = ssub.s32 %s113, 1
    %s115 = smul.addr 2, 7
    %s116 = scalar_lea.vmem %s1, %s115
    %117 = vst [vmem:[%s116] sm:%s114] %v112
    %s118 = scalar_lea.vmem [#allocation0], 64
    %v119 = vld [vmem:[%s118] sm:%s64]
    %s120 = sshll.u32 1, 2
    %s121 = ssub.s32 %s120, 1
    %s122 = smul.addr 2, 8
    %s123 = scalar_lea.vmem %s1, %s122
    %124 = vst [vmem:[%s123] sm:%s121] %v119
    %s125 = scalar_lea.vmem [#allocation0], 72
    %v126 = vld [vmem:[%s125] sm:%s64]
    %s127 = sshll.u32 1, 2
    %s128 = ssub.s32 %s127, 1
    %s129 = smul.addr 2, 9
    %s130 = scalar_lea.vmem %s1, %s129
    %131 = vst [vmem:[%s130] sm:%s128] %v126
    %s132 = scalar_lea.vmem [#allocation0], 80
    %v133 = vld [vmem:[%s132] sm:%s64]
    %s134 = sshll.u32 1, 2
    %s135 = ssub.s32 %s134, 1
    %s136 = smul.addr 2, 10
    %s137 = scalar_lea.vmem %s1, %s136
    %138 = vst [vmem:[%s137] sm:%s135] %v133
    %s139 = scalar_lea.vmem [#allocation0], 88
    %v140 = vld [vmem:[%s139] sm:%s64]
    %s141 = sshll.u32 1, 2
    %s142 = ssub.s32 %s141, 1
    %s143 = smul.addr 2, 11
    %s144 = scalar_lea.vmem %s1, %s143
    %145 = vst [vmem:[%s144] sm:%s142] %v140
    %s146 = scalar_lea.vmem [#allocation0], 96
    %v147 = vld [vmem:[%s146] sm:%s64]
    %s148 = sshll.u32 1, 2
    %s149 = ssub.s32 %s148, 1
    %s150 = smul.addr 2, 12
    %s151 = scalar_lea.vmem %s1, %s150
    %152 = vst [vmem:[%s151] sm:%s149] %v147
    %s153 = scalar_lea.vmem [#allocation0], 104
    %v154 = vld [vmem:[%s153] sm:%s64]
    %s155 = sshll.u32 1, 2
    %s156 = ssub.s32 %s155, 1
    %s157 = smul.addr 2, 13
    %s158 = scalar_lea.vmem %s1, %s157
    %159 = vst [vmem:[%s158] sm:%s156] %v154
    %s160 = scalar_lea.vmem [#allocation0], 112
    %v161 = vld [vmem:[%s160] sm:%s64]
    %s162 = sshll.u32 1, 2
    %s163 = ssub.s32 %s162, 1
    %s164 = smul.addr 2, 14
    %s165 = scalar_lea.vmem %s1, %s164
    %166 = vst [vmem:[%s165] sm:%s163] %v161
    %s167 = scalar_lea.vmem [#allocation0], 120
    %v168 = vld [vmem:[%s167] sm:%s64]
    %s169 = sshll.u32 1, 2
    %s170 = ssub.s32 %s169, 1
    %s171 = smul.addr 2, 15
    %s172 = scalar_lea.vmem %s1, %s171
    %173 = vst [vmem:[%s172] sm:%s170] %v168
    %s174 = scalar_lea.vmem [#allocation0], 128
    %v175 = vld [vmem:[%s174] sm:%s64]
    %s176 = sshll.u32 1, 2
    %s177 = ssub.s32 %s176, 1
    %s178 = smul.addr 2, 16
    %s179 = scalar_lea.vmem %s1, %s178
    %180 = vst [vmem:[%s179] sm:%s177] %v175
    %s181 = scalar_lea.vmem [#allocation0], 136
    %v182 = vld [vmem:[%s181] sm:%s64]
    %s183 = sshll.u32 1, 2
    %s184 = ssub.s32 %s183, 1
    %s185 = smul.addr 2, 17
    %s186 = scalar_lea.vmem %s1, %s185
    %187 = vst [vmem:[%s186] sm:%s184] %v182
    %s188 = scalar_lea.vmem [#allocation0], 144
    %v189 = vld [vmem:[%s188] sm:%s64]
    %s190 = sshll.u32 1, 2
    %s191 = ssub.s32 %s190, 1
    %s192 = smul.addr 2, 18
    %s193 = scalar_lea.vmem %s1, %s192
    %194 = vst [vmem:[%s193] sm:%s191] %v189
    %s195 = scalar_lea.vmem [#allocation0], 152
    %v196 = vld [vmem:[%s195] sm:%s64]
    %s197 = sshll.u32 1, 2
    %s198 = ssub.s32 %s197, 1
    %s199 = smul.addr 2, 19
    %s200 = scalar_lea.vmem %s1, %s199
    %201 = vst [vmem:[%s200] sm:%s198] %v196
    %s202 = scalar_lea.vmem [#allocation0], 160
    %v203 = vld [vmem:[%s202] sm:%s64]
    %s204 = sshll.u32 1, 2
    %s205 = ssub.s32 %s204, 1
    %s206 = smul.addr 2, 20
    %s207 = scalar_lea.vmem %s1, %s206
    %208 = vst [vmem:[%s207] sm:%s205] %v203
    %s209 = scalar_lea.vmem [#allocation0], 168
    %v210 = vld [vmem:[%s209] sm:%s64]
    %s211 = sshll.u32 1, 2
    %s212 = ssub.s32 %s211, 1
    %s213 = smul.addr 2, 21
    %s214 = scalar_lea.vmem %s1, %s213
    %215 = vst [vmem:[%s214] sm:%s212] %v210
    %s216 = scalar_lea.vmem [#allocation0], 176
    %v217 = vld [vmem:[%s216] sm:%s64]
    %s218 = sshll.u32 1, 2
    %s219 = ssub.s32 %s218, 1
    %s220 = smul.addr 2, 22
    %s221 = scalar_lea.vmem %s1, %s220
    %222 = vst [vmem:[%s221] sm:%s219] %v217
    %s223 = scalar_lea.vmem [#allocation0], 184
    %v224 = vld [vmem:[%s223] sm:%s64]
    %s225 = sshll.u32 1, 2
    %s226 = ssub.s32 %s225, 1
    %s227 = smul.addr 2, 23
    %s228 = scalar_lea.vmem %s1, %s227
    %229 = vst [vmem:[%s228] sm:%s226] %v224
    %s230 = scalar_lea.vmem [#allocation0], 192
    %v231 = vld [vmem:[%s230] sm:%s64]
    %s232 = sshll.u32 1, 2
    %s233 = ssub.s32 %s232, 1
    %s234 = smul.addr 2, 24
    %s235 = scalar_lea.vmem %s1, %s234
    %236 = vst [vmem:[%s235] sm:%s233] %v231
    %s237 = scalar_lea.vmem [#allocation0], 200
    %v238 = vld [vmem:[%s237] sm:%s64]
    %s239 = sshll.u32 1, 2
    %s240 = ssub.s32 %s239, 1
    %s241 = smul.addr 2, 25
    %s242 = scalar_lea.vmem %s1, %s241
    %243 = vst [vmem:[%s242] sm:%s240] %v238
    %s244 = scalar_lea.vmem [#allocation0], 208
    %v245 = vld [vmem:[%s244] sm:%s64]
    %s246 = sshll.u32 1, 2
    %s247 = ssub.s32 %s246, 1
    %s248 = smul.addr 2, 26
    %s249 = scalar_lea.vmem %s1, %s248
    %250 = vst [vmem:[%s249] sm:%s247] %v245
    %s251 = scalar_lea.vmem [#allocation0], 216
    %v252 = vld [vmem:[%s251] sm:%s64]
    %s253 = sshll.u32 1, 2
    %s254 = ssub.s32 %s253, 1
    %s255 = smul.addr 2, 27
    %s256 = scalar_lea.vmem %s1, %s255
    %257 = vst [vmem:[%s256] sm:%s254] %v252
    %s258 = scalar_lea.vmem [#allocation0], 224
    %v259 = vld [vmem:[%s258] sm:%s64]
    %s260 = sshll.u32 1, 2
    %s261 = ssub.s32 %s260, 1
    %s262 = smul.addr 2, 28
    %s263 = scalar_lea.vmem %s1, %s262
    %264 = vst [vmem:[%s263] sm:%s261] %v259
    %s265 = scalar_lea.vmem [#allocation0], 232
    %v266 = vld [vmem:[%s265] sm:%s64]
    %s267 = sshll.u32 1, 2
    %s268 = ssub.s32 %s267, 1
    %s269 = smul.addr 2, 29
    %s270 = scalar_lea.vmem %s1, %s269
    %271 = vst [vmem:[%s270] sm:%s268] %v266
    %s272 = scalar_lea.vmem [#allocation0], 240
    %v273 = vld [vmem:[%s272] sm:%s64]
    %s274 = sshll.u32 1, 2
    %s275 = ssub.s32 %s274, 1
    %s276 = smul.addr 2, 30
    %s277 = scalar_lea.vmem %s1, %s276
    %278 = vst [vmem:[%s277] sm:%s275] %v273
    %s279 = scalar_lea.vmem [#allocation0], 248
    %v280 = vld [vmem:[%s279] sm:%s64]
    %s281 = sshll.u32 1, 2
    %s282 = ssub.s32 %s281, 1
    %s283 = smul.addr 2, 31
    %s284 = scalar_lea.vmem %s1, %s283
    %285 = vst [vmem:[%s284] sm:%s282] %v280

// kernel: coattention_forward.3
$region0: #{coattention_forward.3}
  #allocation0 [shape = 'u32[]', space=smem, size = 0x4, offset = 0x4, fixed_abs, tag = 'smem constant byte address 0x4 - core index']
  #allocation1 [shape = 'u32[144,128]{1,0:T(1,128)}', space=vmem, size = 0x12000, scoped, tag = 'internal scratch']
  %s0 = inlined_call_operand.vmem [shape: bf16[2,64,128], index: 0, kind: input, shape index: {}]
  %s1 = inlined_call_operand.vmem [shape: bf16[2,9,32,64], index: 1, kind: input, shape index: {}]
  %s2 = inlined_call_operand.vmem [shape: bf16[9,128], index: 2, kind: input, shape index: {}]
  %s3 = inlined_call_operand.vmem [shape: f32[2,32,128], index: 3, kind: output, shape index: {}]
  %s4 = sld [smem:[#allocation0]]
  $region45: #{coattention_forward.3} parent=0
    _
  %s6 = ssub.s32 1, %s4
  %s7 = scalar_select 0, %s6, %s4
  loop: start=0, step=1, limit=4
  $region2: #{coattention_forward.3} parent=0 // loop_pre_header
    _
  $region3: #{coattention_forward.3} parent=0 // loop_header
    %s9 = sphi 0, %s13
    %p10 = scmp.ge.s32.totalorder %s9, 4
    %s19 = sphi 0, %s21
    %s22 = sphi 0, %s19
    %s23 = sphi 0, %s22
    %s39 = sphi 0, %s23
    %s45 = sphi 0, %s47
    %s48 = sphi 0, %s45
    %s49 = sphi 0, %s48
    %s65 = sphi 0, %s49
    %s69 = sphi 0, %s69
    %s71 = sphi 0, %s69
    %s72 = sphi 0, %s71
    %s86 = sphi 0, %s72
    %s92 = sphi 0, %s94
    %s95 = sphi 0, %s92
    %s96 = sphi 0, %s95
    %s112 = sphi 0, %s96
  $region4: #{coattention_forward.3} parent=0 // loop_header_branch
    %12 = sbr.rel (%p10) target = $region8
  $region5: #{coattention_forward.3} parent=0 // loop_body
    %s14 = ssub.s32 %s9, 1
    %s15 = ssub.s32 %s9, 2
    %s16 = sadd.s32 %s9, 1
    %s17 = ssub.s32 %s9, %s16
    %p18 = scmp.eq.s32.totalorder %s17, 0
    %s20 = sadd.s32 %s19, 1
    %s21 = scalar_select %p18, %s19, %s20
    %p24 = pneg %p18
    %p25 = scmp.eq.s32.totalorder %s9, 1
    %p26 = por %p24, %p25
    %p27 = scmp.ne.s32.totalorder %s19, %s22
    %p28 = scmp.eq.s32.totalorder %s9, 0
    %p29 = por %p27, %p28
    %p30 = scmp.ne.s32.totalorder %s19, %s22
    %p31 = scmp.eq.s32.totalorder %s14, 1
    %p32 = por %p30, %p31
    %p33 = scmp.ne.s32.totalorder %s22, %s23
    %p34 = scmp.eq.s32.totalorder %s14, 0
    %p35 = por %p33, %p34
    %p36 = scmp.ne.s32.totalorder %s22, %s23
    %p37 = scmp.eq.s32.totalorder %s15, 1
    %p38 = por %p36, %p37
    %p40 = scmp.ne.s32.totalorder %s23, %s39
    %p41 = scmp.eq.s32.totalorder %s15, 0
    %p42 = por %p40, %p41
    %s43 = ssub.s32 %s9, %s16
    %p44 = scmp.eq.s32.totalorder %s43, 0
    %s46 = sadd.s32 %s45, 1
    %s47 = scalar_select %p44, %s45, %s46
    %p50 = pneg %p44
    %p51 = scmp.eq.s32.totalorder %s9, 1
    %p52 = por %p50, %p51
    %p53 = scmp.ne.s32.totalorder %s45, %s48
    %p54 = scmp.eq.s32.totalorder %s9, 0
    %p55 = por %p53, %p54
    %p56 = scmp.ne.s32.totalorder %s45, %s48
    %p57 = scmp.eq.s32.totalorder %s14, 1
    %p58 = por %p56, %p57
    %p59 = scmp.ne.s32.totalorder %s48, %s49
    %p60 = scmp.eq.s32.totalorder %s14, 0
    %p61 = por %p59, %p60
    %p62 = scmp.ne.s32.totalorder %s48, %s49
    %p63 = scmp.eq.s32.totalorder %s15, 1
    %p64 = por %p62, %p63
    %p66 = scmp.ne.s32.totalorder %s49, %s65
    %p67 = scmp.eq.s32.totalorder %s15, 0
    %p68 = por %p66, %p67
    %s70 = sadd.s32 %s69, 1
    %p73 = scmp.eq.s32.totalorder %s9, 1
    %p74 = scmp.ne.s32.totalorder %s69, %s71
    %p75 = scmp.eq.s32.totalorder %s9, 0
    %p76 = por %p74, %p75
    %p77 = scmp.ne.s32.totalorder %s69, %s71
    %p78 = scmp.eq.s32.totalorder %s14, 1
    %p79 = por %p77, %p78
    %p80 = scmp.ne.s32.totalorder %s71, %s72
    %p81 = scmp.eq.s32.totalorder %s14, 0
    %p82 = por %p80, %p81
    %p83 = scmp.ne.s32.totalorder %s71, %s72
    %p84 = scmp.eq.s32.totalorder %s15, 1
    %p85 = por %p83, %p84
    %p87 = scmp.ne.s32.totalorder %s72, %s86
    %p88 = scmp.eq.s32.totalorder %s15, 0
    %p89 = por %p87, %p88
    %s90 = ssub.s32 %s9, %s16
    %p91 = scmp.eq.s32.totalorder %s90, 0
    %s93 = sadd.s32 %s92, 1
    %s94 = scalar_select %p91, %s92, %s93
    %p97 = pneg %p91
    %p98 = scmp.eq.s32.totalorder %s9, 1
    %p99 = por %p97, %p98
    %p100 = scmp.ne.s32.totalorder %s92, %s95
    %p101 = scmp.eq.s32.totalorder %s9, 0
    %p102 = por %p100, %p101
    %p103 = scmp.ne.s32.totalorder %s92, %s95
    %p104 = scmp.eq.s32.totalorder %s14, 1
    %p105 = por %p103, %p104
    %p106 = scmp.ne.s32.totalorder %s95, %s96
    %p107 = scmp.eq.s32.totalorder %s14, 0
    %p108 = por %p106, %p107
    %p109 = scmp.ne.s32.totalorder %s95, %s96
    %p110 = scmp.eq.s32.totalorder %s15, 1
    %p111 = por %p109, %p110
    %p113 = scmp.ne.s32.totalorder %s96, %s112
    %p114 = scmp.eq.s32.totalorder %s15, 0
    %p115 = por %p113, %p114
    %p116 = scmp.le.s32.totalorder 1, %s9
    %p117 = scmp.lt.s32.totalorder %s9, 3
    %p118 = pnand %p116, %p117
    %p119 = pneg %p118
    // Predicated region
    $region9: #{coattention_forward.3} parent=5 // pred_check
      _
    $region10: #{coattention_forward.3} parent=5 // pred_check_branch
      %121 = sbr.rel (%p118) target = $region12
    $region11: #{coattention_forward.3} parent=5 // pred_region
      %s122 = ssub.s32 %s9, 1
      // Predicated region
      $region13: #{coattention_forward.3} parent=11 // pred_check
        %p123 = pneg %p82
      $region14: #{coattention_forward.3} parent=11 // pred_check_branch
        %125 = sbr.rel (%p123) target = $region16
      $region15: #{coattention_forward.3} parent=11 // pred_region
        _
      $region16: #{coattention_forward.3} parent=11 // pred_fallthru
        _
    $region12: #{coattention_forward.3} parent=5 // pred_fallthru
      _
    %p126 = scmp.lt.s32.totalorder %s9, 2
    // Predicated region
    $region17: #{coattention_forward.3} parent=5 // pred_check
      %p127 = pneg %p126
    $region18: #{coattention_forward.3} parent=5 // pred_check_branch
      %129 = sbr.rel (%p127) target = $region20
    $region19: #{coattention_forward.3} parent=5 // pred_region
      // Predicated region
      $region21: #{coattention_forward.3} parent=19 // pred_check
        %p130 = pneg %p29
      $region22: #{coattention_forward.3} parent=19 // pred_check_branch
        %132 = sbr.rel (%p130) target = $region24
      $region23: #{coattention_forward.3} parent=19 // pred_region
        %p133 = scmp.lt.s32.totalorder %s9, 1
        %s134 = scalar_select %p133, %s9, 1
        %s135 = smul.addr %s134, 8
        %s136 = smul.addr %s135, 4
        %s137 = scalar_lea.vmem %s0, %s136
      $region24: #{coattention_forward.3} parent=19 // pred_fallthru
        _
      // Predicated region
      $region25: #{coattention_forward.3} parent=19 // pred_check
        %p138 = pneg %p55
      $region26: #{coattention_forward.3} parent=19 // pred_check_branch
        %140 = sbr.rel (%p138) target = $region28
      $region27: #{coattention_forward.3} parent=19 // pred_region
        %p141 = scmp.lt.s32.totalorder %s9, 1
        %s142 = scalar_select %p141, %s9, 1
        %s143 = smul.addr %s142, 36
        %s144 = smul.addr %s143, 4
        %s145 = scalar_lea.vmem %s1, %s144
      $region28: #{coattention_forward.3} parent=19 // pred_fallthru
        _
    $region20: #{coattention_forward.3} parent=5 // pred_fallthru
      _
    %p146 = scmp.le.s32.totalorder 1, %s9
    %p147 = scmp.lt.s32.totalorder %s9, 3
    %p148 = pnand %p146, %p147
    %p149 = pneg %p148
    // Predicated region
    $region29: #{coattention_forward.3} parent=5 // pred_check
      _
    $region30: #{coattention_forward.3} parent=5 // pred_check_branch
      %151 = sbr.rel (%p148) target = $region32
    $region31: #{coattention_forward.3} parent=5 // pred_region
      %s152 = ssub.s32 %s9, 1
      %p153 = scmp.lt.s32.totalorder %s14, 1
      %s154 = scalar_select %p153, %s14, 1
      %s155 = smul.addr %s154, 8
      %s156 = smul.addr %s155, 4
      %s157 = scalar_lea.vmem %s0, %s156
      %p158 = pneg %p35
      %p159 = pneg %p32
      %p160 = scmp.lt.s32.totalorder %s14, 1
      %s161 = scalar_select %p160, %s14, 1
      %s162 = smul.addr %s161, 36
      %s163 = smul.addr %s162, 4
      %s164 = scalar_lea.vmem %s1, %s163
      %p165 = pneg %p61
      %p166 = pneg %p58
      %p167 = pneg %p82
      %p168 = pneg %p79
      %p169 = pneg %p108
      %p170 = pneg %p105
      %p171 = scmp.lt.s32.totalorder %s14, 1
      %s172 = scalar_select %p171, %s14, 1
      %s173 = smul.addr %s172, 4
      %s174 = smul.addr %s173, 8
      %s175 = scalar_lea.vmem %s3, %s174
      %p176 = scmp.lt.s32.totalorder %s14, 1
      %s177 = scalar_select %p176, %s14, 1
      %s178 = smul.addr %s177, 8
      %s179 = smul.addr %s178, 4
      %s180 = scalar_lea.vmem %s0, %s179
      %p181 = scmp.lt.s32.totalorder %s14, 1
      %s182 = scalar_select %p181, %s14, 1
      %s183 = smul.addr %s182, 36
      %s184 = smul.addr %s183, 4
      %s185 = scalar_lea.vmem %s1, %s184
      %p186 = scmp.lt.s32.totalorder %s14, 1
      %s187 = scalar_select %p186, %s14, 1
      %s188 = smul.addr %s187, 4
      %s189 = smul.addr %s188, 8
      %s190 = scalar_lea.vmem %s3, %s189
      %v192 = vld [vmem:[%s180] sm:$0xf]
      %v193 = vld [vmem:[%s180 + $0x4] sm:$0xf]
      %v194 = vld [vmem:[%s180 + $0x8] sm:$0xf]
      %v195 = vld [vmem:[%s180 + $0xc] sm:$0xf]
      %v196 = vld [vmem:[%s180 + $0x10] sm:$0xf]
      %v197 = vld [vmem:[%s180 + $0x14] sm:$0xf]
      %v198 = vld [vmem:[%s180 + $0x18] sm:$0xf]
      %v199 = vld [vmem:[%s180 + $0x1c] sm:$0xf]
      %v200 = vld [vmem:[%s185] sm:$0xf]
      %v201 = vld [vmem:[%s185 + $0x4] sm:$0xf]
      %v202 = vld [vmem:[%s185 + $0x8] sm:$0xf]
      %v203 = vld [vmem:[%s185 + $0xc] sm:$0xf]
      %v204 = vld [vmem:[%s185 + $0x10] sm:$0xf]
      %v205 = vld [vmem:[%s185 + $0x14] sm:$0xf]
      %v206 = vld [vmem:[%s185 + $0x18] sm:$0xf]
      %v207 = vld [vmem:[%s185 + $0x1c] sm:$0xf]
      %v208 = vld [vmem:[%s185 + $0x20] sm:$0xf]
      %v209 = vld [vmem:[%s185 + $0x24] sm:$0xf]
      %v210 = vld [vmem:[%s185 + $0x28] sm:$0xf]
      %v211 = vld [vmem:[%s185 + $0x2c] sm:$0xf]
      %v212 = vld [vmem:[%s185 + $0x30] sm:$0xf]
      %v213 = vld [vmem:[%s185 + $0x34] sm:$0xf]
      %v214 = vld [vmem:[%s185 + $0x38] sm:$0xf]
      %v215 = vld [vmem:[%s185 + $0x3c] sm:$0xf]
      %v216 = vld [vmem:[%s185 + $0x40] sm:$0xf]
      %v217 = vld [vmem:[%s185 + $0x44] sm:$0xf]
      %v218 = vld [vmem:[%s185 + $0x48] sm:$0xf]
      %v219 = vld [vmem:[%s185 + $0x4c] sm:$0xf]
      %v220 = vld [vmem:[%s185 + $0x50] sm:$0xf]
      %v221 = vld [vmem:[%s185 + $0x54] sm:$0xf]
      %v222 = vld [vmem:[%s185 + $0x58] sm:$0xf]
      %v223 = vld [vmem:[%s185 + $0x5c] sm:$0xf]
      %v224 = vld [vmem:[%s185 + $0x60] sm:$0xf]
      %v225 = vld [vmem:[%s185 + $0x64] sm:$0xf]
      %v226 = vld [vmem:[%s185 + $0x68] sm:$0xf]
      %v227 = vld [vmem:[%s185 + $0x6c] sm:$0xf]
      %v228 = vld [vmem:[%s185 + $0x70] sm:$0xf]
      %v229 = vld [vmem:[%s185 + $0x74] sm:$0xf]
      %v230 = vld [vmem:[%s185 + $0x78] sm:$0xf]
      %v231 = vld [vmem:[%s185 + $0x7c] sm:$0xf]
      %v232 = vld [vmem:[%s185 + $0x80] sm:$0xf]
      %v233 = vld [vmem:[%s185 + $0x84] sm:$0xf]
      %v234 = vld [vmem:[%s185 + $0x88] sm:$0xf]
      %v235 = vld [vmem:[%s185 + $0x8c] sm:$0xf]
      %v236 = vld [vmem:[%s2] sm:$0xf]
      %v237 = vld [vmem:[%s2 + $0x4] sm:$0x1]
      %v246 = vunpack.c.l.b16 %v192
      %v247 = vunpack.c.l.b16 %v193
      %v248 = vunpack.c.l.b16 %v194
      %v249 = vunpack.c.l.b16 %v195
      %v250 = vunpack.c.l.b16 %v196
      %v251 = vunpack.c.l.b16 %v197
      %v252 = vunpack.c.l.b16 %v198
      %v253 = vunpack.c.l.b16 %v199
      %v254 = vpack.c.b16 %v247, %v246
      %v255 = vpack.c.b16 %v249, %v248
      %v256 = vpack.c.b16 %v251, %v250
      %v257 = vpack.c.b16 %v253, %v252
      %258 = vrot.lane.b32.xlu0 %v254, 9
      %v259 = vpop.permute.xlu0 %258
      %260 = vrot.lane.b32.xlu0 %v255, 9
      %v261 = vpop.permute.xlu0 %260
      %262 = vrot.lane.b32.xlu0 %v256, 9
      %v263 = vpop.permute.xlu0 %262
      %264 = vrot.lane.b32.xlu0 %v257, 9
      %v265 = vpop.permute.xlu0 %264
      %v275 = vpack.i.b16 %v236, %v236
      %v277 = vlaneseq
      %v278 = vshrl.u32 %v277, 7
      %v279 = vsub.s32 0, %v278
      %v280 = vrot.slane %v275, %v279
      %v281 = vmul.bf16 %v259, %v280
      %v282 = vmul.bf16 %v261, %v280
      %v283 = vmul.bf16 %v263, %v280
      %v284 = vmul.bf16 %v265, %v280
      %285 = vrot.lane.b32.xlu0 %v254, 8
      %v286 = vpop.permute.xlu0 %285
      %287 = vrot.lane.b32.xlu0 %v255, 8
      %v288 = vpop.permute.xlu0 %287
      %289 = vrot.lane.b32.xlu0 %v256, 8
      %v290 = vpop.permute.xlu0 %289
      %291 = vrot.lane.b32.xlu0 %v257, 8
      %v292 = vpop.permute.xlu0 %291
      %v301 = vshrl.u32 %v236, 16
      %v302 = vpack.i.b16 %v301, %v301
      %v304 = vlaneseq
      %v305 = vshrl.u32 %v304, 7
      %v306 = vsub.s32 0, %v305
      %v307 = vrot.slane %v302, %v306
      %v308 = vmul.bf16 %v286, %v307
      %v309 = vmul.bf16 %v288, %v307
      %v310 = vmul.bf16 %v290, %v307
      %v311 = vmul.bf16 %v292, %v307
      %v316 = vunpack.c.l.b16 %v204
      %v317 = vunpack.c.l.b16 %v205
      %v318 = vunpack.c.l.b16 %v206
      %v319 = vunpack.c.l.b16 %v207
      %v320 = vpack.c.b16 %v317, %v316
      %v321 = vpack.c.b16 %v319, %v318
      %vm322 = vcmask 523264
      %v324 = vsel %vm322, %v320, 0
      %v327 = vsel %vm322, %v321, 0
      %329 = vmatprep.subr.bf16.mxu0 0
      %330 = vmatpush1.bf16.msra.mxu0 0
      %331 = vmatprep.subr.bf16.mxu0 0
      %332 = vmatpush1.bf16.msra.mxu0 0
      %333 = vmatprep.subr.bf16.mxu0 0
      %334 = vmatpush1.bf16.msra.mxu0 0
      %335 = vmatprep.subr.bf16.mxu0 0
      %336 = vmatpush1.bf16.msra.mxu0 0
      %337 = vmatprep.subr.bf16.mxu0 0
      %338 = vmatpush1.bf16.msra.mxu0 %v311
      %339 = vmatprep.subr.bf16.mxu0 0
      %340 = vmatpush1.bf16.msra.mxu0 %v310
      %341 = vmatprep.subr.bf16.mxu0 0
      %342 = vmatpush1.bf16.msra.mxu0 %v309
      %343 = vmatprep.subr.bf16.mxu0 0
      %344 = vmatpush1.bf16.msra.mxu0 %v308
      %345 = vmatprep.subr.bf16.mxu0 0
      %346 = vmatpush2.bf16.msra.mxu0 0
      %347 = vmatprep.subr.bf16.mxu0 0
      %348 = vmatpush2.bf16.msra.mxu0 0
      %349 = vmatprep.subr.bf16.mxu0 0
      %350 = vmatpush2.bf16.msra.mxu0 0
      %351 = vmatprep.subr.bf16.mxu0 0
      %352 = vmatpush2.bf16.msra.mxu0 0
      %353 = vmatprep.subr.bf16.mxu0 0
      %354 = vmatpush2.bf16.msra.mxu0 0
      %355 = vmatprep.subr.bf16.mxu0 0
      %356 = vmatpush2.bf16.msra.mxu0 0
      %357 = vmatprep.subr.bf16.mxu0 0
      %358 = vmatpush2.bf16.msra.mxu0 0
      %359 = vmatprep.subr.bf16.mxu0 0
      %360 = vmatpush2.bf16.msra.mxu0 0
      %361 = vmatprep.mubr.bf16.mxu0 0
      %362 = vmatmul.mubr.bf16.gmra.mxu0 %v324
      %v363 = vpop.f32.mrf.mxu0
      %v364 = vadd.f32 0.0, %v363
      %v365 = vpop.f32.mrf.mxu0
      %v366 = vpop.f32.mrf.mxu0
      %v367 = vadd.f32 0.0, %v366
      %v368 = vpop.f32.mrf.mxu0
      %369 = vmatprep.mubr.bf16.mxu0 0
      %370 = vmatmul.mubr.bf16.gmra.mxu0 %v327
      %v371 = vpop.f32.mrf.mxu0
      %v372 = vadd.f32 0.0, %v371
      %v373 = vpop.f32.mrf.mxu0
      %v374 = vpop.f32.mrf.mxu0
      %v375 = vadd.f32 0.0, %v374
      %v376 = vpop.f32.mrf.mxu0
      %377 = vdwg.mxu0
      %v382 = vunpack.c.l.b16 %v200
      %v383 = vunpack.c.l.b16 %v201
      %v384 = vunpack.c.l.b16 %v202
      %v385 = vunpack.c.l.b16 %v203
      %v386 = vpack.c.b16 %v383, %v382
      %v387 = vpack.c.b16 %v385, %v384
      %v389 = vsel %vm322, %v386, 0
      %v392 = vsel %vm322, %v387, 0
      %394 = vmatprep.subr.bf16.mxu0 0
      %395 = vmatpush1.bf16.msra.mxu0 0
      %396 = vmatprep.subr.bf16.mxu0 0
      %397 = vmatpush1.bf16.msra.mxu0 0
      %398 = vmatprep.subr.bf16.mxu0 0
      %399 = vmatpush1.bf16.msra.mxu0 0
      %400 = vmatprep.subr.bf16.mxu0 0
      %401 = vmatpush1.bf16.msra.mxu0 0
      %402 = vmatprep.subr.bf16.mxu0 0
      %403 = vmatpush1.bf16.msra.mxu0 %v284
      %404 = vmatprep.subr.bf16.mxu0 0
      %405 = vmatpush1.bf16.msra.mxu0 %v283
      %406 = vmatprep.subr.bf16.mxu0 0
      %407 = vmatpush1.bf16.msra.mxu0 %v282
      %408 = vmatprep.subr.bf16.mxu0 0
      %409 = vmatpush1.bf16.msra.mxu0 %v281
      %410 = vmatprep.subr.bf16.mxu0 0
      %411 = vmatpush2.bf16.msra.mxu0 0
      %412 = vmatprep.subr.bf16.mxu0 0
      %413 = vmatpush2.bf16.msra.mxu0 0
      %414 = vmatprep.subr.bf16.mxu0 0
      %415 = vmatpush2.bf16.msra.mxu0 0
      %416 = vmatprep.subr.bf16.mxu0 0
      %417 = vmatpush2.bf16.msra.mxu0 0
      %418 = vmatprep.subr.bf16.mxu0 0
      %419 = vmatpush2.bf16.msra.mxu0 0
      %420 = vmatprep.subr.bf16.mxu0 0
      %421 = vmatpush2.bf16.msra.mxu0 0
      %422 = vmatprep.subr.bf16.mxu0 0
      %423 = vmatpush2.bf16.msra.mxu0 0
      %424 = vmatprep.subr.bf16.mxu0 0
      %425 = vmatpush2.bf16.msra.mxu0 0
      %426 = vmatprep.mubr.bf16.mxu0 0
      %427 = vmatmul.mubr.bf16.gmra.mxu0 %v389
      %v428 = vpop.f32.mrf.mxu0
      %v429 = vadd.f32 %v364, %v428
      %v430 = vpop.f32.mrf.mxu0
      %v431 = vpop.f32.mrf.mxu0
      %v432 = vadd.f32 %v367, %v431
      %v433 = vpop.f32.mrf.mxu0
      %434 = vmatprep.mubr.bf16.mxu0 0
      %435 = vmatmul.mubr.bf16.gmra.mxu0 %v392
      %v436 = vpop.f32.mrf.mxu0
      %v437 = vadd.f32 %v372, %v436
      %v438 = vpop.f32.mrf.mxu0
      %v439 = vpop.f32.mrf.mxu0
      %v440 = vadd.f32 %v375, %v439
      %v441 = vpop.f32.mrf.mxu0
      %442 = vdwg.mxu0
      %443 = vrot.lane.b32.xlu0 %v254, 7
      %v444 = vpop.permute.xlu0 %443
      %445 = vrot.lane.b32.xlu0 %v255, 7
      %v446 = vpop.permute.xlu0 %445
      %447 = vrot.lane.b32.xlu0 %v256, 7
      %v448 = vpop.permute.xlu0 %447
      %449 = vrot.lane.b32.xlu0 %v257, 7
      %v450 = vpop.permute.xlu0 %449
      %v459 = vlaneseq
      %v460 = vshrl.u32 %v459, 7
      %v461 = vsub.s32 1, %v460
      %v462 = vrot.slane %v275, %v461
      %v463 = vmul.bf16 %v444, %v462
      %v464 = vmul.bf16 %v446, %v462
      %v465 = vmul.bf16 %v448, %v462
      %v466 = vmul.bf16 %v450, %v462
      %v471 = vunpack.c.l.b16 %v208
      %v472 = vunpack.c.l.b16 %v209
      %v473 = vunpack.c.l.b16 %v210
      %v474 = vunpack.c.l.b16 %v211
      %v475 = vpack.c.b16 %v472, %v471
      %v476 = vpack.c.b16 %v474, %v473
      %v478 = vsel %vm322, %v475, 0
      %v481 = vsel %vm322, %v476, 0
      %483 = vmatprep.subr.bf16.mxu0 0
      %484 = vmatpush1.bf16.msra.mxu0 0
      %485 = vmatprep.subr.bf16.mxu0 0
      %486 = vmatpush1.bf16.msra.mxu0 0
      %487 = vmatprep.subr.bf16.mxu0 0
      %488 = vmatpush1.bf16.msra.mxu0 0
      %489 = vmatprep.subr.bf16.mxu0 0
      %490 = vmatpush1.bf16.msra.mxu0 0
      %491 = vmatprep.subr.bf16.mxu0 0
      %492 = vmatpush1.bf16.msra.mxu0 %v466
      %493 = vmatprep.subr.bf16.mxu0 0
      %494 = vmatpush1.bf16.msra.mxu0 %v465
      %495 = vmatprep.subr.bf16.mxu0 0
      %496 = vmatpush1.bf16.msra.mxu0 %v464
      %497 = vmatprep.subr.bf16.mxu0 0
      %498 = vmatpush1.bf16.msra.mxu0 %v463
      %499 = vmatprep.subr.bf16.mxu0 0
      %500 = vmatpush2.bf16.msra.mxu0 0
      %501 = vmatprep.subr.bf16.mxu0 0
      %502 = vmatpush2.bf16.msra.mxu0 0
      %503 = vmatprep.subr.bf16.mxu0 0
      %504 = vmatpush2.bf16.msra.mxu0 0
      %505 = vmatprep.subr.bf16.mxu0 0
      %506 = vmatpush2.bf16.msra.mxu0 0
      %507 = vmatprep.subr.bf16.mxu0 0
      %508 = vmatpush2.bf16.msra.mxu0 0
      %509 = vmatprep.subr.bf16.mxu0 0
      %510 = vmatpush2.bf16.msra.mxu0 0
      %511 = vmatprep.subr.bf16.mxu0 0
      %512 = vmatpush2.bf16.msra.mxu0 0
      %513 = vmatprep.subr.bf16.mxu0 0
      %514 = vmatpush2.bf16.msra.mxu0 0
      %515 = vmatprep.mubr.bf16.mxu0 0
      %516 = vmatmul.mubr.bf16.gmra.mxu0 %v478
      %v517 = vpop.f32.mrf.mxu0
      %v518 = vadd.f32 0.0, %v517
      %v519 = vpop.f32.mrf.mxu0
      %v520 = vpop.f32.mrf.mxu0
      %v521 = vadd.f32 0.0, %v520
      %v522 = vpop.f32.mrf.mxu0
      %523 = vmatprep.mubr.bf16.mxu0 0
      %524 = vmatmul.mubr.bf16.gmra.mxu0 %v481
      %v525 = vpop.f32.mrf.mxu0
      %v526 = vadd.f32 0.0, %v525
      %v527 = vpop.f32.mrf.mxu0
      %v528 = vpop.f32.mrf.mxu0
      %v529 = vadd.f32 0.0, %v528
      %v530 = vpop.f32.mrf.mxu0
      %531 = vdwg.mxu0
      %v532 = vadd.f32 %v429, %v518
      %v533 = vadd.f32 %v432, %v521
      %v534 = vadd.f32 %v437, %v526
      %v535 = vadd.f32 %v440, %v529
      %536 = vrot.lane.b32.xlu0 %v254, 1
      %v537 = vpop.permute.xlu0 %536
      %538 = vrot.lane.b32.xlu0 %v255, 1
      %v539 = vpop.permute.xlu0 %538
      %540 = vrot.lane.b32.xlu0 %v256, 1
      %v541 = vpop.permute.xlu0 %540
      %542 = vrot.lane.b32.xlu0 %v257, 1
      %v543 = vpop.permute.xlu0 %542
      %v552 = vlaneseq
      %v553 = vshrl.u32 %v552, 7
      %v554 = vsub.s32 1, %v553
      %v555 = vrot.slane %v302, %v554
      %v556 = vmul.bf16 %v537, %v555
      %v557 = vmul.bf16 %v539, %v555
      %v558 = vmul.bf16 %v541, %v555
      %v559 = vmul.bf16 %v543, %v555
      %v564 = vunpack.c.l.b16 %v212
      %v565 = vunpack.c.l.b16 %v213
      %v566 = vunpack.c.l.b16 %v214
      %v567 = vunpack.c.l.b16 %v215
      %v568 = vpack.c.b16 %v565, %v564
      %v569 = vpack.c.b16 %v567, %v566
      %v571 = vsel %vm322, %v568, 0
      %v574 = vsel %vm322, %v569, 0
      %576 = vmatprep.subr.bf16.mxu0 0
      %577 = vmatpush1.bf16.msra.mxu0 0
      %578 = vmatprep.subr.bf16.mxu0 0
      %579 = vmatpush1.bf16.msra.mxu0 0
      %580 = vmatprep.subr.bf16.mxu0 0
      %581 = vmatpush1.bf16.msra.mxu0 0
      %582 = vmatprep.subr.bf16.mxu0 0
      %583 = vmatpush1.bf16.msra.mxu0 0
      %584 = vmatprep.subr.bf16.mxu0 0
      %585 = vmatpush1.bf16.msra.mxu0 %v559
      %586 = vmatprep.subr.bf16.mxu0 0
      %587 = vmatpush1.bf16.msra.mxu0 %v558
      %588 = vmatprep.subr.bf16.mxu0 0
      %589 = vmatpush1.bf16.msra.mxu0 %v557
      %590 = vmatprep.subr.bf16.mxu0 0
      %591 = vmatpush1.bf16.msra.mxu0 %v556
      %592 = vmatprep.subr.bf16.mxu0 0
      %593 = vmatpush2.bf16.msra.mxu0 0
      %594 = vmatprep.subr.bf16.mxu0 0
      %595 = vmatpush2.bf16.msra.mxu0 0
      %596 = vmatprep.subr.bf16.mxu0 0
      %597 = vmatpush2.bf16.msra.mxu0 0
      %598 = vmatprep.subr.bf16.mxu0 0
      %599 = vmatpush2.bf16.msra.mxu0 0
      %600 = vmatprep.subr.bf16.mxu0 0
      %601 = vmatpush2.bf16.msra.mxu0 0
      %602 = vmatprep.subr.bf16.mxu0 0
      %603 = vmatpush2.bf16.msra.mxu0 0
      %604 = vmatprep.subr.bf16.mxu0 0
      %605 = vmatpush2.bf16.msra.mxu0 0
      %606 = vmatprep.subr.bf16.mxu0 0
      %607 = vmatpush2.bf16.msra.mxu0 0
      %608 = vmatprep.mubr.bf16.mxu0 0
      %609 = vmatmul.mubr.bf16.gmra.mxu0 %v571
      %v610 = vpop.f32.mrf.mxu0
      %v611 = vadd.f32 0.0, %v610
      %v612 = vpop.f32.mrf.mxu0
      %v613 = vpop.f32.mrf.mxu0
      %v614 = vadd.f32 0.0, %v613
      %v615 = vpop.f32.mrf.mxu0
      %616 = vmatprep.mubr.bf16.mxu0 0
      %617 = vmatmul.mubr.bf16.gmra.mxu0 %v574
      %v618 = vpop.f32.mrf.mxu0
      %v619 = vadd.f32 0.0, %v618
      %v620 = vpop.f32.mrf.mxu0
      %v621 = vpop.f32.mrf.mxu0
      %v622 = vadd.f32 0.0, %v621
      %v623 = vpop.f32.mrf.mxu0
      %624 = vdwg.mxu0
      %v625 = vadd.f32 %v532, %v611
      %v626 = vadd.f32 %v533, %v614
      %v627 = vadd.f32 %v534, %v619
      %v628 = vadd.f32 %v535, %v622
      %v629 = vlaneseq
      %v630 = vshrl.u32 %v629, 7
      %v631 = vsub.s32 2, %v630
      %v632 = vrot.slane %v275, %v631
      %v634 = vunpack.c.l.b16 %v632
      %v635 = vpack.c.b16 %v634, %v634
      %v637 = vmul.bf16 %v192, %v635
      %v638 = vmul.bf16 %v193, %v635
      %v639 = vmul.bf16 %v194, %v635
      %v640 = vmul.bf16 %v195, %v635
      %v641 = vmul.bf16 %v196, %v635
      %v642 = vmul.bf16 %v197, %v635
      %v643 = vmul.bf16 %v198, %v635
      %v644 = vmul.bf16 %v199, %v635
      %v649 = vunpack.c.l.b16 %v216
      %v650 = vunpack.c.l.b16 %v217
      %v651 = vunpack.c.l.b16 %v218
      %v652 = vunpack.c.l.b16 %v219
      %v653 = vpack.c.b16 %v650, %v649
      %v654 = vpack.c.b16 %v652, %v651
      %v663 = vunpack.c.l.b16 %v637
      %v664 = vunpack.c.l.b16 %v638
      %v665 = vunpack.c.l.b16 %v639
      %v666 = vunpack.c.l.b16 %v640
      %v667 = vunpack.c.l.b16 %v641
      %v668 = vunpack.c.l.b16 %v642
      %v669 = vunpack.c.l.b16 %v643
      %v670 = vunpack.c.l.b16 %v644
      %v671 = vpack.c.b16 %v664, %v663
      %v672 = vpack.c.b16 %v666, %v665
      %v673 = vpack.c.b16 %v668, %v667
      %v674 = vpack.c.b16 %v670, %v669
      %v680 = vsel %vm322, %v653, 0
      %v683 = vsel %vm322, %v654, 0
      %685 = vmatprep.subr.bf16.mxu0 0
      %686 = vmatpush1.bf16.msra.mxu0 0
      %687 = vmatprep.subr.bf16.mxu0 0
      %688 = vmatpush1.bf16.msra.mxu0 0
      %689 = vmatprep.subr.bf16.mxu0 0
      %690 = vmatpush1.bf16.msra.mxu0 0
      %691 = vmatprep.subr.bf16.mxu0 0
      %692 = vmatpush1.bf16.msra.mxu0 0
      %693 = vmatprep.subr.bf16.mxu0 0
      %694 = vmatpush1.bf16.msra.mxu0 %v674
      %695 = vmatprep.subr.bf16.mxu0 0
      %696 = vmatpush1.bf16.msra.mxu0 %v673
      %697 = vmatprep.subr.bf16.mxu0 0
      %698 = vmatpush1.bf16.msra.mxu0 %v672
      %699 = vmatprep.subr.bf16.mxu0 0
      %700 = vmatpush1.bf16.msra.mxu0 %v671
      %701 = vmatprep.subr.bf16.mxu0 0
      %702 = vmatpush2.bf16.msra.mxu0 0
      %703 = vmatprep.subr.bf16.mxu0 0
      %704 = vmatpush2.bf16.msra.mxu0 0
      %705 = vmatprep.subr.bf16.mxu0 0
      %706 = vmatpush2.bf16.msra.mxu0 0
      %707 = vmatprep.subr.bf16.mxu0 0
      %708 = vmatpush2.bf16.msra.mxu0 0
      %709 = vmatprep.subr.bf16.mxu0 0
      %710 = vmatpush2.bf16.msra.mxu0 0
      %711 = vmatprep.subr.bf16.mxu0 0
      %712 = vmatpush2.bf16.msra.mxu0 0
      %713 = vmatprep.subr.bf16.mxu0 0
      %714 = vmatpush2.bf16.msra.mxu0 0
      %715 = vmatprep.subr.bf16.mxu0 0
      %716 = vmatpush2.bf16.msra.mxu0 0
      %717 = vmatprep.mubr.bf16.mxu0 0
      %718 = vmatmul.mubr.bf16.gmra.mxu0 %v680
      %v719 = vpop.f32.mrf.mxu0
      %v720 = vadd.f32 0.0, %v719
      %v721 = vpop.f32.mrf.mxu0
      %v722 = vpop.f32.mrf.mxu0
      %v723 = vadd.f32 0.0, %v722
      %v724 = vpop.f32.mrf.mxu0
      %725 = vmatprep.mubr.bf16.mxu0 0
      %726 = vmatmul.mubr.bf16.gmra.mxu0 %v683
      %v727 = vpop.f32.mrf.mxu0
      %v728 = vadd.f32 0.0, %v727
      %v729 = vpop.f32.mrf.mxu0
      %v730 = vpop.f32.mrf.mxu0
      %v731 = vadd.f32 0.0, %v730
      %v732 = vpop.f32.mrf.mxu0
      %733 = vdwg.mxu0
      %v734 = vadd.f32 %v625, %v720
      %v735 = vadd.f32 %v626, %v723
      %v736 = vadd.f32 %v627, %v728
      %v737 = vadd.f32 %v628, %v731
      %738 = vrot.lane.b32.xlu0 %v254, 127
      %v739 = vpop.permute.xlu0 %738
      %740 = vrot.lane.b32.xlu0 %v255, 127
      %v741 = vpop.permute.xlu0 %740
      %742 = vrot.lane.b32.xlu0 %v256, 127
      %v743 = vpop.permute.xlu0 %742
      %744 = vrot.lane.b32.xlu0 %v257, 127
      %v745 = vpop.permute.xlu0 %744
      %v754 = vlaneseq
      %v755 = vshrl.u32 %v754, 7
      %v756 = vsub.s32 2, %v755
      %v757 = vrot.slane %v302, %v756
      %v758 = vmul.bf16 %v739, %v757
      %v759 = vmul.bf16 %v741, %v757
      %v760 = vmul.bf16 %v743, %v757
      %v761 = vmul.bf16 %v745, %v757
      %v766 = vunpack.c.l.b16 %v220
      %v767 = vunpack.c.l.b16 %v221
      %v768 = vunpack.c.l.b16 %v222
      %v769 = vunpack.c.l.b16 %v223
      %v770 = vpack.c.b16 %v767, %v766
      %v771 = vpack.c.b16 %v769, %v768
      %v773 = vsel %vm322, %v770, 0
      %v776 = vsel %vm322, %v771, 0
      %778 = vmatprep.subr.bf16.mxu0 0
      %779 = vmatpush1.bf16.msra.mxu0 0
      %780 = vmatprep.subr.bf16.mxu0 0
      %781 = vmatpush1.bf16.msra.mxu0 0
      %782 = vmatprep.subr.bf16.mxu0 0
      %783 = vmatpush1.bf16.msra.mxu0 0
      %784 = vmatprep.subr.bf16.mxu0 0
      %785 = vmatpush1.bf16.msra.mxu0 0
      %786 = vmatprep.subr.bf16.mxu0 0
      %787 = vmatpush1.bf16.msra.mxu0 %v761
      %788 = vmatprep.subr.bf16.mxu0 0
      %789 = vmatpush1.bf16.msra.mxu0 %v760
      %790 = vmatprep.subr.bf16.mxu0 0
      %791 = vmatpush1.bf16.msra.mxu0 %v759
      %792 = vmatprep.subr.bf16.mxu0 0
      %793 = vmatpush1.bf16.msra.mxu0 %v758
      %794 = vmatprep.subr.bf16.mxu0 0
      %795 = vmatpush2.bf16.msra.mxu0 0
      %796 = vmatprep.subr.bf16.mxu0 0
      %797 = vmatpush2.bf16.msra.mxu0 0
      %798 = vmatprep.subr.bf16.mxu0 0
      %799 = vmatpush2.bf16.msra.mxu0 0
      %800 = vmatprep.subr.bf16.mxu0 0
      %801 = vmatpush2.bf16.msra.mxu0 0
      %802 = vmatprep.subr.bf16.mxu0 0
      %803 = vmatpush2.bf16.msra.mxu0 0
      %804 = vmatprep.subr.bf16.mxu0 0
      %805 = vmatpush2.bf16.msra.mxu0 0
      %806 = vmatprep.subr.bf16.mxu0 0
      %807 = vmatpush2.bf16.msra.mxu0 0
      %808 = vmatprep.subr.bf16.mxu0 0
      %809 = vmatpush2.bf16.msra.mxu0 0
      %810 = vmatprep.mubr.bf16.mxu0 0
      %811 = vmatmul.mubr.bf16.gmra.mxu0 %v773
      %v812 = vpop.f32.mrf.mxu0
      %v813 = vadd.f32 0.0, %v812
      %v814 = vpop.f32.mrf.mxu0
      %v815 = vpop.f32.mrf.mxu0
      %v816 = vadd.f32 0.0, %v815
      %v817 = vpop.f32.mrf.mxu0
      %818 = vmatprep.mubr.bf16.mxu0 0
      %819 = vmatmul.mubr.bf16.gmra.mxu0 %v776
      %v820 = vpop.f32.mrf.mxu0
      %v821 = vadd.f32 0.0, %v820
      %v822 = vpop.f32.mrf.mxu0
      %v823 = vpop.f32.mrf.mxu0
      %v824 = vadd.f32 0.0, %v823
      %v825 = vpop.f32.mrf.mxu0
      %826 = vdwg.mxu0
      %v827 = vadd.f32 %v734, %v813
      %v828 = vadd.f32 %v735, %v816
      %v829 = vadd.f32 %v736, %v821
      %v830 = vadd.f32 %v737, %v824
      %831 = vrot.lane.b32.xlu0 %v254, 121
      %v832 = vpop.permute.xlu0 %831
      %833 = vrot.lane.b32.xlu0 %v255, 121
      %v834 = vpop.permute.xlu0 %833
      %835 = vrot.lane.b32.xlu0 %v256, 121
      %v836 = vpop.permute.xlu0 %835
      %837 = vrot.lane.b32.xlu0 %v257, 121
      %v838 = vpop.permute.xlu0 %837
      %v847 = vlaneseq
      %v848 = vshrl.u32 %v847, 7
      %v849 = vsub.s32 3, %v848
      %v850 = vrot.slane %v275, %v849
      %v851 = vmul.bf16 %v832, %v850
      %v852 = vmul.bf16 %v834, %v850
      %v853 = vmul.bf16 %v836, %v850
      %v854 = vmul.bf16 %v838, %v850
      %v859 = vunpack.c.l.b16 %v224
      %v860 = vunpack.c.l.b16 %v225
      %v861 = vunpack.c.l.b16 %v226
      %v862 = vunpack.c.l.b16 %v227
      %v863 = vpack.c.b16 %v860, %v859
      %v864 = vpack.c.b16 %v862, %v861
      %v866 = vsel %vm322, %v863, 0
      %v869 = vsel %vm322, %v864, 0
      %871 = vmatprep.subr.bf16.mxu0 0
      %872 = vmatpush1.bf16.msra.mxu0 0
      %873 = vmatprep.subr.bf16.mxu0 0
      %874 = vmatpush1.bf16.msra.mxu0 0
      %875 = vmatprep.subr.bf16.mxu0 0
      %876 = vmatpush1.bf16.msra.mxu0 0
      %877 = vmatprep.subr.bf16.mxu0 0
      %878 = vmatpush1.bf16.msra.mxu0 0
      %879 = vmatprep.subr.bf16.mxu0 0
      %880 = vmatpush1.bf16.msra.mxu0 %v854
      %881 = vmatprep.subr.bf16.mxu0 0
      %882 = vmatpush1.bf16.msra.mxu0 %v853
      %883 = vmatprep.subr.bf16.mxu0 0
      %884 = vmatpush1.bf16.msra.mxu0 %v852
      %885 = vmatprep.subr.bf16.mxu0 0
      %886 = vmatpush1.bf16.msra.mxu0 %v851
      %887 = vmatprep.subr.bf16.mxu0 0
      %888 = vmatpush2.bf16.msra.mxu0 0
      %889 = vmatprep.subr.bf16.mxu0 0
      %890 = vmatpush2.bf16.msra.mxu0 0
      %891 = vmatprep.subr.bf16.mxu0 0
      %892 = vmatpush2.bf16.msra.mxu0 0
      %893 = vmatprep.subr.bf16.mxu0 0
      %894 = vmatpush2.bf16.msra.mxu0 0
      %895 = vmatprep.subr.bf16.mxu0 0
      %896 = vmatpush2.bf16.msra.mxu0 0
      %897 = vmatprep.subr.bf16.mxu0 0
      %898 = vmatpush2.bf16.msra.mxu0 0
      %899 = vmatprep.subr.bf16.mxu0 0
      %900 = vmatpush2.bf16.msra.mxu0 0
      %901 = vmatprep.subr.bf16.mxu0 0
      %902 = vmatpush2.bf16.msra.mxu0 0
      %903 = vmatprep.mubr.bf16.mxu0 0
      %904 = vmatmul.mubr.bf16.gmra.mxu0 %v866
      %v905 = vpop.f32.mrf.mxu0
      %v906 = vadd.f32 0.0, %v905
      %v907 = vpop.f32.mrf.mxu0
      %v908 = vpop.f32.mrf.mxu0
      %v909 = vadd.f32 0.0, %v908
      %v910 = vpop.f32.mrf.mxu0
      %911 = vmatprep.mubr.bf16.mxu0 0
      %912 = vmatmul.mubr.bf16.gmra.mxu0 %v869
      %v913 = vpop.f32.mrf.mxu0
      %v914 = vadd.f32 0.0, %v913
      %v915 = vpop.f32.mrf.mxu0
      %v916 = vpop.f32.mrf.mxu0
      %v917 = vadd.f32 0.0, %v916
      %v918 = vpop.f32.mrf.mxu0
      %919 = vdwg.mxu0
      %v920 = vadd.f32 %v827, %v906
      %v921 = vadd.f32 %v828, %v909
      %v922 = vadd.f32 %v829, %v914
      %v923 = vadd.f32 %v830, %v917
      %924 = vrot.lane.b32.xlu0 %v254, 120
      %v925 = vpop.permute.xlu0 %924
      %926 = vrot.lane.b32.xlu0 %v255, 120
      %v927 = vpop.permute.xlu0 %926
      %928 = vrot.lane.b32.xlu0 %v256, 120
      %v929 = vpop.permute.xlu0 %928
      %930 = vrot.lane.b32.xlu0 %v257, 120
      %v931 = vpop.permute.xlu0 %930
      %v940 = vlaneseq
      %v941 = vshrl.u32 %v940, 7
      %v942 = vsub.s32 3, %v941
      %v943 = vrot.slane %v302, %v942
      %v944 = vmul.bf16 %v925, %v943
      %v945 = vmul.bf16 %v927, %v943
      %v946 = vmul.bf16 %v929, %v943
      %v947 = vmul.bf16 %v931, %v943
      %v952 = vunpack.c.l.b16 %v228
      %v953 = vunpack.c.l.b16 %v229
      %v954 = vunpack.c.l.b16 %v230
      %v955 = vunpack.c.l.b16 %v231
      %v956 = vpack.c.b16 %v953, %v952
      %v957 = vpack.c.b16 %v955, %v954
      %v959 = vsel %vm322, %v956, 0
      %v962 = vsel %vm322, %v957, 0
      %964 = vmatprep.subr.bf16.mxu0 0
      %965 = vmatpush1.bf16.msra.mxu0 0
      %966 = vmatprep.subr.bf16.mxu0 0
      %967 = vmatpush1.bf16.msra.mxu0 0
      %968 = vmatprep.subr.bf16.mxu0 0
      %969 = vmatpush1.bf16.msra.mxu0 0
      %970 = vmatprep.subr.bf16.mxu0 0
      %971 = vmatpush1.bf16.msra.mxu0 0
      %972 = vmatprep.subr.bf16.mxu0 0
      %973 = vmatpush1.bf16.msra.mxu0 %v947
      %974 = vmatprep.subr.bf16.mxu0 0
      %975 = vmatpush1.bf16.msra.mxu0 %v946
      %976 = vmatprep.subr.bf16.mxu0 0
      %977 = vmatpush1.bf16.msra.mxu0 %v945
      %978 = vmatprep.subr.bf16.mxu0 0
      %979 = vmatpush1.bf16.msra.mxu0 %v944
      %980 = vmatprep.subr.bf16.mxu0 0
      %981 = vmatpush2.bf16.msra.mxu0 0
      %982 = vmatprep.subr.bf16.mxu0 0
      %983 = vmatpush2.bf16.msra.mxu0 0
      %984 = vmatprep.subr.bf16.mxu0 0
      %985 = vmatpush2.bf16.msra.mxu0 0
      %986 = vmatprep.subr.bf16.mxu0 0
      %987 = vmatpush2.bf16.msra.mxu0 0
      %988 = vmatprep.subr.bf16.mxu0 0
      %989 = vmatpush2.bf16.msra.mxu0 0
      %990 = vmatprep.subr.bf16.mxu0 0
      %991 = vmatpush2.bf16.msra.mxu0 0
      %992 = vmatprep.subr.bf16.mxu0 0
      %993 = vmatpush2.bf16.msra.mxu0 0
      %994 = vmatprep.subr.bf16.mxu0 0
      %995 = vmatpush2.bf16.msra.mxu0 0
      %996 = vmatprep.mubr.bf16.mxu0 0
      %997 = vmatmul.mubr.bf16.gmra.mxu0 %v959
      %v998 = vpop.f32.mrf.mxu0
      %v999 = vadd.f32 0.0, %v998
      %v1000 = vpop.f32.mrf.mxu0
      %v1001 = vpop.f32.mrf.mxu0
      %v1002 = vadd.f32 0.0, %v1001
      %v1003 = vpop.f32.mrf.mxu0
      %1004 = vmatprep.mubr.bf16.mxu0 0
      %1005 = vmatmul.mubr.bf16.gmra.mxu0 %v962
      %v1006 = vpop.f32.mrf.mxu0
      %v1007 = vadd.f32 0.0, %v1006
      %v1008 = vpop.f32.mrf.mxu0
      %v1009 = vpop.f32.mrf.mxu0
      %v1010 = vadd.f32 0.0, %v1009
      %v1011 = vpop.f32.mrf.mxu0
      %1012 = vdwg.mxu0
      %v1013 = vadd.f32 %v920, %v999
      %v1014 = vadd.f32 %v921, %v1002
      %v1015 = vadd.f32 %v922, %v1007
      %v1016 = vadd.f32 %v923, %v1010
      %1017 = vrot.lane.b32.xlu0 %v254, 119
      %v1018 = vpop.permute.xlu0 %1017
      %1019 = vrot.lane.b32.xlu0 %v255, 119
      %v1020 = vpop.permute.xlu0 %1019
      %1021 = vrot.lane.b32.xlu0 %v256, 119
      %v1022 = vpop.permute.xlu0 %1021
      %1023 = vrot.lane.b32.xlu0 %v257, 119
      %v1024 = vpop.permute.xlu0 %1023
      %v1034 = vpack.i.b16 %v237, %v237
      %v1036 = vlaneseq
      %v1037 = vshrl.u32 %v1036, 7
      %v1038 = vsub.s32 0, %v1037
      %v1039 = vrot.slane %v1034, %v1038
      %v1040 = vmul.bf16 %v1018, %v1039
      %v1041 = vmul.bf16 %v1020, %v1039
      %v1042 = vmul.bf16 %v1022, %v1039
      %v1043 = vmul.bf16 %v1024, %v1039
      %v1048 = vunpack.c.l.b16 %v232
      %v1049 = vunpack.c.l.b16 %v233
      %v1050 = vunpack.c.l.b16 %v234
      %v1051 = vunpack.c.l.b16 %v235
      %v1052 = vpack.c.b16 %v1049, %v1048
      %v1053 = vpack.c.b16 %v1051, %v1050
      %v1055 = vsel %vm322, %v1052, 0
      %v1058 = vsel %vm322, %v1053, 0
      %1060 = vmatprep.subr.bf16.mxu0 0
      %1061 = vmatpush1.bf16.msra.mxu0 0
      %1062 = vmatprep.subr.bf16.mxu0 0
      %1063 = vmatpush1.bf16.msra.mxu0 0
      %1064 = vmatprep.subr.bf16.mxu0 0
      %1065 = vmatpush1.bf16.msra.mxu0 0
      %1066 = vmatprep.subr.bf16.mxu0 0
      %1067 = vmatpush1.bf16.msra.mxu0 0
      %1068 = vmatprep.subr.bf16.mxu0 0
      %1069 = vmatpush1.bf16.msra.mxu0 %v1043
      %1070 = vmatprep.subr.bf16.mxu0 0
      %1071 = vmatpush1.bf16.msra.mxu0 %v1042
      %1072 = vmatprep.subr.bf16.mxu0 0
      %1073 = vmatpush1.bf16.msra.mxu0 %v1041
      %1074 = vmatprep.subr.bf16.mxu0 0
      %1075 = vmatpush1.bf16.msra.mxu0 %v1040
      %1076 = vmatprep.subr.bf16.mxu0 0
      %1077 = vmatpush2.bf16.msra.mxu0 0
      %1078 = vmatprep.subr.bf16.mxu0 0
      %1079 = vmatpush2.bf16.msra.mxu0 0
      %1080 = vmatprep.subr.bf16.mxu0 0
      %1081 = vmatpush2.bf16.msra.mxu0 0
      %1082 = vmatprep.subr.bf16.mxu0 0
      %1083 = vmatpush2.bf16.msra.mxu0 0
      %1084 = vmatprep.subr.bf16.mxu0 0
      %1085 = vmatpush2.bf16.msra.mxu0 0
      %1086 = vmatprep.subr.bf16.mxu0 0
      %1087 = vmatpush2.bf16.msra.mxu0 0
      %1088 = vmatprep.subr.bf16.mxu0 0
      %1089 = vmatpush2.bf16.msra.mxu0 0
      %1090 = vmatprep.subr.bf16.mxu0 0
      %1091 = vmatpush2.bf16.msra.mxu0 0
      %1092 = vmatprep.mubr.bf16.mxu0 0
      %1093 = vmatmul.mubr.bf16.gmra.mxu0 %v1055
      %v1094 = vpop.f32.mrf.mxu0
      %v1095 = vadd.f32 0.0, %v1094
      %v1096 = vpop.f32.mrf.mxu0
      %v1097 = vpop.f32.mrf.mxu0
      %v1098 = vadd.f32 0.0, %v1097
      %v1099 = vpop.f32.mrf.mxu0
      %1100 = vmatprep.mubr.bf16.mxu0 0
      %1101 = vmatmul.mubr.bf16.gmra.mxu0 %v1058
      %v1102 = vpop.f32.mrf.mxu0
      %v1103 = vadd.f32 0.0, %v1102
      %v1104 = vpop.f32.mrf.mxu0
      %v1105 = vpop.f32.mrf.mxu0
      %v1106 = vadd.f32 0.0, %v1105
      %v1107 = vpop.f32.mrf.mxu0
      %1108 = vdwg.mxu0
      %v1109 = vadd.f32 %v1013, %v1095
      %v1110 = vadd.f32 %v1014, %v1098
      %v1111 = vadd.f32 %v1015, %v1103
      %v1112 = vadd.f32 %v1016, %v1106
      %1113 = vst [vmem:[%s190] sm:$0xff] %v1109
      %1114 = vst [vmem:[%s190 + $0x8] sm:$0xff] %v1110
      %1115 = vst [vmem:[%s190 + $0x10] sm:$0xff] %v1111
      %1116 = vst [vmem:[%s190 + $0x18] sm:$0xff] %v1112
      %p1117 = scmp.lt.s32.totalorder %s14, 1
      %s1118 = scalar_select %p1117, %s14, 1
      %s1119 = smul.addr %s1118, 4
      %s1120 = smul.addr %s1119, 8
      %s1121 = scalar_lea.vmem %s3, %s1120
      // Predicated region
      $region33: #{coattention_forward.3} parent=31 // pred_check
        %p1122 = pneg %p105
      $region34: #{coattention_forward.3} parent=31 // pred_check_branch
        %1124 = sbr.rel (%p1122) target = $region36
      $region35: #{coattention_forward.3} parent=31 // pred_region
        _
      $region36: #{coattention_forward.3} parent=31 // pred_fallthru
        _
    $region32: #{coattention_forward.3} parent=5 // pred_fallthru
      _
    %p1125 = scmp.le.s32.totalorder 2, %s9
    // Predicated region
    $region37: #{coattention_forward.3} parent=5 // pred_check
      %p1126 = pneg %p1125
    $region38: #{coattention_forward.3} parent=5 // pred_check_branch
      %1128 = sbr.rel (%p1126) target = $region40
    $region39: #{coattention_forward.3} parent=5 // pred_region
      %s1129 = ssub.s32 %s9, 2
      // Predicated region
      $region41: #{coattention_forward.3} parent=39 // pred_check
        %p1130 = pneg %p111
      $region42: #{coattention_forward.3} parent=39 // pred_check_branch
        %1132 = sbr.rel (%p1130) target = $region44
      $region43: #{coattention_forward.3} parent=39 // pred_region
        %p1133 = scmp.lt.s32.totalorder %s15, 1
        %s1134 = scalar_select %p1133, %s15, 1
        %s1135 = smul.addr %s1134, 4
        %s1136 = smul.addr %s1135, 8
        %s1137 = scalar_lea.vmem %s3, %s1136
      $region44: #{coattention_forward.3} parent=39 // pred_fallthru
        _
    $region40: #{coattention_forward.3} parent=5 // pred_fallthru
      _
  $region6: #{coattention_forward.3} parent=0 // loop_footer
    %s13 = sadd.s32 1, %s9
  $region7: #{coattention_forward.3} parent=0 // loop_footer_branch
    %8 = sbr.rel target = $region3
  $region8: #{coattention_forward.3} parent=0 // loop_exit
    _

// kernel: coattention_forward.2
$region0: #{coattention_forward.2}
  #allocation0 [shape = 'u32[]', space=smem, size = 0x4, offset = 0x4, fixed_abs, tag = 'smem constant byte address 0x4 - core index']
  #allocation1 [shape = 'u32[144,128]{1,0:T(1,128)}', space=vmem, size = 0x12000, scoped, tag = 'internal scratch']
  %s0 = inlined_call_operand.vmem [shape: f32[32,128], index: 0, kind: input, shape index: {}]
  %s1 = inlined_call_operand.vmem [shape: f32[32,128], index: 1, kind: input, shape index: {}]
  %s2 = inlined_call_operand.vmem [shape: f32[32,32], index: 2, kind: input, shape index: {}]
  %s3 = inlined_call_operand.vmem [shape: f32[32,1], index: 3, kind: input, shape index: {}]
  %s4 = inlined_call_operand.vmem [shape: bf16[2,64,128], index: 4, kind: output, shape index: {}]
  %s5 = sld [smem:[#allocation0]]
  $region26: #{coattention_forward.2} parent=0
    _
  %s7 = ssub.s32 1, %s5
  %s8 = scalar_select 0, %s7, %s5
  // Predicated region
  $region2: #{coattention_forward.2} parent=0 // pred_check
    _
  $region3: #{coattention_forward.2} parent=0 // pred_check_branch
    %10 = sbr.rel (0) target = $region5
  $region4: #{coattention_forward.2} parent=0 // pred_region
    _
  $region5: #{coattention_forward.2} parent=0 // pred_fallthru
    _
  // Predicated region
  $region6: #{coattention_forward.2} parent=0 // pred_check
    _
  $region7: #{coattention_forward.2} parent=0 // pred_check_branch
    %12 = sbr.rel (0) target = $region9
  $region8: #{coattention_forward.2} parent=0 // pred_region
    _
  $region9: #{coattention_forward.2} parent=0 // pred_fallthru
    _
  // Predicated region
  $region10: #{coattention_forward.2} parent=0 // pred_check
    _
  $region11: #{coattention_forward.2} parent=0 // pred_check_branch
    %14 = sbr.rel (0) target = $region13
  $region12: #{coattention_forward.2} parent=0 // pred_region
    _
  $region13: #{coattention_forward.2} parent=0 // pred_fallthru
    _
  // Predicated region
  $region14: #{coattention_forward.2} parent=0 // pred_check
    _
  $region15: #{coattention_forward.2} parent=0 // pred_check_branch
    %16 = sbr.rel (0) target = $region17
  $region16: #{coattention_forward.2} parent=0 // pred_region
    _
  $region17: #{coattention_forward.2} parent=0 // pred_fallthru
    _
  %v17 = vld [vmem:[%s0] sm:$0xff]
  %v18 = vld [vmem:[%s0 + $0x8] sm:$0xff]
  %v19 = vld [vmem:[%s0 + $0x10] sm:$0xff]
  %v20 = vld [vmem:[%s0 + $0x18] sm:$0xff]
  %v21 = vld [vmem:[%s1] sm:$0xff]
  %v22 = vld [vmem:[%s1 + $0x8] sm:$0xff]
  %v23 = vld [vmem:[%s1 + $0x10] sm:$0xff]
  %v24 = vld [vmem:[%s1 + $0x18] sm:$0xff]
  %v25 = vld [vmem:[%s2] sm:$0xff]
  %v26 = vld [vmem:[%s2 + $0x8] sm:$0xff]
  %v27 = vld [vmem:[%s2 + $0x10] sm:$0xff]
  %v28 = vld [vmem:[%s2 + $0x18] sm:$0xff]
  %v29 = vld [vmem:[%s3] sm:$0xff]
  %v30 = vld [vmem:[%s3 + $0x8] sm:$0xff]
  %v31 = vld [vmem:[%s3 + $0x10] sm:$0xff]
  %v32 = vld [vmem:[%s3 + $0x18] sm:$0xff]
  %vm33 = vcmask 261120
  %v35 = vsel %vm33, %v25, 0
  %v38 = vsel %vm33, %v26, 0
  %v41 = vsel %vm33, %v27, 0
  %v44 = vsel %vm33, %v28, 0
  %46 = vmatprep.subr.mxu0 0.0
  %47 = vmatpush1.msra.mxu0 0.0
  %48 = vmatprep.subr.mxu0 0.0
  %49 = vmatpush1.msra.mxu0 0.0
  %50 = vmatprep.subr.mxu0 0.0
  %51 = vmatpush1.msra.mxu0 0.0
  %52 = vmatprep.subr.mxu0 0.0
  %53 = vmatpush1.msra.mxu0 0.0
  %54 = vmatprep.subr.mxu0 0.0
  %55 = vmatpush1.msra.mxu0 0.0
  %56 = vmatprep.subr.mxu0 0.0
  %57 = vmatpush1.msra.mxu0 0.0
  %58 = vmatprep.subr.mxu0 0.0
  %59 = vmatpush1.msra.mxu0 0.0
  %60 = vmatprep.subr.mxu0 0.0
  %61 = vmatpush1.msra.mxu0 0.0
  %62 = vmatprep.subr.mxu0 0.0
  %63 = vmatpush1.msra.mxu0 0.0
  %64 = vmatprep.subr.mxu0 0.0
  %65 = vmatpush1.msra.mxu0 0.0
  %66 = vmatprep.subr.mxu0 0.0
  %67 = vmatpush1.msra.mxu0 0.0
  %68 = vmatprep.subr.mxu0 0.0
  %69 = vmatpush1.msra.mxu0 0.0
  %70 = vmatprep.subr.mxu0 0.0
  %71 = vmatpush1.msra.mxu0 %v20
  %72 = vmatprep.subr.mxu0 0.0
  %73 = vmatpush1.msra.mxu0 %v19
  %74 = vmatprep.subr.mxu0 0.0
  %75 = vmatpush1.msra.mxu0 %v18
  %76 = vmatprep.subr.mxu0 0.0
  %77 = vmatpush1.msra.mxu0 %v17
  %78 = vmatprep.subr.mxu0 0.0
  %79 = vmatpush2.msra.mxu0 0.0
  %80 = vmatprep.subr.mxu0 0.0
  %81 = vmatpush2.msra.mxu0 0.0
  %82 = vmatprep.subr.mxu0 0.0
  %83 = vmatpush2.msra.mxu0 0.0
  %84 = vmatprep.subr.mxu0 0.0
  %85 = vmatpush2.msra.mxu0 0.0
  %86 = vmatprep.subr.mxu0 0.0
  %87 = vmatpush2.msra.mxu0 0.0
  %88 = vmatprep.subr.mxu0 0.0
  %89 = vmatpush2.msra.mxu0 0.0
  %90 = vmatprep.subr.mxu0 0.0
  %91 = vmatpush2.msra.mxu0 0.0
  %92 = vmatprep.subr.mxu0 0.0
  %93 = vmatpush2.msra.mxu0 0.0
  %94 = vmatprep.subr.mxu0 0.0
  %95 = vmatpush2.msra.mxu0 0.0
  %96 = vmatprep.subr.mxu0 0.0
  %97 = vmatpush2.msra.mxu0 0.0
  %98 = vmatprep.subr.mxu0 0.0
  %99 = vmatpush2.msra.mxu0 0.0
  %100 = vmatprep.subr.mxu0 0.0
  %101 = vmatpush2.msra.mxu0 0.0
  %102 = vmatprep.subr.mxu0 0.0
  %103 = vmatpush2.msra.mxu0 0.0
  %104 = vmatprep.subr.mxu0 0.0
  %105 = vmatpush2.msra.mxu0 0.0
  %106 = vmatprep.subr.mxu0 0.0
  %107 = vmatpush2.msra.mxu0 0.0
  %108 = vmatprep.subr.mxu0 0.0
  %109 = vmatpush2.msra.mxu0 0.0
  %110 = vmatprep.mubr.f32.mxu0 0.0
  %111 = vmatmul.mubr.f32.gmra.mxu0 %v35
  %v112 = vpop.f32.mrf.mxu0
  %v113 = vadd.f32 0.0, %v112
  %v114 = vpop.f32.mrf.mxu0
  %115 = vmatprep.mubr.f32.mxu0 0.0
  %116 = vmatmul.mubr.f32.gmra.mxu0 %v38
  %v117 = vpop.f32.mrf.mxu0
  %v118 = vadd.f32 0.0, %v117
  %v119 = vpop.f32.mrf.mxu0
  %120 = vmatprep.mubr.f32.mxu0 0.0
  %121 = vmatmul.mubr.f32.gmra.mxu0 %v41
  %v122 = vpop.f32.mrf.mxu0
  %v123 = vadd.f32 0.0, %v122
  %v124 = vpop.f32.mrf.mxu0
  %125 = vmatprep.mubr.f32.mxu0 0.0
  %126 = vmatmul.mubr.f32.gmra.mxu0 %v44
  %v127 = vpop.f32.mrf.mxu0
  %v128 = vadd.f32 0.0, %v127
  %v129 = vpop.f32.mrf.mxu0
  %130 = vdwg.mxu0
  %131 = vxpose.xlu0.b32.start [1/16] %v113, 128
  %132 = vxpose.xlu0.b32.cont [2/16] %v118, 128
  %133 = vxpose.xlu0.b32.cont [3/16] %v123, 128
  %134 = vxpose.xlu0.b32.cont [4/16] %v128, 128
  %135 = vxpose.xlu0.b32.cont [5/16] 0.0, 128
  %136 = vxpose.xlu0.b32.cont [6/16] 0.0, 128
  %137 = vxpose.xlu0.b32.cont [7/16] 0.0, 128
  %138 = vxpose.xlu0.b32.cont [8/16] 0.0, 128
  %139 = vxpose.xlu0.b32.cont [9/16] 0.0, 128
  %140 = vxpose.xlu0.b32.cont [10/16] 0.0, 128
  %141 = vxpose.xlu0.b32.cont [11/16] 0.0, 128
  %142 = vxpose.xlu0.b32.cont [12/16] 0.0, 128
  %143 = vxpose.xlu0.b32.cont [13/16] 0.0, 128
  %144 = vxpose.xlu0.b32.cont [14/16] 0.0, 128
  %145 = vxpose.xlu0.b32.cont [15/16] 0.0, 128
  %146 = vxpose.xlu0.b32.end [16/16] 0.0, 128
  %v147 = vpop.trf.xlu0
  %v148 = vpop.trf.xlu0
  %v149 = vpop.trf.xlu0
  %v150 = vpop.trf.xlu0
  %v151 = vpop.trf.xlu0
  %v152 = vpop.trf.xlu0
  %v153 = vpop.trf.xlu0
  %v154 = vpop.trf.xlu0
  %v155 = vpop.trf.xlu0
  %v156 = vpop.trf.xlu0
  %v157 = vpop.trf.xlu0
  %v158 = vpop.trf.xlu0
  %v159 = vpop.trf.xlu0
  %v160 = vpop.trf.xlu0
  %v161 = vpop.trf.xlu0
  %v162 = vpop.trf.xlu0
  %v164 = vsel %vm33, %v147, 0
  %v167 = vsel %vm33, %v148, 0
  %v170 = vsel %vm33, %v149, 0
  %v173 = vsel %vm33, %v150, 0
  %v176 = vsel %vm33, %v151, 0
  %v179 = vsel %vm33, %v152, 0
  %v182 = vsel %vm33, %v153, 0
  %v185 = vsel %vm33, %v154, 0
  %187 = vmatprep.subr.mxu0 0.0
  %188 = vmatpush1.msra.mxu0 0.0
  %189 = vmatprep.subr.mxu0 0.0
  %190 = vmatpush1.msra.mxu0 0.0
  %191 = vmatprep.subr.mxu0 0.0
  %192 = vmatpush1.msra.mxu0 0.0
  %193 = vmatprep.subr.mxu0 0.0
  %194 = vmatpush1.msra.mxu0 0.0
  %195 = vmatprep.subr.mxu0 0.0
  %196 = vmatpush1.msra.mxu0 0.0
  %197 = vmatprep.subr.mxu0 0.0
  %198 = vmatpush1.msra.mxu0 0.0
  %199 = vmatprep.subr.mxu0 0.0
  %200 = vmatpush1.msra.mxu0 0.0
  %201 = vmatprep.subr.mxu0 0.0
  %202 = vmatpush1.msra.mxu0 0.0
  %203 = vmatprep.subr.mxu0 0.0
  %204 = vmatpush1.msra.mxu0 0.0
  %205 = vmatprep.subr.mxu0 0.0
  %206 = vmatpush1.msra.mxu0 0.0
  %207 = vmatprep.subr.mxu0 0.0
  %208 = vmatpush1.msra.mxu0 0.0
  %209 = vmatprep.subr.mxu0 0.0
  %210 = vmatpush1.msra.mxu0 0.0
  %211 = vmatprep.subr.mxu0 0.0
  %212 = vmatpush1.msra.mxu0 %v24
  %213 = vmatprep.subr.mxu0 0.0
  %214 = vmatpush1.msra.mxu0 %v23
  %215 = vmatprep.subr.mxu0 0.0
  %216 = vmatpush1.msra.mxu0 %v22
  %217 = vmatprep.subr.mxu0 0.0
  %218 = vmatpush1.msra.mxu0 %v21
  %219 = vmatprep.subr.mxu0 0.0
  %220 = vmatpush2.msra.mxu0 0.0
  %221 = vmatprep.subr.mxu0 0.0
  %222 = vmatpush2.msra.mxu0 0.0
  %223 = vmatprep.subr.mxu0 0.0
  %224 = vmatpush2.msra.mxu0 0.0
  %225 = vmatprep.subr.mxu0 0.0
  %226 = vmatpush2.msra.mxu0 0.0
  %227 = vmatprep.subr.mxu0 0.0
  %228 = vmatpush2.msra.mxu0 0.0
  %229 = vmatprep.subr.mxu0 0.0
  %230 = vmatpush2.msra.mxu0 0.0
  %231 = vmatprep.subr.mxu0 0.0
  %232 = vmatpush2.msra.mxu0 0.0
  %233 = vmatprep.subr.mxu0 0.0
  %234 = vmatpush2.msra.mxu0 0.0
  %235 = vmatprep.subr.mxu0 0.0
  %236 = vmatpush2.msra.mxu0 0.0
  %237 = vmatprep.subr.mxu0 0.0
  %238 = vmatpush2.msra.mxu0 0.0
  %239 = vmatprep.subr.mxu0 0.0
  %240 = vmatpush2.msra.mxu0 0.0
  %241 = vmatprep.subr.mxu0 0.0
  %242 = vmatpush2.msra.mxu0 0.0
  %243 = vmatprep.subr.mxu0 0.0
  %244 = vmatpush2.msra.mxu0 0.0
  %245 = vmatprep.subr.mxu0 0.0
  %246 = vmatpush2.msra.mxu0 0.0
  %247 = vmatprep.subr.mxu0 0.0
  %248 = vmatpush2.msra.mxu0 0.0
  %249 = vmatprep.subr.mxu0 0.0
  %250 = vmatpush2.msra.mxu0 0.0
  %251 = vmatprep.mubr.f32.mxu0 0.0
  %252 = vmatmul.mubr.f32.gmra.mxu0 %v164
  %v253 = vpop.f32.mrf.mxu0
  %v254 = vadd.f32 0.0, %v253
  %v255 = vpop.f32.mrf.mxu0
  %256 = vmatprep.mubr.f32.mxu0 0.0
  %257 = vmatmul.mubr.f32.gmra.mxu0 %v167
  %v258 = vpop.f32.mrf.mxu0
  %v259 = vadd.f32 0.0, %v258
  %v260 = vpop.f32.mrf.mxu0
  %261 = vmatprep.mubr.f32.mxu0 0.0
  %262 = vmatmul.mubr.f32.gmra.mxu0 %v170
  %v263 = vpop.f32.mrf.mxu0
  %v264 = vadd.f32 0.0, %v263
  %v265 = vpop.f32.mrf.mxu0
  %266 = vmatprep.mubr.f32.mxu0 0.0
  %267 = vmatmul.mubr.f32.gmra.mxu0 %v173
  %v268 = vpop.f32.mrf.mxu0
  %v269 = vadd.f32 0.0, %v268
  %v270 = vpop.f32.mrf.mxu0
  %271 = vmatprep.mubr.f32.mxu0 0.0
  %272 = vmatmul.mubr.f32.gmra.mxu0 %v176
  %v273 = vpop.f32.mrf.mxu0
  %v274 = vadd.f32 0.0, %v273
  %v275 = vpop.f32.mrf.mxu0
  %276 = vmatprep.mubr.f32.mxu0 0.0
  %277 = vmatmul.mubr.f32.gmra.mxu0 %v179
  %v278 = vpop.f32.mrf.mxu0
  %v279 = vadd.f32 0.0, %v278
  %v280 = vpop.f32.mrf.mxu0
  %281 = vmatprep.mubr.f32.mxu0 0.0
  %282 = vmatmul.mubr.f32.gmra.mxu0 %v182
  %v283 = vpop.f32.mrf.mxu0
  %v284 = vadd.f32 0.0, %v283
  %v285 = vpop.f32.mrf.mxu0
  %286 = vmatprep.mubr.f32.mxu0 0.0
  %287 = vmatmul.mubr.f32.gmra.mxu0 %v185
  %v288 = vpop.f32.mrf.mxu0
  %v289 = vadd.f32 0.0, %v288
  %v290 = vpop.f32.mrf.mxu0
  %291 = vdwg.mxu0
  %vm292 = vcmask 523264
  %v293 = vsel %vm292, %v254, -inf
  %v294 = vsel %vm292, %v259, -inf
  %v295 = vsel %vm292, %v264, -inf
  %v296 = vsel %vm292, %v269, -inf
  %v297 = vsel %vm292, %v274, -inf
  %v298 = vmax.f32 %v293, %v297
  %v299 = vsel %vm292, %v279, -inf
  %v300 = vmax.f32 %v294, %v299
  %v301 = vsel %vm292, %v284, -inf
  %v302 = vmax.f32 %v295, %v301
  %v303 = vsel %vm292, %v289, -inf
  %v304 = vmax.f32 %v296, %v303
  %v305 = vmax.f32 %v298, %v300
  %v306 = vmax.f32 %v302, %v304
  %v307 = vmax.f32 %v305, %v306
  %v308 = vrot.slane %v307, 4
  %v309 = vmax.f32 %v307, %v308
  %v310 = vrot.slane %v309, 2
  %v311 = vmax.f32 %v309, %v310
  %v312 = vrot.slane %v311, 1
  %v313 = vmax.f32 %v311, %v312
  %v314 = vsub.f32 %v254, %v313
  %v315 = vsub.f32 %v259, %v313
  %v316 = vsub.f32 %v264, %v313
  %v317 = vsub.f32 %v269, %v313
  %v318 = vsub.f32 %v274, %v313
  %v319 = vsub.f32 %v279, %v313
  %v320 = vsub.f32 %v284, %v313
  %v321 = vsub.f32 %v289, %v313
  %v322 = vmul.f32 %v314, 1.442695
  %v323 = vpow.pop %v322
  %v324 = vmul.f32 %v315, 1.442695
  %v325 = vpow.pop %v324
  %v326 = vmul.f32 %v316, 1.442695
  %v327 = vpow.pop %v326
  %v328 = vmul.f32 %v317, 1.442695
  %v329 = vpow.pop %v328
  %v330 = vmul.f32 %v318, 1.442695
  %v331 = vpow.pop %v330
  %v332 = vmul.f32 %v319, 1.442695
  %v333 = vpow.pop %v332
  %v334 = vmul.f32 %v320, 1.442695
  %v335 = vpow.pop %v334
  %v336 = vmul.f32 %v321, 1.442695
  %v337 = vpow.pop %v336
  %v338 = vsel %vm292, %v323, 0.0
  %v339 = vsel %vm292, %v325, 0.0
  %v340 = vadd.f32 %v338, %v339
  %v341 = vsel %vm292, %v327, 0.0
  %v342 = vadd.f32 %v340, %v341
  %v343 = vsel %vm292, %v329, 0.0
  %v344 = vadd.f32 %v342, %v343
  %v345 = vsel %vm292, %v331, 0.0
  %v346 = vadd.f32 %v344, %v345
  %v347 = vsel %vm292, %v333, 0.0
  %v348 = vadd.f32 %v346, %v347
  %v349 = vsel %vm292, %v335, 0.0
  %v350 = vadd.f32 %v348, %v349
  %v351 = vsel %vm292, %v337, 0.0
  %v352 = vadd.f32 %v350, %v351
  %v353 = vrot.slane %v352, 4
  %v354 = vadd.f32 %v352, %v353
  %v355 = vrot.slane %v354, 2
  %v356 = vadd.f32 %v354, %v355
  %v357 = vrot.slane %v356, 1
  %v358 = vadd.f32 %v356, %v357
  %v359 = vrcp.pop %v358
  %v360 = vmul.f32 %v323, %v359
  %v361 = vmul.f32 %v325, %v359
  %v362 = vmul.f32 %v327, %v359
  %v363 = vmul.f32 %v329, %v359
  %v364 = vmul.f32 %v331, %v359
  %v365 = vmul.f32 %v333, %v359
  %v366 = vmul.f32 %v335, %v359
  %v367 = vmul.f32 %v337, %v359
  %368 = vmax.xlane.f32.xlu0 %v293
  %v369 = vpop.xlane.xlu0 %368
  %370 = vmax.xlane.f32.xlu0 %v294
  %v371 = vpop.xlane.xlu0 %370
  %372 = vmax.xlane.f32.xlu0 %v295
  %v373 = vpop.xlane.xlu0 %372
  %374 = vmax.xlane.f32.xlu0 %v296
  %v375 = vpop.xlane.xlu0 %374
  %376 = vmax.xlane.f32.xlu0 %v297
  %v377 = vpop.xlane.xlu0 %376
  %378 = vmax.xlane.f32.xlu0 %v299
  %v379 = vpop.xlane.xlu0 %378
  %380 = vmax.xlane.f32.xlu0 %v301
  %v381 = vpop.xlane.xlu0 %380
  %382 = vmax.xlane.f32.xlu0 %v303
  %v383 = vpop.xlane.xlu0 %382
  %v384 = vsub.f32 %v254, %v369
  %v385 = vsub.f32 %v259, %v371
  %v386 = vsub.f32 %v264, %v373
  %v387 = vsub.f32 %v269, %v375
  %v388 = vsub.f32 %v274, %v377
  %v389 = vsub.f32 %v279, %v379
  %v390 = vsub.f32 %v284, %v381
  %v391 = vsub.f32 %v289, %v383
  %v392 = vmul.f32 %v384, 1.442695
  %v393 = vpow.pop %v392
  %v394 = vmul.f32 %v385, 1.442695
  %v395 = vpow.pop %v394
  %v396 = vmul.f32 %v386, 1.442695
  %v397 = vpow.pop %v396
  %v398 = vmul.f32 %v387, 1.442695
  %v399 = vpow.pop %v398
  %v400 = vmul.f32 %v388, 1.442695
  %v401 = vpow.pop %v400
  %v402 = vmul.f32 %v389, 1.442695
  %v403 = vpow.pop %v402
  %v404 = vmul.f32 %v390, 1.442695
  %v405 = vpow.pop %v404
  %v406 = vmul.f32 %v391, 1.442695
  %v407 = vpow.pop %v406
  %v408 = vsel %vm292, %v393, 0.0
  %409 = vadd.xlane.f32.xlu0 %v408
  %v410 = vpop.xlane.xlu0 %409
  %v411 = vsel %vm292, %v395, 0.0
  %412 = vadd.xlane.f32.xlu0 %v411
  %v413 = vpop.xlane.xlu0 %412
  %v414 = vsel %vm292, %v397, 0.0
  %415 = vadd.xlane.f32.xlu0 %v414
  %v416 = vpop.xlane.xlu0 %415
  %v417 = vsel %vm292, %v399, 0.0
  %418 = vadd.xlane.f32.xlu0 %v417
  %v419 = vpop.xlane.xlu0 %418
  %v420 = vsel %vm292, %v401, 0.0
  %421 = vadd.xlane.f32.xlu0 %v420
  %v422 = vpop.xlane.xlu0 %421
  %v423 = vsel %vm292, %v403, 0.0
  %424 = vadd.xlane.f32.xlu0 %v423
  %v425 = vpop.xlane.xlu0 %424
  %v426 = vsel %vm292, %v405, 0.0
  %427 = vadd.xlane.f32.xlu0 %v426
  %v428 = vpop.xlane.xlu0 %427
  %v429 = vsel %vm292, %v407, 0.0
  %430 = vadd.xlane.f32.xlu0 %v429
  %v431 = vpop.xlane.xlu0 %430
  %v432 = vrcp.pop %v410
  %v433 = vrcp.pop %v413
  %v434 = vrcp.pop %v416
  %v435 = vrcp.pop %v419
  %v436 = vrcp.pop %v422
  %v437 = vrcp.pop %v425
  %v438 = vrcp.pop %v428
  %v439 = vrcp.pop %v431
  %v440 = vmul.f32 %v393, %v432
  %v441 = vmul.f32 %v395, %v433
  %v442 = vmul.f32 %v397, %v434
  %v443 = vmul.f32 %v399, %v435
  %v444 = vmul.f32 %v401, %v436
  %v445 = vmul.f32 %v403, %v437
  %v446 = vmul.f32 %v405, %v438
  %v447 = vmul.f32 %v407, %v439
  %v449 = vsel %vm292, %v17, 0
  %v452 = vsel %vm292, %v18, 0
  %v455 = vsel %vm292, %v19, 0
  %v458 = vsel %vm292, %v20, 0
  %460 = vmatprep.subr.mxu0 0.0
  %461 = vmatpush1.msra.mxu0 0.0
  %462 = vmatprep.subr.mxu0 0.0
  %463 = vmatpush1.msra.mxu0 0.0
  %464 = vmatprep.subr.mxu0 0.0
  %465 = vmatpush1.msra.mxu0 0.0
  %466 = vmatprep.subr.mxu0 0.0
  %467 = vmatpush1.msra.mxu0 0.0
  %468 = vmatprep.subr.mxu0 0.0
  %469 = vmatpush1.msra.mxu0 0.0
  %470 = vmatprep.subr.mxu0 0.0
  %471 = vmatpush1.msra.mxu0 0.0
  %472 = vmatprep.subr.mxu0 0.0
  %473 = vmatpush1.msra.mxu0 0.0
  %474 = vmatprep.subr.mxu0 0.0
  %475 = vmatpush1.msra.mxu0 0.0
  %476 = vmatprep.subr.mxu0 0.0
  %477 = vmatpush1.msra.mxu0 %v367
  %478 = vmatprep.subr.mxu0 0.0
  %479 = vmatpush1.msra.mxu0 %v366
  %480 = vmatprep.subr.mxu0 0.0
  %481 = vmatpush1.msra.mxu0 %v365
  %482 = vmatprep.subr.mxu0 0.0
  %483 = vmatpush1.msra.mxu0 %v364
  %484 = vmatprep.subr.mxu0 0.0
  %485 = vmatpush1.msra.mxu0 %v363
  %486 = vmatprep.subr.mxu0 0.0
  %487 = vmatpush1.msra.mxu0 %v362
  %488 = vmatprep.subr.mxu0 0.0
  %489 = vmatpush1.msra.mxu0 %v361
  %490 = vmatprep.subr.mxu0 0.0
  %491 = vmatpush1.msra.mxu0 %v360
  %492 = vmatprep.subr.mxu0 0.0
  %493 = vmatpush2.msra.mxu0 0.0
  %494 = vmatprep.subr.mxu0 0.0
  %495 = vmatpush2.msra.mxu0 0.0
  %496 = vmatprep.subr.mxu0 0.0
  %497 = vmatpush2.msra.mxu0 0.0
  %498 = vmatprep.subr.mxu0 0.0
  %499 = vmatpush2.msra.mxu0 0.0
  %500 = vmatprep.subr.mxu0 0.0
  %501 = vmatpush2.msra.mxu0 0.0
  %502 = vmatprep.subr.mxu0 0.0
  %503 = vmatpush2.msra.mxu0 0.0
  %504 = vmatprep.subr.mxu0 0.0
  %505 = vmatpush2.msra.mxu0 0.0
  %506 = vmatprep.subr.mxu0 0.0
  %507 = vmatpush2.msra.mxu0 0.0
  %508 = vmatprep.subr.mxu0 0.0
  %509 = vmatpush2.msra.mxu0 0.0
  %510 = vmatprep.subr.mxu0 0.0
  %511 = vmatpush2.msra.mxu0 0.0
  %512 = vmatprep.subr.mxu0 0.0
  %513 = vmatpush2.msra.mxu0 0.0
  %514 = vmatprep.subr.mxu0 0.0
  %515 = vmatpush2.msra.mxu0 0.0
  %516 = vmatprep.subr.mxu0 0.0
  %517 = vmatpush2.msra.mxu0 0.0
  %518 = vmatprep.subr.mxu0 0.0
  %519 = vmatpush2.msra.mxu0 0.0
  %520 = vmatprep.subr.mxu0 0.0
  %521 = vmatpush2.msra.mxu0 0.0
  %522 = vmatprep.subr.mxu0 0.0
  %523 = vmatpush2.msra.mxu0 0.0
  %524 = vmatprep.mubr.f32.mxu0 0.0
  %525 = vmatmul.mubr.f32.gmra.mxu0 %v449
  %v526 = vpop.f32.mrf.mxu0
  %v527 = vadd.f32 0.0, %v526
  %v528 = vpop.f32.mrf.mxu0
  %529 = vmatprep.mubr.f32.mxu0 0.0
  %530 = vmatmul.mubr.f32.gmra.mxu0 %v452
  %v531 = vpop.f32.mrf.mxu0
  %v532 = vadd.f32 0.0, %v531
  %v533 = vpop.f32.mrf.mxu0
  %534 = vmatprep.mubr.f32.mxu0 0.0
  %535 = vmatmul.mubr.f32.gmra.mxu0 %v455
  %v536 = vpop.f32.mrf.mxu0
  %v537 = vadd.f32 0.0, %v536
  %v538 = vpop.f32.mrf.mxu0
  %539 = vmatprep.mubr.f32.mxu0 0.0
  %540 = vmatmul.mubr.f32.gmra.mxu0 %v458
  %v541 = vpop.f32.mrf.mxu0
  %v542 = vadd.f32 0.0, %v541
  %v543 = vpop.f32.mrf.mxu0
  %544 = vdwg.mxu0
  %v546 = vsel %vm292, %v21, 0
  %v549 = vsel %vm292, %v22, 0
  %v552 = vsel %vm292, %v23, 0
  %v555 = vsel %vm292, %v24, 0
  %v558 = vsel %vm292, %v440, 0
  %v561 = vsel %vm292, %v441, 0
  %v564 = vsel %vm292, %v442, 0
  %v567 = vsel %vm292, %v443, 0
  %v570 = vsel %vm292, %v444, 0
  %v573 = vsel %vm292, %v445, 0
  %v576 = vsel %vm292, %v446, 0
  %v579 = vsel %vm292, %v447, 0
  %581 = vmatprep.subr.mxu0 0.0
  %582 = vmatpush1.xpose.msra.mxu0 0.0
  %583 = vmatprep.subr.mxu0 0.0
  %584 = vmatpush1.xpose.msra.mxu0 0.0
  %585 = vmatprep.subr.mxu0 0.0
  %586 = vmatpush1.xpose.msra.mxu0 0.0
  %587 = vmatprep.subr.mxu0 0.0
  %588 = vmatpush1.xpose.msra.mxu0 0.0
  %589 = vmatprep.subr.mxu0 0.0
  %590 = vmatpush1.xpose.msra.mxu0 0.0
  %591 = vmatprep.subr.mxu0 0.0
  %592 = vmatpush1.xpose.msra.mxu0 0.0
  %593 = vmatprep.subr.mxu0 0.0
  %594 = vmatpush1.xpose.msra.mxu0 0.0
  %595 = vmatprep.subr.mxu0 0.0
  %596 = vmatpush1.xpose.msra.mxu0 0.0
  %597 = vmatprep.subr.mxu0 0.0
  %598 = vmatpush1.xpose.msra.mxu0 %v579
  %599 = vmatprep.subr.mxu0 0.0
  %600 = vmatpush1.xpose.msra.mxu0 %v576
  %601 = vmatprep.subr.mxu0 0.0
  %602 = vmatpush1.xpose.msra.mxu0 %v573
  %603 = vmatprep.subr.mxu0 0.0
  %604 = vmatpush1.xpose.msra.mxu0 %v570
  %605 = vmatprep.subr.mxu0 0.0
  %606 = vmatpush1.xpose.msra.mxu0 %v567
  %607 = vmatprep.subr.mxu0 0.0
  %608 = vmatpush1.xpose.msra.mxu0 %v564
  %609 = vmatprep.subr.mxu0 0.0
  %610 = vmatpush1.xpose.msra.mxu0 %v561
  %611 = vmatprep.subr.mxu0 0.0
  %612 = vmatpush1.xpose.msra.mxu0 %v558
  %613 = vmatprep.subr.mxu0 0.0
  %614 = vmatpush2.xpose.msra.mxu0 0.0
  %615 = vmatprep.subr.mxu0 0.0
  %616 = vmatpush2.xpose.msra.mxu0 0.0
  %617 = vmatprep.subr.mxu0 0.0
  %618 = vmatpush2.xpose.msra.mxu0 0.0
  %619 = vmatprep.subr.mxu0 0.0
  %620 = vmatpush2.xpose.msra.mxu0 0.0
  %621 = vmatprep.subr.mxu0 0.0
  %622 = vmatpush2.xpose.msra.mxu0 0.0
  %623 = vmatprep.subr.mxu0 0.0
  %624 = vmatpush2.xpose.msra.mxu0 0.0
  %625 = vmatprep.subr.mxu0 0.0
  %626 = vmatpush2.xpose.msra.mxu0 0.0
  %627 = vmatprep.subr.mxu0 0.0
  %628 = vmatpush2.xpose.msra.mxu0 0.0
  %629 = vmatprep.subr.mxu0 0.0
  %630 = vmatpush2.xpose.msra.mxu0 0.0
  %631 = vmatprep.subr.mxu0 0.0
  %632 = vmatpush2.xpose.msra.mxu0 0.0
  %633 = vmatprep.subr.mxu0 0.0
  %634 = vmatpush2.xpose.msra.mxu0 0.0
  %635 = vmatprep.subr.mxu0 0.0
  %636 = vmatpush2.xpose.msra.mxu0 0.0
  %637 = vmatprep.subr.mxu0 0.0
  %638 = vmatpush2.xpose.msra.mxu0 0.0
  %639 = vmatprep.subr.mxu0 0.0
  %640 = vmatpush2.xpose.msra.mxu0 0.0
  %641 = vmatprep.subr.mxu0 0.0
  %642 = vmatpush2.xpose.msra.mxu0 0.0
  %643 = vmatprep.subr.mxu0 0.0
  %644 = vmatpush2.xpose.msra.mxu0 0.0
  %645 = vmatprep.mubr.f32.mxu0 0.0
  %646 = vmatmul.mubr.f32.gmra.mxu0 %v546
  %v647 = vpop.f32.mrf.mxu0
  %v648 = vadd.f32 0.0, %v647
  %v649 = vpop.f32.mrf.mxu0
  %650 = vmatprep.mubr.f32.mxu0 0.0
  %651 = vmatmul.mubr.f32.gmra.mxu0 %v549
  %v652 = vpop.f32.mrf.mxu0
  %v653 = vadd.f32 0.0, %v652
  %v654 = vpop.f32.mrf.mxu0
  %655 = vmatprep.mubr.f32.mxu0 0.0
  %656 = vmatmul.mubr.f32.gmra.mxu0 %v552
  %v657 = vpop.f32.mrf.mxu0
  %v658 = vadd.f32 0.0, %v657
  %v659 = vpop.f32.mrf.mxu0
  %660 = vmatprep.mubr.f32.mxu0 0.0
  %661 = vmatmul.mubr.f32.gmra.mxu0 %v555
  %v662 = vpop.f32.mrf.mxu0
  %v663 = vadd.f32 0.0, %v662
  %v664 = vpop.f32.mrf.mxu0
  %665 = vdwg.mxu0
  %667 = vset.pattern.permute.xlu0 0
  %668 = vperm.xlu0 %667, %v29
  %v669 = vpop.permute.xlu0 %668
  %672 = vset.pattern.permute.xlu0 0
  %673 = vperm.xlu0 %672, %v30
  %v674 = vpop.permute.xlu0 %673
  %677 = vset.pattern.permute.xlu0 0
  %678 = vperm.xlu0 %677, %v31
  %v679 = vpop.permute.xlu0 %678
  %682 = vset.pattern.permute.xlu0 0
  %683 = vperm.xlu0 %682, %v32
  %v684 = vpop.permute.xlu0 %683
  %v686 = vmul.f32 %v669, %v648
  %v687 = vmul.f32 %v674, %v653
  %v688 = vmul.f32 %v679, %v658
  %v689 = vmul.f32 %v684, %v663
  %v690 = vsel %vm292, %v686, 0.0
  %v691 = vsel %vm292, %v687, 0.0
  %v692 = vadd.f32 %v690, %v691
  %v693 = vsel %vm292, %v688, 0.0
  %v694 = vadd.f32 %v692, %v693
  %v695 = vsel %vm292, %v689, 0.0
  %v696 = vadd.f32 %v694, %v695
  %v697 = vrot.slane %v696, 4
  %v698 = vadd.f32 %v696, %v697
  %v699 = vrot.slane %v698, 2
  %v700 = vadd.f32 %v698, %v699
  %v701 = vrot.slane %v700, 1
  %v702 = vadd.f32 %v700, %v701
  %v703 = vxor.u32 %v702, 2147483648
  %v704 = vmul.f32 %v703, 1.442695
  %v705 = vpow.pop %v704
  %v706 = vadd.f32 %v705, 1.0
  %v707 = vrcp.pop %v706
  %v708 = vmul.f32 1.0, %v707
  %v709 = vmul.f32 %v669, %v527
  %v710 = vmul.f32 %v674, %v532
  %v711 = vmul.f32 %v679, %v537
  %v712 = vmul.f32 %v684, %v542
  %v713 = vsel %vm292, %v709, 0.0
  %v714 = vsel %vm292, %v710, 0.0
  %v715 = vadd.f32 %v713, %v714
  %v716 = vsel %vm292, %v711, 0.0
  %v717 = vadd.f32 %v715, %v716
  %v718 = vsel %vm292, %v712, 0.0
  %v719 = vadd.f32 %v717, %v718
  %v720 = vrot.slane %v719, 4
  %v721 = vadd.f32 %v719, %v720
  %v722 = vrot.slane %v721, 2
  %v723 = vadd.f32 %v721, %v722
  %v724 = vrot.slane %v723, 1
  %v725 = vadd.f32 %v723, %v724
  %v726 = vxor.u32 %v725, 2147483648
  %v727 = vmul.f32 %v726, 1.442695
  %v728 = vpow.pop %v727
  %v729 = vadd.f32 %v728, 1.0
  %v730 = vrcp.pop %v729
  %v731 = vmul.f32 1.0, %v730
  %v732 = vmul.f32 %v648, %v708
  %v733 = vmul.f32 %v653, %v708
  %v734 = vmul.f32 %v658, %v708
  %v735 = vmul.f32 %v663, %v708
  %v736 = vpack.c.bf16 %v733, %v732
  %v737 = vpack.c.bf16 %v735, %v734
  %v738 = vmul.f32 %v527, %v731
  %v739 = vmul.f32 %v532, %v731
  %v740 = vmul.f32 %v537, %v731
  %v741 = vmul.f32 %v542, %v731
  %v742 = vpack.c.bf16 %v739, %v738
  %v743 = vpack.c.bf16 %v741, %v740
  %744 = vrot.lane.b32.xlu0 %v17, 64
  %v745 = vpop.permute.xlu0 %744
  %746 = vrot.lane.b32.xlu0 %v18, 64
  %v747 = vpop.permute.xlu0 %746
  %748 = vrot.lane.b32.xlu0 %v19, 64
  %v749 = vpop.permute.xlu0 %748
  %750 = vrot.lane.b32.xlu0 %v20, 64
  %v751 = vpop.permute.xlu0 %750
  %756 = vmatprep.subr.mxu0 0.0
  %757 = vmatpush1.msra.mxu0 0.0
  %758 = vmatprep.subr.mxu0 0.0
  %759 = vmatpush1.msra.mxu0 0.0
  %760 = vmatprep.subr.mxu0 0.0
  %761 = vmatpush1.msra.mxu0 0.0
  %762 = vmatprep.subr.mxu0 0.0
  %763 = vmatpush1.msra.mxu0 0.0
  %764 = vmatprep.subr.mxu0 0.0
  %765 = vmatpush1.msra.mxu0 0.0
  %766 = vmatprep.subr.mxu0 0.0
  %767 = vmatpush1.msra.mxu0 0.0
  %768 = vmatprep.subr.mxu0 0.0
  %769 = vmatpush1.msra.mxu0 0.0
  %770 = vmatprep.subr.mxu0 0.0
  %771 = vmatpush1.msra.mxu0 0.0
  %772 = vmatprep.subr.mxu0 0.0
  %773 = vmatpush1.msra.mxu0 0.0
  %774 = vmatprep.subr.mxu0 0.0
  %775 = vmatpush1.msra.mxu0 0.0
  %776 = vmatprep.subr.mxu0 0.0
  %777 = vmatpush1.msra.mxu0 0.0
  %778 = vmatprep.subr.mxu0 0.0
  %779 = vmatpush1.msra.mxu0 0.0
  %780 = vmatprep.subr.mxu0 0.0
  %781 = vmatpush1.msra.mxu0 %v751
  %782 = vmatprep.subr.mxu0 0.0
  %783 = vmatpush1.msra.mxu0 %v749
  %784 = vmatprep.subr.mxu0 0.0
  %785 = vmatpush1.msra.mxu0 %v747
  %786 = vmatprep.subr.mxu0 0.0
  %787 = vmatpush1.msra.mxu0 %v745
  %788 = vmatprep.subr.mxu0 0.0
  %789 = vmatpush2.msra.mxu0 0.0
  %790 = vmatprep.subr.mxu0 0.0
  %791 = vmatpush2.msra.mxu0 0.0
  %792 = vmatprep.subr.mxu0 0.0
  %793 = vmatpush2.msra.mxu0 0.0
  %794 = vmatprep.subr.mxu0 0.0
  %795 = vmatpush2.msra.mxu0 0.0
  %796 = vmatprep.subr.mxu0 0.0
  %797 = vmatpush2.msra.mxu0 0.0
  %798 = vmatprep.subr.mxu0 0.0
  %799 = vmatpush2.msra.mxu0 0.0
  %800 = vmatprep.subr.mxu0 0.0
  %801 = vmatpush2.msra.mxu0 0.0
  %802 = vmatprep.subr.mxu0 0.0
  %803 = vmatpush2.msra.mxu0 0.0
  %804 = vmatprep.subr.mxu0 0.0
  %805 = vmatpush2.msra.mxu0 0.0
  %806 = vmatprep.subr.mxu0 0.0
  %807 = vmatpush2.msra.mxu0 0.0
  %808 = vmatprep.subr.mxu0 0.0
  %809 = vmatpush2.msra.mxu0 0.0
  %810 = vmatprep.subr.mxu0 0.0
  %811 = vmatpush2.msra.mxu0 0.0
  %812 = vmatprep.subr.mxu0 0.0
  %813 = vmatpush2.msra.mxu0 0.0
  %814 = vmatprep.subr.mxu0 0.0
  %815 = vmatpush2.msra.mxu0 0.0
  %816 = vmatprep.subr.mxu0 0.0
  %817 = vmatpush2.msra.mxu0 0.0
  %818 = vmatprep.subr.mxu0 0.0
  %819 = vmatpush2.msra.mxu0 0.0
  %820 = vmatprep.mubr.f32.mxu0 0.0
  %821 = vmatmul.mubr.f32.gmra.mxu0 %v35
  %v822 = vpop.f32.mrf.mxu0
  %v823 = vadd.f32 0.0, %v822
  %v824 = vpop.f32.mrf.mxu0
  %825 = vmatprep.mubr.f32.mxu0 0.0
  %826 = vmatmul.mubr.f32.gmra.mxu0 %v38
  %v827 = vpop.f32.mrf.mxu0
  %v828 = vadd.f32 0.0, %v827
  %v829 = vpop.f32.mrf.mxu0
  %830 = vmatprep.mubr.f32.mxu0 0.0
  %831 = vmatmul.mubr.f32.gmra.mxu0 %v41
  %v832 = vpop.f32.mrf.mxu0
  %v833 = vadd.f32 0.0, %v832
  %v834 = vpop.f32.mrf.mxu0
  %835 = vmatprep.mubr.f32.mxu0 0.0
  %836 = vmatmul.mubr.f32.gmra.mxu0 %v44
  %v837 = vpop.f32.mrf.mxu0
  %v838 = vadd.f32 0.0, %v837
  %v839 = vpop.f32.mrf.mxu0
  %840 = vdwg.mxu0
  %841 = vxpose.xlu0.b32.start [1/16] %v823, 128
  %842 = vxpose.xlu0.b32.cont [2/16] %v828, 128
  %843 = vxpose.xlu0.b32.cont [3/16] %v833, 128
  %844 = vxpose.xlu0.b32.cont [4/16] %v838, 128
  %845 = vxpose.xlu0.b32.cont [5/16] 0.0, 128
  %846 = vxpose.xlu0.b32.cont [6/16] 0.0, 128
  %847 = vxpose.xlu0.b32.cont [7/16] 0.0, 128
  %848 = vxpose.xlu0.b32.cont [8/16] 0.0, 128
  %849 = vxpose.xlu0.b32.cont [9/16] 0.0, 128
  %850 = vxpose.xlu0.b32.cont [10/16] 0.0, 128
  %851 = vxpose.xlu0.b32.cont [11/16] 0.0, 128
  %852 = vxpose.xlu0.b32.cont [12/16] 0.0, 128
  %853 = vxpose.xlu0.b32.cont [13/16] 0.0, 128
  %854 = vxpose.xlu0.b32.cont [14/16] 0.0, 128
  %855 = vxpose.xlu0.b32.cont [15/16] 0.0, 128
  %856 = vxpose.xlu0.b32.end [16/16] 0.0, 128
  %v857 = vpop.trf.xlu0
  %v858 = vpop.trf.xlu0
  %v859 = vpop.trf.xlu0
  %v860 = vpop.trf.xlu0
  %v861 = vpop.trf.xlu0
  %v862 = vpop.trf.xlu0
  %v863 = vpop.trf.xlu0
  %v864 = vpop.trf.xlu0
  %v865 = vpop.trf.xlu0
  %v866 = vpop.trf.xlu0
  %v867 = vpop.trf.xlu0
  %v868 = vpop.trf.xlu0
  %v869 = vpop.trf.xlu0
  %v870 = vpop.trf.xlu0
  %v871 = vpop.trf.xlu0
  %v872 = vpop.trf.xlu0
  %873 = vrot.lane.b32.xlu0 %v21, 64
  %v874 = vpop.permute.xlu0 %873
  %875 = vrot.lane.b32.xlu0 %v22, 64
  %v876 = vpop.permute.xlu0 %875
  %877 = vrot.lane.b32.xlu0 %v23, 64
  %v878 = vpop.permute.xlu0 %877
  %879 = vrot.lane.b32.xlu0 %v24, 64
  %v880 = vpop.permute.xlu0 %879
  %v886 = vsel %vm33, %v857, 0
  %v889 = vsel %vm33, %v858, 0
  %v892 = vsel %vm33, %v859, 0
  %v895 = vsel %vm33, %v860, 0
  %v898 = vsel %vm33, %v861, 0
  %v901 = vsel %vm33, %v862, 0
  %v904 = vsel %vm33, %v863, 0
  %v907 = vsel %vm33, %v864, 0
  %909 = vmatprep.subr.mxu0 0.0
  %910 = vmatpush1.msra.mxu0 0.0
  %911 = vmatprep.subr.mxu0 0.0
  %912 = vmatpush1.msra.mxu0 0.0
  %913 = vmatprep.subr.mxu0 0.0
  %914 = vmatpush1.msra.mxu0 0.0
  %915 = vmatprep.subr.mxu0 0.0
  %916 = vmatpush1.msra.mxu0 0.0
  %917 = vmatprep.subr.mxu0 0.0
  %918 = vmatpush1.msra.mxu0 0.0
  %919 = vmatprep.subr.mxu0 0.0
  %920 = vmatpush1.msra.mxu0 0.0
  %921 = vmatprep.subr.mxu0 0.0
  %922 = vmatpush1.msra.mxu0 0.0
  %923 = vmatprep.subr.mxu0 0.0
  %924 = vmatpush1.msra.mxu0 0.0
  %925 = vmatprep.subr.mxu0 0.0
  %926 = vmatpush1.msra.mxu0 0.0
  %927 = vmatprep.subr.mxu0 0.0
  %928 = vmatpush1.msra.mxu0 0.0
  %929 = vmatprep.subr.mxu0 0.0
  %930 = vmatpush1.msra.mxu0 0.0
  %931 = vmatprep.subr.mxu0 0.0
  %932 = vmatpush1.msra.mxu0 0.0
  %933 = vmatprep.subr.mxu0 0.0
  %934 = vmatpush1.msra.mxu0 %v880
  %935 = vmatprep.subr.mxu0 0.0
  %936 = vmatpush1.msra.mxu0 %v878
  %937 = vmatprep.subr.mxu0 0.0
  %938 = vmatpush1.msra.mxu0 %v876
  %939 = vmatprep.subr.mxu0 0.0
  %940 = vmatpush1.msra.mxu0 %v874
  %941 = vmatprep.subr.mxu0 0.0
  %942 = vmatpush2.msra.mxu0 0.0
  %943 = vmatprep.subr.mxu0 0.0
  %944 = vmatpush2.msra.mxu0 0.0
  %945 = vmatprep.subr.mxu0 0.0
  %946 = vmatpush2.msra.mxu0 0.0
  %947 = vmatprep.subr.mxu0 0.0
  %948 = vmatpush2.msra.mxu0 0.0
  %949 = vmatprep.subr.mxu0 0.0
  %950 = vmatpush2.msra.mxu0 0.0
  %951 = vmatprep.subr.mxu0 0.0
  %952 = vmatpush2.msra.mxu0 0.0
  %953 = vmatprep.subr.mxu0 0.0
  %954 = vmatpush2.msra.mxu0 0.0
  %955 = vmatprep.subr.mxu0 0.0
  %956 = vmatpush2.msra.mxu0 0.0
  %957 = vmatprep.subr.mxu0 0.0
  %958 = vmatpush2.msra.mxu0 0.0
  %959 = vmatprep.subr.mxu0 0.0
  %960 = vmatpush2.msra.mxu0 0.0
  %961 = vmatprep.subr.mxu0 0.0
  %962 = vmatpush2.msra.mxu0 0.0
  %963 = vmatprep.subr.mxu0 0.0
  %964 = vmatpush2.msra.mxu0 0.0
  %965 = vmatprep.subr.mxu0 0.0
  %966 = vmatpush2.msra.mxu0 0.0
  %967 = vmatprep.subr.mxu0 0.0
  %968 = vmatpush2.msra.mxu0 0.0
  %969 = vmatprep.subr.mxu0 0.0
  %970 = vmatpush2.msra.mxu0 0.0
  %971 = vmatprep.subr.mxu0 0.0
  %972 = vmatpush2.msra.mxu0 0.0
  %973 = vmatprep.mubr.f32.mxu0 0.0
  %974 = vmatmul.mubr.f32.gmra.mxu0 %v886
  %v975 = vpop.f32.mrf.mxu0
  %v976 = vadd.f32 0.0, %v975
  %v977 = vpop.f32.mrf.mxu0
  %978 = vmatprep.mubr.f32.mxu0 0.0
  %979 = vmatmul.mubr.f32.gmra.mxu0 %v889
  %v980 = vpop.f32.mrf.mxu0
  %v981 = vadd.f32 0.0, %v980
  %v982 = vpop.f32.mrf.mxu0
  %983 = vmatprep.mubr.f32.mxu0 0.0
  %984 = vmatmul.mubr.f32.gmra.mxu0 %v892
  %v985 = vpop.f32.mrf.mxu0
  %v986 = vadd.f32 0.0, %v985
  %v987 = vpop.f32.mrf.mxu0
  %988 = vmatprep.mubr.f32.mxu0 0.0
  %989 = vmatmul.mubr.f32.gmra.mxu0 %v895
  %v990 = vpop.f32.mrf.mxu0
  %v991 = vadd.f32 0.0, %v990
  %v992 = vpop.f32.mrf.mxu0
  %993 = vmatprep.mubr.f32.mxu0 0.0
  %994 = vmatmul.mubr.f32.gmra.mxu0 %v898
  %v995 = vpop.f32.mrf.mxu0
  %v996 = vadd.f32 0.0, %v995
  %v997 = vpop.f32.mrf.mxu0
  %998 = vmatprep.mubr.f32.mxu0 0.0
  %999 = vmatmul.mubr.f32.gmra.mxu0 %v901
  %v1000 = vpop.f32.mrf.mxu0
  %v1001 = vadd.f32 0.0, %v1000
  %v1002 = vpop.f32.mrf.mxu0
  %1003 = vmatprep.mubr.f32.mxu0 0.0
  %1004 = vmatmul.mubr.f32.gmra.mxu0 %v904
  %v1005 = vpop.f32.mrf.mxu0
  %v1006 = vadd.f32 0.0, %v1005
  %v1007 = vpop.f32.mrf.mxu0
  %1008 = vmatprep.mubr.f32.mxu0 0.0
  %1009 = vmatmul.mubr.f32.gmra.mxu0 %v907
  %v1010 = vpop.f32.mrf.mxu0
  %v1011 = vadd.f32 0.0, %v1010
  %v1012 = vpop.f32.mrf.mxu0
  %1013 = vdwg.mxu0
  %v1014 = vsel %vm292, %v976, -inf
  %v1015 = vsel %vm292, %v981, -inf
  %v1016 = vsel %vm292, %v986, -inf
  %v1017 = vsel %vm292, %v991, -inf
  %v1018 = vsel %vm292, %v996, -inf
  %v1019 = vmax.f32 %v1014, %v1018
  %v1020 = vsel %vm292, %v1001, -inf
  %v1021 = vmax.f32 %v1015, %v1020
  %v1022 = vsel %vm292, %v1006, -inf
  %v1023 = vmax.f32 %v1016, %v1022
  %v1024 = vsel %vm292, %v1011, -inf
  %v1025 = vmax.f32 %v1017, %v1024
  %v1026 = vmax.f32 %v1019, %v1021
  %v1027 = vmax.f32 %v1023, %v1025
  %v1028 = vmax.f32 %v1026, %v1027
  %v1029 = vrot.slane %v1028, 4
  %v1030 = vmax.f32 %v1028, %v1029
  %v1031 = vrot.slane %v1030, 2
  %v1032 = vmax.f32 %v1030, %v1031
  %v1033 = vrot.slane %v1032, 1
  %v1034 = vmax.f32 %v1032, %v1033
  %v1035 = vsub.f32 %v976, %v1034
  %v1036 = vsub.f32 %v981, %v1034
  %v1037 = vsub.f32 %v986, %v1034
  %v1038 = vsub.f32 %v991, %v1034
  %v1039 = vsub.f32 %v996, %v1034
  %v1040 = vsub.f32 %v1001, %v1034
  %v1041 = vsub.f32 %v1006, %v1034
  %v1042 = vsub.f32 %v1011, %v1034
  %v1043 = vmul.f32 %v1035, 1.442695
  %v1044 = vpow.pop %v1043
  %v1045 = vmul.f32 %v1036, 1.442695
  %v1046 = vpow.pop %v1045
  %v1047 = vmul.f32 %v1037, 1.442695
  %v1048 = vpow.pop %v1047
  %v1049 = vmul.f32 %v1038, 1.442695
  %v1050 = vpow.pop %v1049
  %v1051 = vmul.f32 %v1039, 1.442695
  %v1052 = vpow.pop %v1051
  %v1053 = vmul.f32 %v1040, 1.442695
  %v1054 = vpow.pop %v1053
  %v1055 = vmul.f32 %v1041, 1.442695
  %v1056 = vpow.pop %v1055
  %v1057 = vmul.f32 %v1042, 1.442695
  %v1058 = vpow.pop %v1057
  %v1059 = vsel %vm292, %v1044, 0.0
  %v1060 = vsel %vm292, %v1046, 0.0
  %v1061 = vadd.f32 %v1059, %v1060
  %v1062 = vsel %vm292, %v1048, 0.0
  %v1063 = vadd.f32 %v1061, %v1062
  %v1064 = vsel %vm292, %v1050, 0.0
  %v1065 = vadd.f32 %v1063, %v1064
  %v1066 = vsel %vm292, %v1052, 0.0
  %v1067 = vadd.f32 %v1065, %v1066
  %v1068 = vsel %vm292, %v1054, 0.0
  %v1069 = vadd.f32 %v1067, %v1068
  %v1070 = vsel %vm292, %v1056, 0.0
  %v1071 = vadd.f32 %v1069, %v1070
  %v1072 = vsel %vm292, %v1058, 0.0
  %v1073 = vadd.f32 %v1071, %v1072
  %v1074 = vrot.slane %v1073, 4
  %v1075 = vadd.f32 %v1073, %v1074
  %v1076 = vrot.slane %v1075, 2
  %v1077 = vadd.f32 %v1075, %v1076
  %v1078 = vrot.slane %v1077, 1
  %v1079 = vadd.f32 %v1077, %v1078
  %v1080 = vrcp.pop %v1079
  %v1081 = vmul.f32 %v1044, %v1080
  %v1082 = vmul.f32 %v1046, %v1080
  %v1083 = vmul.f32 %v1048, %v1080
  %v1084 = vmul.f32 %v1050, %v1080
  %v1085 = vmul.f32 %v1052, %v1080
  %v1086 = vmul.f32 %v1054, %v1080
  %v1087 = vmul.f32 %v1056, %v1080
  %v1088 = vmul.f32 %v1058, %v1080
  %1089 = vmax.xlane.f32.xlu0 %v1014
  %v1090 = vpop.xlane.xlu0 %1089
  %1091 = vmax.xlane.f32.xlu0 %v1015
  %v1092 = vpop.xlane.xlu0 %1091
  %1093 = vmax.xlane.f32.xlu0 %v1016
  %v1094 = vpop.xlane.xlu0 %1093
  %1095 = vmax.xlane.f32.xlu0 %v1017
  %v1096 = vpop.xlane.xlu0 %1095
  %1097 = vmax.xlane.f32.xlu0 %v1018
  %v1098 = vpop.xlane.xlu0 %1097
  %1099 = vmax.xlane.f32.xlu0 %v1020
  %v1100 = vpop.xlane.xlu0 %1099
  %1101 = vmax.xlane.f32.xlu0 %v1022
  %v1102 = vpop.xlane.xlu0 %1101
  %1103 = vmax.xlane.f32.xlu0 %v1024
  %v1104 = vpop.xlane.xlu0 %1103
  %v1105 = vsub.f32 %v976, %v1090
  %v1106 = vsub.f32 %v981, %v1092
  %v1107 = vsub.f32 %v986, %v1094
  %v1108 = vsub.f32 %v991, %v1096
  %v1109 = vsub.f32 %v996, %v1098
  %v1110 = vsub.f32 %v1001, %v1100
  %v1111 = vsub.f32 %v1006, %v1102
  %v1112 = vsub.f32 %v1011, %v1104
  %v1113 = vmul.f32 %v1105, 1.442695
  %v1114 = vpow.pop %v1113
  %v1115 = vmul.f32 %v1106, 1.442695
  %v1116 = vpow.pop %v1115
  %v1117 = vmul.f32 %v1107, 1.442695
  %v1118 = vpow.pop %v1117
  %v1119 = vmul.f32 %v1108, 1.442695
  %v1120 = vpow.pop %v1119
  %v1121 = vmul.f32 %v1109, 1.442695
  %v1122 = vpow.pop %v1121
  %v1123 = vmul.f32 %v1110, 1.442695
  %v1124 = vpow.pop %v1123
  %v1125 = vmul.f32 %v1111, 1.442695
  %v1126 = vpow.pop %v1125
  %v1127 = vmul.f32 %v1112, 1.442695
  %v1128 = vpow.pop %v1127
  %v1129 = vsel %vm292, %v1114, 0.0
  %1130 = vadd.xlane.f32.xlu0 %v1129
  %v1131 = vpop.xlane.xlu0 %1130
  %v1132 = vsel %vm292, %v1116, 0.0
  %1133 = vadd.xlane.f32.xlu0 %v1132
  %v1134 = vpop.xlane.xlu0 %1133
  %v1135 = vsel %vm292, %v1118, 0.0
  %1136 = vadd.xlane.f32.xlu0 %v1135
  %v1137 = vpop.xlane.xlu0 %1136
  %v1138 = vsel %vm292, %v1120, 0.0
  %1139 = vadd.xlane.f32.xlu0 %v1138
  %v1140 = vpop.xlane.xlu0 %1139
  %v1141 = vsel %vm292, %v1122, 0.0
  %1142 = vadd.xlane.f32.xlu0 %v1141
  %v1143 = vpop.xlane.xlu0 %1142
  %v1144 = vsel %vm292, %v1124, 0.0
  %1145 = vadd.xlane.f32.xlu0 %v1144
  %v1146 = vpop.xlane.xlu0 %1145
  %v1147 = vsel %vm292, %v1126, 0.0
  %1148 = vadd.xlane.f32.xlu0 %v1147
  %v1149 = vpop.xlane.xlu0 %1148
  %v1150 = vsel %vm292, %v1128, 0.0
  %1151 = vadd.xlane.f32.xlu0 %v1150
  %v1152 = vpop.xlane.xlu0 %1151
  %v1153 = vrcp.pop %v1131
  %v1154 = vrcp.pop %v1134
  %v1155 = vrcp.pop %v1137
  %v1156 = vrcp.pop %v1140
  %v1157 = vrcp.pop %v1143
  %v1158 = vrcp.pop %v1146
  %v1159 = vrcp.pop %v1149
  %v1160 = vrcp.pop %v1152
  %v1161 = vmul.f32 %v1114, %v1153
  %v1162 = vmul.f32 %v1116, %v1154
  %v1163 = vmul.f32 %v1118, %v1155
  %v1164 = vmul.f32 %v1120, %v1156
  %v1165 = vmul.f32 %v1122, %v1157
  %v1166 = vmul.f32 %v1124, %v1158
  %v1167 = vmul.f32 %v1126, %v1159
  %v1168 = vmul.f32 %v1128, %v1160
  %v1169 = vsel %vm292, %v745, 0
  %v1171 = vsel %vm292, %v747, 0
  %v1173 = vsel %vm292, %v749, 0
  %v1175 = vsel %vm292, %v751, 0
  %1177 = vmatprep.subr.mxu0 0.0
  %1178 = vmatpush1.msra.mxu0 0.0
  %1179 = vmatprep.subr.mxu0 0.0
  %1180 = vmatpush1.msra.mxu0 0.0
  %1181 = vmatprep.subr.mxu0 0.0
  %1182 = vmatpush1.msra.mxu0 0.0
  %1183 = vmatprep.subr.mxu0 0.0
  %1184 = vmatpush1.msra.mxu0 0.0
  %1185 = vmatprep.subr.mxu0 0.0
  %1186 = vmatpush1.msra.mxu0 0.0
  %1187 = vmatprep.subr.mxu0 0.0
  %1188 = vmatpush1.msra.mxu0 0.0
  %1189 = vmatprep.subr.mxu0 0.0
  %1190 = vmatpush1.msra.mxu0 0.0
  %1191 = vmatprep.subr.mxu0 0.0
  %1192 = vmatpush1.msra.mxu0 0.0
  %1193 = vmatprep.subr.mxu0 0.0
  %1194 = vmatpush1.msra.mxu0 %v1088
  %1195 = vmatprep.subr.mxu0 0.0
  %1196 = vmatpush1.msra.mxu0 %v1087
  %1197 = vmatprep.subr.mxu0 0.0
  %1198 = vmatpush1.msra.mxu0 %v1086
  %1199 = vmatprep.subr.mxu0 0.0
  %1200 = vmatpush1.msra.mxu0 %v1085
  %1201 = vmatprep.subr.mxu0 0.0
  %1202 = vmatpush1.msra.mxu0 %v1084
  %1203 = vmatprep.subr.mxu0 0.0
  %1204 = vmatpush1.msra.mxu0 %v1083
  %1205 = vmatprep.subr.mxu0 0.0
  %1206 = vmatpush1.msra.mxu0 %v1082
  %1207 = vmatprep.subr.mxu0 0.0
  %1208 = vmatpush1.msra.mxu0 %v1081
  %1209 = vmatprep.subr.mxu0 0.0
  %1210 = vmatpush2.msra.mxu0 0.0
  %1211 = vmatprep.subr.mxu0 0.0
  %1212 = vmatpush2.msra.mxu0 0.0
  %1213 = vmatprep.subr.mxu0 0.0
  %1214 = vmatpush2.msra.mxu0 0.0
  %1215 = vmatprep.subr.mxu0 0.0
  %1216 = vmatpush2.msra.mxu0 0.0
  %1217 = vmatprep.subr.mxu0 0.0
  %1218 = vmatpush2.msra.mxu0 0.0
  %1219 = vmatprep.subr.mxu0 0.0
  %1220 = vmatpush2.msra.mxu0 0.0
  %1221 = vmatprep.subr.mxu0 0.0
  %1222 = vmatpush2.msra.mxu0 0.0
  %1223 = vmatprep.subr.mxu0 0.0
  %1224 = vmatpush2.msra.mxu0 0.0
  %1225 = vmatprep.subr.mxu0 0.0
  %1226 = vmatpush2.msra.mxu0 0.0
  %1227 = vmatprep.subr.mxu0 0.0
  %1228 = vmatpush2.msra.mxu0 0.0
  %1229 = vmatprep.subr.mxu0 0.0
  %1230 = vmatpush2.msra.mxu0 0.0
  %1231 = vmatprep.subr.mxu0 0.0
  %1232 = vmatpush2.msra.mxu0 0.0
  %1233 = vmatprep.subr.mxu0 0.0
  %1234 = vmatpush2.msra.mxu0 0.0
  %1235 = vmatprep.subr.mxu0 0.0
  %1236 = vmatpush2.msra.mxu0 0.0
  %1237 = vmatprep.subr.mxu0 0.0
  %1238 = vmatpush2.msra.mxu0 0.0
  %1239 = vmatprep.subr.mxu0 0.0
  %1240 = vmatpush2.msra.mxu0 0.0
  %1241 = vmatprep.mubr.f32.mxu0 0.0
  %1242 = vmatmul.mubr.f32.gmra.mxu0 %v1169
  %v1243 = vpop.f32.mrf.mxu0
  %v1244 = vadd.f32 0.0, %v1243
  %v1245 = vpop.f32.mrf.mxu0
  %1246 = vmatprep.mubr.f32.mxu0 0.0
  %1247 = vmatmul.mubr.f32.gmra.mxu0 %v1171
  %v1248 = vpop.f32.mrf.mxu0
  %v1249 = vadd.f32 0.0, %v1248
  %v1250 = vpop.f32.mrf.mxu0
  %1251 = vmatprep.mubr.f32.mxu0 0.0
  %1252 = vmatmul.mubr.f32.gmra.mxu0 %v1173
  %v1253 = vpop.f32.mrf.mxu0
  %v1254 = vadd.f32 0.0, %v1253
  %v1255 = vpop.f32.mrf.mxu0
  %1256 = vmatprep.mubr.f32.mxu0 0.0
  %1257 = vmatmul.mubr.f32.gmra.mxu0 %v1175
  %v1258 = vpop.f32.mrf.mxu0
  %v1259 = vadd.f32 0.0, %v1258
  %v1260 = vpop.f32.mrf.mxu0
  %1261 = vdwg.mxu0
  %v1262 = vsel %vm292, %v874, 0
  %v1264 = vsel %vm292, %v876, 0
  %v1266 = vsel %vm292, %v878, 0
  %v1268 = vsel %vm292, %v880, 0
  %v1271 = vsel %vm292, %v1161, 0
  %v1274 = vsel %vm292, %v1162, 0
  %v1277 = vsel %vm292, %v1163, 0
  %v1280 = vsel %vm292, %v1164, 0
  %v1283 = vsel %vm292, %v1165, 0
  %v1286 = vsel %vm292, %v1166, 0
  %v1289 = vsel %vm292, %v1167, 0
  %v1292 = vsel %vm292, %v1168, 0
  %1294 = vmatprep.subr.mxu0 0.0
  %1295 = vmatpush1.xpose.msra.mxu0 0.0
  %1296 = vmatprep.subr.mxu0 0.0
  %1297 = vmatpush1.xpose.msra.mxu0 0.0
  %1298 = vmatprep.subr.mxu0 0.0
  %1299 = vmatpush1.xpose.msra.mxu0 0.0
  %1300 = vmatprep.subr.mxu0 0.0
  %1301 = vmatpush1.xpose.msra.mxu0 0.0
  %1302 = vmatprep.subr.mxu0 0.0
  %1303 = vmatpush1.xpose.msra.mxu0 0.0
  %1304 = vmatprep.subr.mxu0 0.0
  %1305 = vmatpush1.xpose.msra.mxu0 0.0
  %1306 = vmatprep.subr.mxu0 0.0
  %1307 = vmatpush1.xpose.msra.mxu0 0.0
  %1308 = vmatprep.subr.mxu0 0.0
  %1309 = vmatpush1.xpose.msra.mxu0 0.0
  %1310 = vmatprep.subr.mxu0 0.0
  %1311 = vmatpush1.xpose.msra.mxu0 %v1292
  %1312 = vmatprep.subr.mxu0 0.0
  %1313 = vmatpush1.xpose.msra.mxu0 %v1289
  %1314 = vmatprep.subr.mxu0 0.0
  %1315 = vmatpush1.xpose.msra.mxu0 %v1286
  %1316 = vmatprep.subr.mxu0 0.0
  %1317 = vmatpush1.xpose.msra.mxu0 %v1283
  %1318 = vmatprep.subr.mxu0 0.0
  %1319 = vmatpush1.xpose.msra.mxu0 %v1280
  %1320 = vmatprep.subr.mxu0 0.0
  %1321 = vmatpush1.xpose.msra.mxu0 %v1277
  %1322 = vmatprep.subr.mxu0 0.0
  %1323 = vmatpush1.xpose.msra.mxu0 %v1274
  %1324 = vmatprep.subr.mxu0 0.0
  %1325 = vmatpush1.xpose.msra.mxu0 %v1271
  %1326 = vmatprep.subr.mxu0 0.0
  %1327 = vmatpush2.xpose.msra.mxu0 0.0
  %1328 = vmatprep.subr.mxu0 0.0
  %1329 = vmatpush2.xpose.msra.mxu0 0.0
  %1330 = vmatprep.subr.mxu0 0.0
  %1331 = vmatpush2.xpose.msra.mxu0 0.0
  %1332 = vmatprep.subr.mxu0 0.0
  %1333 = vmatpush2.xpose.msra.mxu0 0.0
  %1334 = vmatprep.subr.mxu0 0.0
  %1335 = vmatpush2.xpose.msra.mxu0 0.0
  %1336 = vmatprep.subr.mxu0 0.0
  %1337 = vmatpush2.xpose.msra.mxu0 0.0
  %1338 = vmatprep.subr.mxu0 0.0
  %1339 = vmatpush2.xpose.msra.mxu0 0.0
  %1340 = vmatprep.subr.mxu0 0.0
  %1341 = vmatpush2.xpose.msra.mxu0 0.0
  %1342 = vmatprep.subr.mxu0 0.0
  %1343 = vmatpush2.xpose.msra.mxu0 0.0
  %1344 = vmatprep.subr.mxu0 0.0
  %1345 = vmatpush2.xpose.msra.mxu0 0.0
  %1346 = vmatprep.subr.mxu0 0.0
  %1347 = vmatpush2.xpose.msra.mxu0 0.0
  %1348 = vmatprep.subr.mxu0 0.0
  %1349 = vmatpush2.xpose.msra.mxu0 0.0
  %1350 = vmatprep.subr.mxu0 0.0
  %1351 = vmatpush2.xpose.msra.mxu0 0.0
  %1352 = vmatprep.subr.mxu0 0.0
  %1353 = vmatpush2.xpose.msra.mxu0 0.0
  %1354 = vmatprep.subr.mxu0 0.0
  %1355 = vmatpush2.xpose.msra.mxu0 0.0
  %1356 = vmatprep.subr.mxu0 0.0
  %1357 = vmatpush2.xpose.msra.mxu0 0.0
  %1358 = vmatprep.mubr.f32.mxu0 0.0
  %1359 = vmatmul.mubr.f32.gmra.mxu0 %v1262
  %v1360 = vpop.f32.mrf.mxu0
  %v1361 = vadd.f32 0.0, %v1360
  %v1362 = vpop.f32.mrf.mxu0
  %1363 = vmatprep.mubr.f32.mxu0 0.0
  %1364 = vmatmul.mubr.f32.gmra.mxu0 %v1264
  %v1365 = vpop.f32.mrf.mxu0
  %v1366 = vadd.f32 0.0, %v1365
  %v1367 = vpop.f32.mrf.mxu0
  %1368 = vmatprep.mubr.f32.mxu0 0.0
  %1369 = vmatmul.mubr.f32.gmra.mxu0 %v1266
  %v1370 = vpop.f32.mrf.mxu0
  %v1371 = vadd.f32 0.0, %v1370
  %v1372 = vpop.f32.mrf.mxu0
  %1373 = vmatprep.mubr.f32.mxu0 0.0
  %1374 = vmatmul.mubr.f32.gmra.mxu0 %v1268
  %v1375 = vpop.f32.mrf.mxu0
  %v1376 = vadd.f32 0.0, %v1375
  %v1377 = vpop.f32.mrf.mxu0
  %1378 = vdwg.mxu0
  %v1379 = vmul.f32 %v669, %v1361
  %v1380 = vmul.f32 %v674, %v1366
  %v1381 = vmul.f32 %v679, %v1371
  %v1382 = vmul.f32 %v684, %v1376
  %v1383 = vsel %vm292, %v1379, 0.0
  %v1384 = vsel %vm292, %v1380, 0.0
  %v1385 = vadd.f32 %v1383, %v1384
  %v1386 = vsel %vm292, %v1381, 0.0
  %v1387 = vadd.f32 %v1385, %v1386
  %v1388 = vsel %vm292, %v1382, 0.0
  %v1389 = vadd.f32 %v1387, %v1388
  %v1390 = vrot.slane %v1389, 4
  %v1391 = vadd.f32 %v1389, %v1390
  %v1392 = vrot.slane %v1391, 2
  %v1393 = vadd.f32 %v1391, %v1392
  %v1394 = vrot.slane %v1393, 1
  %v1395 = vadd.f32 %v1393, %v1394
  %v1396 = vxor.u32 %v1395, 2147483648
  %v1397 = vmul.f32 %v1396, 1.442695
  %v1398 = vpow.pop %v1397
  %v1399 = vadd.f32 %v1398, 1.0
  %v1400 = vrcp.pop %v1399
  %v1401 = vmul.f32 1.0, %v1400
  %v1402 = vmul.f32 %v669, %v1244
  %v1403 = vmul.f32 %v674, %v1249
  %v1404 = vmul.f32 %v679, %v1254
  %v1405 = vmul.f32 %v684, %v1259
  %v1406 = vsel %vm292, %v1402, 0.0
  %v1407 = vsel %vm292, %v1403, 0.0
  %v1408 = vadd.f32 %v1406, %v1407
  %v1409 = vsel %vm292, %v1404, 0.0
  %v1410 = vadd.f32 %v1408, %v1409
  %v1411 = vsel %vm292, %v1405, 0.0
  %v1412 = vadd.f32 %v1410, %v1411
  %v1413 = vrot.slane %v1412, 4
  %v1414 = vadd.f32 %v1412, %v1413
  %v1415 = vrot.slane %v1414, 2
  %v1416 = vadd.f32 %v1414, %v1415
  %v1417 = vrot.slane %v1416, 1
  %v1418 = vadd.f32 %v1416, %v1417
  %v1419 = vxor.u32 %v1418, 2147483648
  %v1420 = vmul.f32 %v1419, 1.442695
  %v1421 = vpow.pop %v1420
  %v1422 = vadd.f32 %v1421, 1.0
  %v1423 = vrcp.pop %v1422
  %v1424 = vmul.f32 1.0, %v1423
  %v1425 = vmul.f32 %v1361, %v1401
  %v1426 = vmul.f32 %v1366, %v1401
  %v1427 = vmul.f32 %v1371, %v1401
  %v1428 = vmul.f32 %v1376, %v1401
  %v1429 = vpack.c.bf16 %v1426, %v1425
  %v1430 = vpack.c.bf16 %v1428, %v1427
  %v1431 = vmul.f32 %v1244, %v1424
  %v1432 = vmul.f32 %v1249, %v1424
  %v1433 = vmul.f32 %v1254, %v1424
  %v1434 = vmul.f32 %v1259, %v1424
  %v1435 = vpack.c.bf16 %v1432, %v1431
  %v1436 = vpack.c.bf16 %v1434, %v1433
  %1439 = vrot.lane.b32.xlu0 %v1429, 64
  %v1440 = vpop.permute.xlu0 %1439
  %1441 = vrot.lane.b32.xlu0 %v1430, 64
  %v1442 = vpop.permute.xlu0 %1441
  %v1445 = vsel %vm292, %v736, %v1440
  %v1448 = vsel %vm292, %v737, %v1442
  %1451 = vrot.lane.b32.xlu0 %v1435, 64
  %v1452 = vpop.permute.xlu0 %1451
  %1453 = vrot.lane.b32.xlu0 %v1436, 64
  %v1454 = vpop.permute.xlu0 %1453
  %v1457 = vsel %vm292, %v742, %v1452
  %v1460 = vsel %vm292, %v743, %v1454
  %v1463 = vunpack.c.l.b16 %v1445
  %v1464 = vunpack.c.h.b16 %v1445
  %v1465 = vunpack.c.l.b16 %v1448
  %v1466 = vunpack.c.h.b16 %v1448
  %v1467 = vpack.c.b16 %v1463, %v1463
  %v1468 = vpack.c.b16 %v1464, %v1464
  %v1469 = vpack.c.b16 %v1465, %v1465
  %v1470 = vpack.c.b16 %v1466, %v1466
  %1475 = vst [vmem:[%s4] sm:$0xf] %v1467
  %1476 = vst [vmem:[%s4 + $0x4] sm:$0xf] %v1468
  %1477 = vst [vmem:[%s4 + $0x8] sm:$0xf] %v1469
  %1478 = vst [vmem:[%s4 + $0xc] sm:$0xf] %v1470
  %v1479 = vpack.c.bf16 %v18, %v17
  %v1480 = vpack.c.bf16 %v20, %v19
  %v1483 = vunpack.c.l.b16 %v1479
  %v1484 = vunpack.c.h.b16 %v1479
  %v1485 = vunpack.c.l.b16 %v1480
  %v1486 = vunpack.c.h.b16 %v1480
  %v1487 = vpack.c.b16 %v1483, %v1483
  %v1488 = vpack.c.b16 %v1484, %v1484
  %v1489 = vpack.c.b16 %v1485, %v1485
  %v1490 = vpack.c.b16 %v1486, %v1486
  %1495 = vst [vmem:[%s4 + $0x10] sm:$0xf] %v1487
  %1496 = vst [vmem:[%s4 + $0x14] sm:$0xf] %v1488
  %1497 = vst [vmem:[%s4 + $0x18] sm:$0xf] %v1489
  %1498 = vst [vmem:[%s4 + $0x1c] sm:$0xf] %v1490
  %v1501 = vunpack.c.l.b16 %v1457
  %v1502 = vunpack.c.h.b16 %v1457
  %v1503 = vunpack.c.l.b16 %v1460
  %v1504 = vunpack.c.h.b16 %v1460
  %v1505 = vpack.c.b16 %v1501, %v1501
  %v1506 = vpack.c.b16 %v1502, %v1502
  %v1507 = vpack.c.b16 %v1503, %v1503
  %v1508 = vpack.c.b16 %v1504, %v1504
  %s1513 = scalar_lea.vmem %s4, 32
  %1514 = vst [vmem:[%s1513] sm:$0xf] %v1505
  %1515 = vst [vmem:[%s1513 + $0x4] sm:$0xf] %v1506
  %1516 = vst [vmem:[%s1513 + $0x8] sm:$0xf] %v1507
  %1517 = vst [vmem:[%s1513 + $0xc] sm:$0xf] %v1508
  %v1518 = vpack.c.bf16 %v22, %v21
  %v1519 = vpack.c.bf16 %v24, %v23
  %v1522 = vunpack.c.l.b16 %v1518
  %v1523 = vunpack.c.h.b16 %v1518
  %v1524 = vunpack.c.l.b16 %v1519
  %v1525 = vunpack.c.h.b16 %v1519
  %v1526 = vpack.c.b16 %v1522, %v1522
  %v1527 = vpack.c.b16 %v1523, %v1523
  %v1528 = vpack.c.b16 %v1524, %v1524
  %v1529 = vpack.c.b16 %v1525, %v1525
  %1534 = vst [vmem:[%s1513 + $0x10] sm:$0xf] %v1526
  %1535 = vst [vmem:[%s1513 + $0x14] sm:$0xf] %v1527
  %1536 = vst [vmem:[%s1513 + $0x18] sm:$0xf] %v1528
  %1537 = vst [vmem:[%s1513 + $0x1c] sm:$0xf] %v1529
  // Predicated region
  $region18: #{coattention_forward.2} parent=0 // pred_check
    _
  $region19: #{coattention_forward.2} parent=0 // pred_check_branch
    %1539 = sbr.rel (0) target = $region21
  $region20: #{coattention_forward.2} parent=0 // pred_region
    _
  $region21: #{coattention_forward.2} parent=0 // pred_fallthru
    _
  // Predicated region
  $region22: #{coattention_forward.2} parent=0 // pred_check
    _
  $region23: #{coattention_forward.2} parent=0 // pred_check_branch
    %1541 = sbr.rel (0) target = $region25
  $region24: #{coattention_forward.2} parent=0 // pred_region
    _
  $region25: #{coattention_forward.2} parent=0 // pred_fallthru
    _

</llo_original>
